<compile_context>
chip_gen: v6e
topology: v6e:2x2x1
jax: 0.10.0
libtpu: 0.0.40
codegen_flags: <defaults>
</compile_context>

<pallas_src>
import functools

import numpy as np
import jax
import jax.numpy as jnp
from jax.experimental import pallas as pl
from jax.experimental.pallas import tpu as pltpu

LEAKY_SLOPE = 0.2
BN_EPS = 1e-5


def _leaky_relu(y):
    return jnp.where(y > 0, y, LEAKY_SLOPE * y)


# ---------------------------------------------------------------------------
# Fused Pallas kernel: the whole Discriminator forward in one call.
# ---------------------------------------------------------------------------
def _disc_kernel(x_ref, *refs, meta, batch, nz):
    """Entire Discriminator forward, VMEM/vreg-resident.

    Activation layout: 2-D (rows = spatial positions h*w, cols = batch*channels
    with lane index n*C + c), carried across layers with no HBM round trips.

    Each bias-free Conv2d is evaluated as
        XW = X @ W_pack          (one lane-dense matmul; W_pack is the
                                  block-diagonal per-sample replication of the
                                  per-tap weight matrices, columns ordered
                                  (tap, sample, cout))
        Y  = sum_t S_t @ XW[:, tap-t lanes]
    where S_t is the PER-SAMPLE 0/1 im2col row gather (shared by every sample
    because the batch lives in lanes), so the patch shuffles run on the MXU and
    the gather constants are O(1) in batch.
    """
    o_ref = refs[-1]                       # (8, 128) packed output
    wcls_ref = refs[-2]                    # (1, batch*nz) f32 centre-tap, per-sample tiled
    layer_refs = refs[:-2]                 # (S_0, Wpack_0, S_1, Wpack_1, ...)

    act = x_ref[...]                       # (H*W, batch*nc) f32
    for li, (taps, hw_out, cout, mode) in enumerate(meta):
        s_ref = layer_refs[2 * li]         # (taps, hw_out, hw_in) bf16 0/1
        w_ref = layer_refs[2 * li + 1]     # (batch*cin, taps*batch*cout) bf16
        nlanes = batch * cout

        # One lane-dense matmul covering every tap and every sample.
        xw = jnp.dot(act.astype(jnp.bfloat16), w_ref[...],
                     preferred_element_type=jnp.float32)
        # NOTE: per-tap partials rounded to bf16 here (MXU input) -> ~bf16 conv
        # precision; checked against an f32 reference with 5e-2 tolerance.
        xwb = xw.astype(jnp.bfloat16)

        y = jnp.zeros((hw_out, nlanes), jnp.float32)
        for t in range(taps):              # static unroll, <= 16 taps
            y = y + jnp.dot(s_ref[t], xwb[:, t * nlanes:(t + 1) * nlanes],
                            preferred_element_type=jnp.float32)

        if mode == "bn_lrelu":
            # BatchNorm2d training-mode batch stats (gamma=1, beta=0): per
            # channel over all rows (spatial) and all batch lane-groups.
            # Valid because the whole activation is resident in this single
            # grid step (any M/batch tiling would need a two-pass reduction).
            inv_cnt = 1.0 / float(batch * hw_out)
            s1 = jnp.sum(y, axis=0, keepdims=True)        # (1, batch*cout)
            s2 = jnp.sum(y * y, axis=0, keepdims=True)
            s1c = jnp.zeros((1, cout), jnp.float32)
            s2c = jnp.zeros((1, cout), jnp.float32)
            for n in range(batch):                        # combine lane-groups
                s1c = s1c + s1[:, n * cout:(n + 1) * cout]
                s2c = s2c + s2[:, n * cout:(n + 1) * cout]
            mu = s1c * inv_cnt
            var = s2c * inv_cnt - mu * mu
            inv_std = jax.lax.rsqrt(var + BN_EPS)
            mu_b = jnp.concatenate([mu] * batch, axis=1)        # (1, batch*cout)
            is_b = jnp.concatenate([inv_std] * batch, axis=1)
            y = (y - mu_b) * is_b
            y = _leaky_relu(y)
        elif mode == "lrelu":
            y = _leaky_relu(y)
        # mode == "none": final encoder conv, no activation.
        act = y

    feat = act                             # (1, batch*nz), lane n*nz + c

    # Classifier: Conv(nz->1,3,1,1) on a 1x1 input -> centre-tap dot, done as a
    # VPU multiply + cross-lane reduce.  Sigmoid via exp + approx reciprocal
    # (both on the EUP slot), clipped to [0, 1].
    prod = feat * wcls_ref[...]
    out_rows, out_cols = o_ref.shape
    lane = jax.lax.broadcasted_iota(jnp.int32, (1, out_cols), 1)
    prob_row = jnp.zeros((1, out_cols), jnp.float32)
    for n in range(batch):
        logit = jnp.sum(prod[:, n * nz:(n + 1) * nz], axis=1, keepdims=True)
        p = pl.reciprocal(1.0 + jnp.exp(-logit), approx=True)
        p = jnp.clip(p, 0.0, 1.0)
        prob_row = jnp.where(lane == n, p, prob_row)

    # Assemble the packed result in registers; ONE full lane-dense store.
    #   row 0, lanes [0, batch*nz)  : features (sample-major)
    #   row 1, lanes [0, batch)     : sigmoid(classifier)
    feat_row = jnp.concatenate(
        [feat, jnp.zeros((1, out_cols - batch * nz), jnp.float32)], axis=1)
    tail = jnp.zeros((out_rows - 2, out_cols), jnp.float32)
    o_ref[...] = jnp.concatenate([feat_row, prob_row, tail], axis=0)


# ---------------------------------------------------------------------------
# Host-side (one-time) constant construction.
# ---------------------------------------------------------------------------
def _im2col_gather_single(h, w, k, stride, pad):
    """Per-sample 0/1 selection tensor: S[t, m, r] = 1 iff output position
    m = (oh, ow) reads input position r = (ih, iw) at kernel tap t = (ki, kj);
    out-of-bounds (zero-padding) taps leave the row all-zero."""
    ho = (h + 2 * pad - k) // stride + 1
    wo = (w + 2 * pad - k) // stride + 1
    s = np.zeros((k * k, ho * wo, h * w), np.float32)
    for ki in range(k):
        for kj in range(k):
            t = ki * k + kj
            for oh in range(ho):
                ih = stride * oh + ki - pad
                if not 0 <= ih < h:
                    continue
                for ow in range(wo):
                    iw = stride * ow + kj - pad
                    if 0 <= iw < w:
                        s[t, oh * wo + ow, ih * w + iw] = 1.0
    return s, ho, wo


def _pack_weight_blockdiag(w, batch):
    """(Cout, Cin, kh, kw) -> block-diagonal (batch*Cin, taps*batch*Cout)
    matrix so that  X(hw, batch*Cin) @ W_pack  yields lanes ordered
    (tap, sample, cout), matching the per-tap S-stage slices."""
    w = np.asarray(w, np.float32)
    cout, cin, kh, kw = w.shape
    taps = kh * kw
    wt = w.transpose(2, 3, 1, 0).reshape(taps, cin, cout)   # (taps, cin, cout)
    packed = np.zeros((batch * cin, taps * batch * cout), np.float32)
    for t in range(taps):
        for n in range(batch):
            packed[n * cin:(n + 1) * cin,
                   (t * batch + n) * cout:(t * batch + n + 1) * cout] = wt[t]
    return packed


# ---------------------------------------------------------------------------
# Deterministic parameter construction (mirrors Encoder/Discriminator __init__)
# ---------------------------------------------------------------------------
def init_discriminator_params(key, isize, nz, nc, ndf, n_extra_layers=0):
    assert isize % 16 == 0
    keys = iter(jax.random.split(key, 64))

    def nrm(shape):
        return 0.02 * jax.random.normal(next(keys), shape, jnp.float32)

    params = {"w_init": nrm((ndf, nc, 4, 4))}                 # Conv(nc->ndf, 4,2,1)
    csize, cndf = isize // 2, ndf
    params["w_extra"] = [nrm((cndf, cndf, 3, 3)) for _ in range(n_extra_layers)]
    params["w_pyr"] = []
    while csize > 4:
        params["w_pyr"].append(nrm((cndf * 2, cndf, 4, 4)))   # Conv(cndf->2cndf, 4,2,1)
        cndf *= 2
        csize //= 2
    params["w_final"] = nrm((nz, cndf, 4, 4))                 # Conv(cndf->nz, 4,1,0)
    params["w_cls"] = nrm((1, nz, 3, 3))                      # classifier Conv(nz->1,3,1,1)
    return params


# ---------------------------------------------------------------------------
# Forward builder: packs constants once, returns a jit-able forward(x, consts)
# ---------------------------------------------------------------------------
def build_discriminator_forward(params, isize, nz, nc, ndf, n_extra_layers, batch):
    del ndf, n_extra_layers  # architecture fully determined by weight shapes
    meta = []
    consts = []
    h = w = isize

    def add_conv(weight, k, stride, pad, mode):
        nonlocal h, w
        s, ho, wo = _im2col_gather_single(h, w, k, stride, pad)
        consts.append(jnp.asarray(s, jnp.bfloat16))
        consts.append(jnp.asarray(_pack_weight_blockdiag(weight, batch),
                                  jnp.bfloat16))
        meta.append((k * k, ho * wo, int(weight.shape[0]), mode))
        h, w = ho, wo

    add_conv(params["w_init"], 4, 2, 1, "lrelu")
    for wt in params["w_extra"]:
        add_conv(wt, 3, 1, 1, "bn_lrelu")
    for wt in params["w_pyr"]:
        add_conv(wt, 4, 2, 1, "bn_lrelu")
    add_conv(params["w_final"], 4, 1, 0, "none")
    assert h == 1 and w == 1

    # Classifier centre tap, tiled per sample to lane layout n*nz + c (f32: the
    # classifier runs on the VPU, not the MXU).
    wcc = np.asarray(params["w_cls"], np.float32)[0, :, 1, 1]   # (nz,)
    consts.append(jnp.asarray(np.tile(wcc[None, :], (1, batch)), jnp.float32))

    meta = tuple(meta)
    consts = tuple(consts)
    out_rows, out_cols = 8, 128
    assert batch * nz <= out_cols and batch <= out_cols
    kernel = functools.partial(_disc_kernel, meta=meta, batch=batch, nz=nz)

    def forward(x, consts):
        n, c, hh, ww = x.shape
        assert (n, c, hh, ww) == (batch, nc, isize, isize)
        # Single layout conversion at the model boundary:
        # NCHW -> (H*W, N*C)  (rows = spatial, lanes = (sample, channel)).
        x_mat = jnp.transpose(x, (2, 3, 0, 1)).reshape(hh * ww, n * c)

        def full_spec(arr):
            nd = arr.ndim
            return pl.BlockSpec(arr.shape, lambda i, _nd=nd: (0,) * _nd)

        out = pl.pallas_call(
            kernel,
            out_shape=jax.ShapeDtypeStruct((out_rows, out_cols), jnp.float32),
            grid=(1,),
            in_specs=[full_spec(x_mat)] + [full_spec(a) for a in consts],
            out_specs=pl.BlockSpec((out_rows, out_cols), lambda i: (0, 0)),
            compiler_params=pltpu.CompilerParams(
                dimension_semantics=("arbitrary",)),
        )(x_mat, *consts)

        features = out[0, :n * nz].reshape(n, nz, 1, 1)
        classifier = out[1, :n]
        return classifier, features

    return forward, consts


# ---------------------------------------------------------------------------
# Pure-JAX reference (f32, lax.conv) for a tolerance check.
# ---------------------------------------------------------------------------
def reference_forward(params, x):
    def conv(z, w, stride, pad):
        return jax.lax.conv_general_dilated(
            z, w, window_strides=(stride, stride),
            padding=[(pad, pad), (pad, pad)],
            dimension_numbers=("NCHW", "OIHW", "NCHW"))

    def bn(z):
        mu = jnp.mean(z, axis=(0, 2, 3), keepdims=True)
        var = jnp.mean((z - mu) ** 2, axis=(0, 2, 3), keepdims=True)
        return (z - mu) * jax.lax.rsqrt(var + BN_EPS)

    y = _leaky_relu(conv(x, params["w_init"], 2, 1))
    for wt in params["w_extra"]:
        y = _leaky_relu(bn(conv(y, wt, 1, 1)))
    for wt in params["w_pyr"]:
        y = _leaky_relu(bn(conv(y, wt, 2, 1)))
    feat = conv(y, params["w_final"], 1, 0)                 # (N, nz, 1, 1)
    logit = conv(feat, params["w_cls"], 1, 1)               # (N, 1, 1, 1)
    cls = jax.nn.sigmoid(logit).reshape(-1)
    return cls, feat


if __name__ == "__main__":
    # opt: isize=16, nz=16, nc=3, ngf=8, ngpu=1, extralayers=0
    ISIZE, NZ, NC, NDF, N_EXTRA = 16, 16, 3, 8, 0
    BATCH = 2

    root = jax.random.PRNGKey(0)
    k_x, k_p = jax.random.split(root)
    x = jax.random.normal(k_x, (BATCH, NC, ISIZE, ISIZE), jnp.float32)
    params = init_discriminator_params(k_p, ISIZE, NZ, NC, NDF, N_EXTRA)

    forward, consts = build_discriminator_forward(
        params, ISIZE, NZ, NC, NDF, N_EXTRA, BATCH)
    classifier, features = jax.jit(forward)(x, consts)
    jax.block_until_ready((classifier, features))

    assert classifier.shape == (BATCH,)
    assert features.shape == (BATCH, NZ, 1, 1)
    assert bool(jnp.all((classifier >= 0.0) & (classifier <= 1.0)))
    assert bool(jnp.all(jnp.isfinite(features)))

    # Tolerance check vs f32 reference (bf16 conv intermediates + approx
    # sigmoid => loose tolerances; documented in the header).
    ref_cls, ref_feat = jax.jit(functools.partial(reference_forward, params))(x)
    np.testing.assert_allclose(np.asarray(features), np.asarray(ref_feat),
                               atol=5e-2, rtol=5e-2)
    np.testing.assert_allclose(np.asarray(classifier), np.asarray(ref_cls),
                               atol=2e-2, rtol=2e-2)

    # TODO(synk): ngpu>1 nn.parallel.data_parallel branch in the PyTorch
    # forward is a device-placement detail with no kernel-level equivalent;
    # semantics are identical to the single-device path implemented here.
    print("KERNEL_OK")
</pallas_src>

<mosaic_0001>
module attributes {stable_mosaic.version = 11 : i64} {
  func.func @_disc_kernel(%arg0: i32, %arg1: memref<256x6xf32, #tpu.memory_space<vmem>>, %arg2: memref<16x64x256xbf16, #tpu.memory_space<vmem>>, %arg3: memref<6x256xbf16, #tpu.memory_space<vmem>>, %arg4: memref<16x16x64xbf16, #tpu.memory_space<vmem>>, %arg5: memref<16x512xbf16, #tpu.memory_space<vmem>>, %arg6: memref<16x1x16xbf16, #tpu.memory_space<vmem>>, %arg7: memref<32x512xbf16, #tpu.memory_space<vmem>>, %arg8: memref<1x32xf32, #tpu.memory_space<vmem>>, %arg9: memref<8x128xf32, #tpu.memory_space<vmem>>) attributes {dimension_semantics = [#tpu.dimension_semantics<arbitrary>], iteration_bounds = array<i64: 1>, scalar_prefetch = 0 : i64, scratch_operands = 0 : i64, tpu.core_type = #tpu.core_type<tc>, window_params = [{pipeline_mode = #tpu.pipeline_mode<synchronous>, transform_indices = @transform_0, window_bounds = array<i64: 256, 6>}, {pipeline_mode = #tpu.pipeline_mode<synchronous>, transform_indices = @transform_1, window_bounds = array<i64: 16, 64, 256>}, {pipeline_mode = #tpu.pipeline_mode<synchronous>, transform_indices = @transform_2, window_bounds = array<i64: 6, 256>}, {pipeline_mode = #tpu.pipeline_mode<synchronous>, transform_indices = @transform_3, window_bounds = array<i64: 16, 16, 64>}, {pipeline_mode = #tpu.pipeline_mode<synchronous>, transform_indices = @transform_4, window_bounds = array<i64: 16, 512>}, {pipeline_mode = #tpu.pipeline_mode<synchronous>, transform_indices = @transform_5, window_bounds = array<i64: 16, 1, 16>}, {pipeline_mode = #tpu.pipeline_mode<synchronous>, transform_indices = @transform_6, window_bounds = array<i64: 32, 512>}, {pipeline_mode = #tpu.pipeline_mode<synchronous>, transform_indices = @transform_7, window_bounds = array<i64: 1, 32>}, {pipeline_mode = #tpu.pipeline_mode<synchronous>, transform_indices = @transform_8, window_bounds = array<i64: 8, 128>}]} {
    %c0 = arith.constant 0 : index
    %c0_0 = arith.constant 0 : index
    %0 = vector.load %arg1[%c0, %c0_0] : memref<256x6xf32, #tpu.memory_space<vmem>>, vector<256x6xf32>
    %1 = arith.truncf %0 : vector<256x6xf32> to vector<256x6xbf16>
    %c0_1 = arith.constant 0 : index
    %c0_2 = arith.constant 0 : index
    %2 = vector.load %arg3[%c0_1, %c0_2] : memref<6x256xbf16, #tpu.memory_space<vmem>>, vector<6x256xbf16>
    %cst = arith.constant dense<0.000000e+00> : vector<256x256xf32>
    %3 = tpu.matmul %1, %2, %cst {dimension_numbers = #tpu.dot_dimension_numbers<[1], [0], [0], [1], [0, 0, 1, 1], [], []>} : vector<256x6xbf16>, vector<6x256xbf16>, vector<256x256xf32> -> vector<256x256xf32>
    %4 = arith.truncf %3 : vector<256x256xf32> to vector<256x256xbf16>
    %cst_3 = arith.constant 0.000000e+00 : f32
    %5 = vector.broadcast %cst_3 : f32 to vector<64x16xf32>
    %c0_4 = arith.constant 0 : index
    %c0_5 = arith.constant 0 : index
    %c0_6 = arith.constant 0 : index
    %6 = vector.load %arg2[%c0_4, %c0_5, %c0_6] : memref<16x64x256xbf16, #tpu.memory_space<vmem>>, vector<1x64x256xbf16>
    %7 = vector.shape_cast %6 : vector<1x64x256xbf16> to vector<64x256xbf16>
    %8 = vector.extract_strided_slice %4 {offsets = [0, 0], sizes = [256, 16], strides = [1, 1]} : vector<256x256xbf16> to vector<256x16xbf16>
    %cst_7 = arith.constant dense<0.000000e+00> : vector<64x16xf32>
    %9 = tpu.matmul %7, %8, %cst_7 {dimension_numbers = #tpu.dot_dimension_numbers<[1], [0], [0], [1], [0, 0, 1, 1], [], []>} : vector<64x256xbf16>, vector<256x16xbf16>, vector<64x16xf32> -> vector<64x16xf32>
    %10 = arith.addf %5, %9 : vector<64x16xf32>
    %c1 = arith.constant 1 : index
    %c0_8 = arith.constant 0 : index
    %c0_9 = arith.constant 0 : index
    %11 = vector.load %arg2[%c1, %c0_8, %c0_9] : memref<16x64x256xbf16, #tpu.memory_space<vmem>>, vector<1x64x256xbf16>
    %12 = vector.shape_cast %11 : vector<1x64x256xbf16> to vector<64x256xbf16>
    %13 = vector.extract_strided_slice %4 {offsets = [0, 16], sizes = [256, 16], strides = [1, 1]} : vector<256x256xbf16> to vector<256x16xbf16>
    %cst_10 = arith.constant dense<0.000000e+00> : vector<64x16xf32>
    %14 = tpu.matmul %12, %13, %cst_10 {dimension_numbers = #tpu.dot_dimension_numbers<[1], [0], [0], [1], [0, 0, 1, 1], [], []>} : vector<64x256xbf16>, vector<256x16xbf16>, vector<64x16xf32> -> vector<64x16xf32>
    %15 = arith.addf %10, %14 : vector<64x16xf32>
    %c2 = arith.constant 2 : index
    %c0_11 = arith.constant 0 : index
    %c0_12 = arith.constant 0 : index
    %16 = vector.load %arg2[%c2, %c0_11, %c0_12] : memref<16x64x256xbf16, #tpu.memory_space<vmem>>, vector<1x64x256xbf16>
    %17 = vector.shape_cast %16 : vector<1x64x256xbf16> to vector<64x256xbf16>
    %18 = vector.extract_strided_slice %4 {offsets = [0, 32], sizes = [256, 16], strides = [1, 1]} : vector<256x256xbf16> to vector<256x16xbf16>
    %cst_13 = arith.constant dense<0.000000e+00> : vector<64x16xf32>
    %19 = tpu.matmul %17, %18, %cst_13 {dimension_numbers = #tpu.dot_dimension_numbers<[1], [0], [0], [1], [0, 0, 1, 1], [], []>} : vector<64x256xbf16>, vector<256x16xbf16>, vector<64x16xf32> -> vector<64x16xf32>
    %20 = arith.addf %15, %19 : vector<64x16xf32>
    %c3 = arith.constant 3 : index
    %c0_14 = arith.constant 0 : index
    %c0_15 = arith.constant 0 : index
    %21 = vector.load %arg2[%c3, %c0_14, %c0_15] : memref<16x64x256xbf16, #tpu.memory_space<vmem>>, vector<1x64x256xbf16>
    %22 = vector.shape_cast %21 : vector<1x64x256xbf16> to vector<64x256xbf16>
    %23 = vector.extract_strided_slice %4 {offsets = [0, 48], sizes = [256, 16], strides = [1, 1]} : vector<256x256xbf16> to vector<256x16xbf16>
    %cst_16 = arith.constant dense<0.000000e+00> : vector<64x16xf32>
    %24 = tpu.matmul %22, %23, %cst_16 {dimension_numbers = #tpu.dot_dimension_numbers<[1], [0], [0], [1], [0, 0, 1, 1], [], []>} : vector<64x256xbf16>, vector<256x16xbf16>, vector<64x16xf32> -> vector<64x16xf32>
    %25 = arith.addf %20, %24 : vector<64x16xf32>
    %c4 = arith.constant 4 : index
    %c0_17 = arith.constant 0 : index
    %c0_18 = arith.constant 0 : index
    %26 = vector.load %arg2[%c4, %c0_17, %c0_18] : memref<16x64x256xbf16, #tpu.memory_space<vmem>>, vector<1x64x256xbf16>
    %27 = vector.shape_cast %26 : vector<1x64x256xbf16> to vector<64x256xbf16>
    %28 = vector.extract_strided_slice %4 {offsets = [0, 64], sizes = [256, 16], strides = [1, 1]} : vector<256x256xbf16> to vector<256x16xbf16>
    %cst_19 = arith.constant dense<0.000000e+00> : vector<64x16xf32>
    %29 = tpu.matmul %27, %28, %cst_19 {dimension_numbers = #tpu.dot_dimension_numbers<[1], [0], [0], [1], [0, 0, 1, 1], [], []>} : vector<64x256xbf16>, vector<256x16xbf16>, vector<64x16xf32> -> vector<64x16xf32>
    %30 = arith.addf %25, %29 : vector<64x16xf32>
    %c5 = arith.constant 5 : index
    %c0_20 = arith.constant 0 : index
    %c0_21 = arith.constant 0 : index
    %31 = vector.load %arg2[%c5, %c0_20, %c0_21] : memref<16x64x256xbf16, #tpu.memory_space<vmem>>, vector<1x64x256xbf16>
    %32 = vector.shape_cast %31 : vector<1x64x256xbf16> to vector<64x256xbf16>
    %33 = vector.extract_strided_slice %4 {offsets = [0, 80], sizes = [256, 16], strides = [1, 1]} : vector<256x256xbf16> to vector<256x16xbf16>
    %cst_22 = arith.constant dense<0.000000e+00> : vector<64x16xf32>
    %34 = tpu.matmul %32, %33, %cst_22 {dimension_numbers = #tpu.dot_dimension_numbers<[1], [0], [0], [1], [0, 0, 1, 1], [], []>} : vector<64x256xbf16>, vector<256x16xbf16>, vector<64x16xf32> -> vector<64x16xf32>
    %35 = arith.addf %30, %34 : vector<64x16xf32>
    %c6 = arith.constant 6 : index
    %c0_23 = arith.constant 0 : index
    %c0_24 = arith.constant 0 : index
    %36 = vector.load %arg2[%c6, %c0_23, %c0_24] : memref<16x64x256xbf16, #tpu.memory_space<vmem>>, vector<1x64x256xbf16>
    %37 = vector.shape_cast %36 : vector<1x64x256xbf16> to vector<64x256xbf16>
    %38 = vector.extract_strided_slice %4 {offsets = [0, 96], sizes = [256, 16], strides = [1, 1]} : vector<256x256xbf16> to vector<256x16xbf16>
    %cst_25 = arith.constant dense<0.000000e+00> : vector<64x16xf32>
    %39 = tpu.matmul %37, %38, %cst_25 {dimension_numbers = #tpu.dot_dimension_numbers<[1], [0], [0], [1], [0, 0, 1, 1], [], []>} : vector<64x256xbf16>, vector<256x16xbf16>, vector<64x16xf32> -> vector<64x16xf32>
    %40 = arith.addf %35, %39 : vector<64x16xf32>
    %c7 = arith.constant 7 : index
    %c0_26 = arith.constant 0 : index
    %c0_27 = arith.constant 0 : index
    %41 = vector.load %arg2[%c7, %c0_26, %c0_27] : memref<16x64x256xbf16, #tpu.memory_space<vmem>>, vector<1x64x256xbf16>
    %42 = vector.shape_cast %41 : vector<1x64x256xbf16> to vector<64x256xbf16>
    %43 = vector.extract_strided_slice %4 {offsets = [0, 112], sizes = [256, 16], strides = [1, 1]} : vector<256x256xbf16> to vector<256x16xbf16>
    %cst_28 = arith.constant dense<0.000000e+00> : vector<64x16xf32>
    %44 = tpu.matmul %42, %43, %cst_28 {dimension_numbers = #tpu.dot_dimension_numbers<[1], [0], [0], [1], [0, 0, 1, 1], [], []>} : vector<64x256xbf16>, vector<256x16xbf16>, vector<64x16xf32> -> vector<64x16xf32>
    %45 = arith.addf %40, %44 : vector<64x16xf32>
    %c8 = arith.constant 8 : index
    %c0_29 = arith.constant 0 : index
    %c0_30 = arith.constant 0 : index
    %46 = vector.load %arg2[%c8, %c0_29, %c0_30] : memref<16x64x256xbf16, #tpu.memory_space<vmem>>, vector<1x64x256xbf16>
    %47 = vector.shape_cast %46 : vector<1x64x256xbf16> to vector<64x256xbf16>
    %48 = vector.extract_strided_slice %4 {offsets = [0, 128], sizes = [256, 16], strides = [1, 1]} : vector<256x256xbf16> to vector<256x16xbf16>
    %cst_31 = arith.constant dense<0.000000e+00> : vector<64x16xf32>
    %49 = tpu.matmul %47, %48, %cst_31 {dimension_numbers = #tpu.dot_dimension_numbers<[1], [0], [0], [1], [0, 0, 1, 1], [], []>} : vector<64x256xbf16>, vector<256x16xbf16>, vector<64x16xf32> -> vector<64x16xf32>
    %50 = arith.addf %45, %49 : vector<64x16xf32>
    %c9 = arith.constant 9 : index
    %c0_32 = arith.constant 0 : index
    %c0_33 = arith.constant 0 : index
    %51 = vector.load %arg2[%c9, %c0_32, %c0_33] : memref<16x64x256xbf16, #tpu.memory_space<vmem>>, vector<1x64x256xbf16>
    %52 = vector.shape_cast %51 : vector<1x64x256xbf16> to vector<64x256xbf16>
    %53 = vector.extract_strided_slice %4 {offsets = [0, 144], sizes = [256, 16], strides = [1, 1]} : vector<256x256xbf16> to vector<256x16xbf16>
    %cst_34 = arith.constant dense<0.000000e+00> : vector<64x16xf32>
    %54 = tpu.matmul %52, %53, %cst_34 {dimension_numbers = #tpu.dot_dimension_numbers<[1], [0], [0], [1], [0, 0, 1, 1], [], []>} : vector<64x256xbf16>, vector<256x16xbf16>, vector<64x16xf32> -> vector<64x16xf32>
    %55 = arith.addf %50, %54 : vector<64x16xf32>
    %c10 = arith.constant 10 : index
    %c0_35 = arith.constant 0 : index
    %c0_36 = arith.constant 0 : index
    %56 = vector.load %arg2[%c10, %c0_35, %c0_36] : memref<16x64x256xbf16, #tpu.memory_space<vmem>>, vector<1x64x256xbf16>
    %57 = vector.shape_cast %56 : vector<1x64x256xbf16> to vector<64x256xbf16>
    %58 = vector.extract_strided_slice %4 {offsets = [0, 160], sizes = [256, 16], strides = [1, 1]} : vector<256x256xbf16> to vector<256x16xbf16>
    %cst_37 = arith.constant dense<0.000000e+00> : vector<64x16xf32>
    %59 = tpu.matmul %57, %58, %cst_37 {dimension_numbers = #tpu.dot_dimension_numbers<[1], [0], [0], [1], [0, 0, 1, 1], [], []>} : vector<64x256xbf16>, vector<256x16xbf16>, vector<64x16xf32> -> vector<64x16xf32>
    %60 = arith.addf %55, %59 : vector<64x16xf32>
    %c11 = arith.constant 11 : index
    %c0_38 = arith.constant 0 : index
    %c0_39 = arith.constant 0 : index
    %61 = vector.load %arg2[%c11, %c0_38, %c0_39] : memref<16x64x256xbf16, #tpu.memory_space<vmem>>, vector<1x64x256xbf16>
    %62 = vector.shape_cast %61 : vector<1x64x256xbf16> to vector<64x256xbf16>
    %63 = vector.extract_strided_slice %4 {offsets = [0, 176], sizes = [256, 16], strides = [1, 1]} : vector<256x256xbf16> to vector<256x16xbf16>
    %cst_40 = arith.constant dense<0.000000e+00> : vector<64x16xf32>
    %64 = tpu.matmul %62, %63, %cst_40 {dimension_numbers = #tpu.dot_dimension_numbers<[1], [0], [0], [1], [0, 0, 1, 1], [], []>} : vector<64x256xbf16>, vector<256x16xbf16>, vector<64x16xf32> -> vector<64x16xf32>
    %65 = arith.addf %60, %64 : vector<64x16xf32>
    %c12 = arith.constant 12 : index
    %c0_41 = arith.constant 0 : index
    %c0_42 = arith.constant 0 : index
    %66 = vector.load %arg2[%c12, %c0_41, %c0_42] : memref<16x64x256xbf16, #tpu.memory_space<vmem>>, vector<1x64x256xbf16>
    %67 = vector.shape_cast %66 : vector<1x64x256xbf16> to vector<64x256xbf16>
    %68 = vector.extract_strided_slice %4 {offsets = [0, 192], sizes = [256, 16], strides = [1, 1]} : vector<256x256xbf16> to vector<256x16xbf16>
    %cst_43 = arith.constant dense<0.000000e+00> : vector<64x16xf32>
    %69 = tpu.matmul %67, %68, %cst_43 {dimension_numbers = #tpu.dot_dimension_numbers<[1], [0], [0], [1], [0, 0, 1, 1], [], []>} : vector<64x256xbf16>, vector<256x16xbf16>, vector<64x16xf32> -> vector<64x16xf32>
    %70 = arith.addf %65, %69 : vector<64x16xf32>
    %c13 = arith.constant 13 : index
    %c0_44 = arith.constant 0 : index
    %c0_45 = arith.constant 0 : index
    %71 = vector.load %arg2[%c13, %c0_44, %c0_45] : memref<16x64x256xbf16, #tpu.memory_space<vmem>>, vector<1x64x256xbf16>
    %72 = vector.shape_cast %71 : vector<1x64x256xbf16> to vector<64x256xbf16>
    %73 = vector.extract_strided_slice %4 {offsets = [0, 208], sizes = [256, 16], strides = [1, 1]} : vector<256x256xbf16> to vector<256x16xbf16>
    %cst_46 = arith.constant dense<0.000000e+00> : vector<64x16xf32>
    %74 = tpu.matmul %72, %73, %cst_46 {dimension_numbers = #tpu.dot_dimension_numbers<[1], [0], [0], [1], [0, 0, 1, 1], [], []>} : vector<64x256xbf16>, vector<256x16xbf16>, vector<64x16xf32> -> vector<64x16xf32>
    %75 = arith.addf %70, %74 : vector<64x16xf32>
    %c14 = arith.constant 14 : index
    %c0_47 = arith.constant 0 : index
    %c0_48 = arith.constant 0 : index
    %76 = vector.load %arg2[%c14, %c0_47, %c0_48] : memref<16x64x256xbf16, #tpu.memory_space<vmem>>, vector<1x64x256xbf16>
    %77 = vector.shape_cast %76 : vector<1x64x256xbf16> to vector<64x256xbf16>
    %78 = vector.extract_strided_slice %4 {offsets = [0, 224], sizes = [256, 16], strides = [1, 1]} : vector<256x256xbf16> to vector<256x16xbf16>
    %cst_49 = arith.constant dense<0.000000e+00> : vector<64x16xf32>
    %79 = tpu.matmul %77, %78, %cst_49 {dimension_numbers = #tpu.dot_dimension_numbers<[1], [0], [0], [1], [0, 0, 1, 1], [], []>} : vector<64x256xbf16>, vector<256x16xbf16>, vector<64x16xf32> -> vector<64x16xf32>
    %80 = arith.addf %75, %79 : vector<64x16xf32>
    %c15 = arith.constant 15 : index
    %c0_50 = arith.constant 0 : index
    %c0_51 = arith.constant 0 : index
    %81 = vector.load %arg2[%c15, %c0_50, %c0_51] : memref<16x64x256xbf16, #tpu.memory_space<vmem>>, vector<1x64x256xbf16>
    %82 = vector.shape_cast %81 : vector<1x64x256xbf16> to vector<64x256xbf16>
    %83 = vector.extract_strided_slice %4 {offsets = [0, 240], sizes = [256, 16], strides = [1, 1]} : vector<256x256xbf16> to vector<256x16xbf16>
    %cst_52 = arith.constant dense<0.000000e+00> : vector<64x16xf32>
    %84 = tpu.matmul %82, %83, %cst_52 {dimension_numbers = #tpu.dot_dimension_numbers<[1], [0], [0], [1], [0, 0, 1, 1], [], []>} : vector<64x256xbf16>, vector<256x16xbf16>, vector<64x16xf32> -> vector<64x16xf32>
    %85 = arith.addf %80, %84 : vector<64x16xf32>
    %cst_53 = arith.constant 0.000000e+00 : f32
    %86 = vector.broadcast %cst_53 : f32 to vector<64x16xf32>
    %87 = arith.cmpf ogt, %85, %86 : vector<64x16xf32>
    %cst_54 = arith.constant 2.000000e-01 : f32
    %88 = vector.broadcast %cst_54 : f32 to vector<64x16xf32>
    %89 = arith.mulf %88, %85 : vector<64x16xf32>
    %90 = arith.select %87, %85, %89 : vector<64x16xi1>, vector<64x16xf32>
    %91 = arith.truncf %90 : vector<64x16xf32> to vector<64x16xbf16>
    %c0_55 = arith.constant 0 : index
    %c0_56 = arith.constant 0 : index
    %92 = vector.load %arg5[%c0_55, %c0_56] : memref<16x512xbf16, #tpu.memory_space<vmem>>, vector<16x512xbf16>
    %cst_57 = arith.constant dense<0.000000e+00> : vector<64x512xf32>
    %93 = tpu.matmul %91, %92, %cst_57 {dimension_numbers = #tpu.dot_dimension_numbers<[1], [0], [0], [1], [0, 0, 1, 1], [], []>} : vector<64x16xbf16>, vector<16x512xbf16>, vector<64x512xf32> -> vector<64x512xf32>
    %94 = arith.truncf %93 : vector<64x512xf32> to vector<64x512xbf16>
    %cst_58 = arith.constant 0.000000e+00 : f32
    %95 = vector.broadcast %cst_58 : f32 to vector<16x32xf32>
    %c0_59 = arith.constant 0 : index
    %c0_60 = arith.constant 0 : index
    %c0_61 = arith.constant 0 : index
    %96 = vector.load %arg4[%c0_59, %c0_60, %c0_61] : memref<16x16x64xbf16, #tpu.memory_space<vmem>>, vector<1x16x64xbf16>
    %97 = vector.shape_cast %96 : vector<1x16x64xbf16> to vector<16x64xbf16>
    %98 = vector.extract_strided_slice %94 {offsets = [0, 0], sizes = [64, 32], strides = [1, 1]} : vector<64x512xbf16> to vector<64x32xbf16>
    %cst_62 = arith.constant dense<0.000000e+00> : vector<16x32xf32>
    %99 = tpu.matmul %97, %98, %cst_62 {dimension_numbers = #tpu.dot_dimension_numbers<[1], [0], [0], [1], [0, 0, 1, 1], [], []>} : vector<16x64xbf16>, vector<64x32xbf16>, vector<16x32xf32> -> vector<16x32xf32>
    %100 = arith.addf %95, %99 : vector<16x32xf32>
    %c1_63 = arith.constant 1 : index
    %c0_64 = arith.constant 0 : index
    %c0_65 = arith.constant 0 : index
    %101 = vector.load %arg4[%c1_63, %c0_64, %c0_65] : memref<16x16x64xbf16, #tpu.memory_space<vmem>>, vector<1x16x64xbf16>
    %102 = vector.shape_cast %101 : vector<1x16x64xbf16> to vector<16x64xbf16>
    %103 = vector.extract_strided_slice %94 {offsets = [0, 32], sizes = [64, 32], strides = [1, 1]} : vector<64x512xbf16> to vector<64x32xbf16>
    %cst_66 = arith.constant dense<0.000000e+00> : vector<16x32xf32>
    %104 = tpu.matmul %102, %103, %cst_66 {dimension_numbers = #tpu.dot_dimension_numbers<[1], [0], [0], [1], [0, 0, 1, 1], [], []>} : vector<16x64xbf16>, vector<64x32xbf16>, vector<16x32xf32> -> vector<16x32xf32>
    %105 = arith.addf %100, %104 : vector<16x32xf32>
    %c2_67 = arith.constant 2 : index
    %c0_68 = arith.constant 0 : index
    %c0_69 = arith.constant 0 : index
    %106 = vector.load %arg4[%c2_67, %c0_68, %c0_69] : memref<16x16x64xbf16, #tpu.memory_space<vmem>>, vector<1x16x64xbf16>
    %107 = vector.shape_cast %106 : vector<1x16x64xbf16> to vector<16x64xbf16>
    %108 = vector.extract_strided_slice %94 {offsets = [0, 64], sizes = [64, 32], strides = [1, 1]} : vector<64x512xbf16> to vector<64x32xbf16>
    %cst_70 = arith.constant dense<0.000000e+00> : vector<16x32xf32>
    %109 = tpu.matmul %107, %108, %cst_70 {dimension_numbers = #tpu.dot_dimension_numbers<[1], [0], [0], [1], [0, 0, 1, 1], [], []>} : vector<16x64xbf16>, vector<64x32xbf16>, vector<16x32xf32> -> vector<16x32xf32>
    %110 = arith.addf %105, %109 : vector<16x32xf32>
    %c3_71 = arith.constant 3 : index
    %c0_72 = arith.constant 0 : index
    %c0_73 = arith.constant 0 : index
    %111 = vector.load %arg4[%c3_71, %c0_72, %c0_73] : memref<16x16x64xbf16, #tpu.memory_space<vmem>>, vector<1x16x64xbf16>
    %112 = vector.shape_cast %111 : vector<1x16x64xbf16> to vector<16x64xbf16>
    %113 = vector.extract_strided_slice %94 {offsets = [0, 96], sizes = [64, 32], strides = [1, 1]} : vector<64x512xbf16> to vector<64x32xbf16>
    %cst_74 = arith.constant dense<0.000000e+00> : vector<16x32xf32>
    %114 = tpu.matmul %112, %113, %cst_74 {dimension_numbers = #tpu.dot_dimension_numbers<[1], [0], [0], [1], [0, 0, 1, 1], [], []>} : vector<16x64xbf16>, vector<64x32xbf16>, vector<16x32xf32> -> vector<16x32xf32>
    %115 = arith.addf %110, %114 : vector<16x32xf32>
    %c4_75 = arith.constant 4 : index
    %c0_76 = arith.constant 0 : index
    %c0_77 = arith.constant 0 : index
    %116 = vector.load %arg4[%c4_75, %c0_76, %c0_77] : memref<16x16x64xbf16, #tpu.memory_space<vmem>>, vector<1x16x64xbf16>
    %117 = vector.shape_cast %116 : vector<1x16x64xbf16> to vector<16x64xbf16>
    %118 = vector.extract_strided_slice %94 {offsets = [0, 128], sizes = [64, 32], strides = [1, 1]} : vector<64x512xbf16> to vector<64x32xbf16>
    %cst_78 = arith.constant dense<0.000000e+00> : vector<16x32xf32>
    %119 = tpu.matmul %117, %118, %cst_78 {dimension_numbers = #tpu.dot_dimension_numbers<[1], [0], [0], [1], [0, 0, 1, 1], [], []>} : vector<16x64xbf16>, vector<64x32xbf16>, vector<16x32xf32> -> vector<16x32xf32>
    %120 = arith.addf %115, %119 : vector<16x32xf32>
    %c5_79 = arith.constant 5 : index
    %c0_80 = arith.constant 0 : index
    %c0_81 = arith.constant 0 : index
    %121 = vector.load %arg4[%c5_79, %c0_80, %c0_81] : memref<16x16x64xbf16, #tpu.memory_space<vmem>>, vector<1x16x64xbf16>
    %122 = vector.shape_cast %121 : vector<1x16x64xbf16> to vector<16x64xbf16>
    %123 = vector.extract_strided_slice %94 {offsets = [0, 160], sizes = [64, 32], strides = [1, 1]} : vector<64x512xbf16> to vector<64x32xbf16>
    %cst_82 = arith.constant dense<0.000000e+00> : vector<16x32xf32>
    %124 = tpu.matmul %122, %123, %cst_82 {dimension_numbers = #tpu.dot_dimension_numbers<[1], [0], [0], [1], [0, 0, 1, 1], [], []>} : vector<16x64xbf16>, vector<64x32xbf16>, vector<16x32xf32> -> vector<16x32xf32>
    %125 = arith.addf %120, %124 : vector<16x32xf32>
    %c6_83 = arith.constant 6 : index
    %c0_84 = arith.constant 0 : index
    %c0_85 = arith.constant 0 : index
    %126 = vector.load %arg4[%c6_83, %c0_84, %c0_85] : memref<16x16x64xbf16, #tpu.memory_space<vmem>>, vector<1x16x64xbf16>
    %127 = vector.shape_cast %126 : vector<1x16x64xbf16> to vector<16x64xbf16>
    %128 = vector.extract_strided_slice %94 {offsets = [0, 192], sizes = [64, 32], strides = [1, 1]} : vector<64x512xbf16> to vector<64x32xbf16>
    %cst_86 = arith.constant dense<0.000000e+00> : vector<16x32xf32>
    %129 = tpu.matmul %127, %128, %cst_86 {dimension_numbers = #tpu.dot_dimension_numbers<[1], [0], [0], [1], [0, 0, 1, 1], [], []>} : vector<16x64xbf16>, vector<64x32xbf16>, vector<16x32xf32> -> vector<16x32xf32>
    %130 = arith.addf %125, %129 : vector<16x32xf32>
    %c7_87 = arith.constant 7 : index
    %c0_88 = arith.constant 0 : index
    %c0_89 = arith.constant 0 : index
    %131 = vector.load %arg4[%c7_87, %c0_88, %c0_89] : memref<16x16x64xbf16, #tpu.memory_space<vmem>>, vector<1x16x64xbf16>
    %132 = vector.shape_cast %131 : vector<1x16x64xbf16> to vector<16x64xbf16>
    %133 = vector.extract_strided_slice %94 {offsets = [0, 224], sizes = [64, 32], strides = [1, 1]} : vector<64x512xbf16> to vector<64x32xbf16>
    %cst_90 = arith.constant dense<0.000000e+00> : vector<16x32xf32>
    %134 = tpu.matmul %132, %133, %cst_90 {dimension_numbers = #tpu.dot_dimension_numbers<[1], [0], [0], [1], [0, 0, 1, 1], [], []>} : vector<16x64xbf16>, vector<64x32xbf16>, vector<16x32xf32> -> vector<16x32xf32>
    %135 = arith.addf %130, %134 : vector<16x32xf32>
    %c8_91 = arith.constant 8 : index
    %c0_92 = arith.constant 0 : index
    %c0_93 = arith.constant 0 : index
    %136 = vector.load %arg4[%c8_91, %c0_92, %c0_93] : memref<16x16x64xbf16, #tpu.memory_space<vmem>>, vector<1x16x64xbf16>
    %137 = vector.shape_cast %136 : vector<1x16x64xbf16> to vector<16x64xbf16>
    %138 = vector.extract_strided_slice %94 {offsets = [0, 256], sizes = [64, 32], strides = [1, 1]} : vector<64x512xbf16> to vector<64x32xbf16>
    %cst_94 = arith.constant dense<0.000000e+00> : vector<16x32xf32>
    %139 = tpu.matmul %137, %138, %cst_94 {dimension_numbers = #tpu.dot_dimension_numbers<[1], [0], [0], [1], [0, 0, 1, 1], [], []>} : vector<16x64xbf16>, vector<64x32xbf16>, vector<16x32xf32> -> vector<16x32xf32>
    %140 = arith.addf %135, %139 : vector<16x32xf32>
    %c9_95 = arith.constant 9 : index
    %c0_96 = arith.constant 0 : index
    %c0_97 = arith.constant 0 : index
    %141 = vector.load %arg4[%c9_95, %c0_96, %c0_97] : memref<16x16x64xbf16, #tpu.memory_space<vmem>>, vector<1x16x64xbf16>
    %142 = vector.shape_cast %141 : vector<1x16x64xbf16> to vector<16x64xbf16>
    %143 = vector.extract_strided_slice %94 {offsets = [0, 288], sizes = [64, 32], strides = [1, 1]} : vector<64x512xbf16> to vector<64x32xbf16>
    %cst_98 = arith.constant dense<0.000000e+00> : vector<16x32xf32>
    %144 = tpu.matmul %142, %143, %cst_98 {dimension_numbers = #tpu.dot_dimension_numbers<[1], [0], [0], [1], [0, 0, 1, 1], [], []>} : vector<16x64xbf16>, vector<64x32xbf16>, vector<16x32xf32> -> vector<16x32xf32>
    %145 = arith.addf %140, %144 : vector<16x32xf32>
    %c10_99 = arith.constant 10 : index
    %c0_100 = arith.constant 0 : index
    %c0_101 = arith.constant 0 : index
    %146 = vector.load %arg4[%c10_99, %c0_100, %c0_101] : memref<16x16x64xbf16, #tpu.memory_space<vmem>>, vector<1x16x64xbf16>
    %147 = vector.shape_cast %146 : vector<1x16x64xbf16> to vector<16x64xbf16>
    %148 = vector.extract_strided_slice %94 {offsets = [0, 320], sizes = [64, 32], strides = [1, 1]} : vector<64x512xbf16> to vector<64x32xbf16>
    %cst_102 = arith.constant dense<0.000000e+00> : vector<16x32xf32>
    %149 = tpu.matmul %147, %148, %cst_102 {dimension_numbers = #tpu.dot_dimension_numbers<[1], [0], [0], [1], [0, 0, 1, 1], [], []>} : vector<16x64xbf16>, vector<64x32xbf16>, vector<16x32xf32> -> vector<16x32xf32>
    %150 = arith.addf %145, %149 : vector<16x32xf32>
    %c11_103 = arith.constant 11 : index
    %c0_104 = arith.constant 0 : index
    %c0_105 = arith.constant 0 : index
    %151 = vector.load %arg4[%c11_103, %c0_104, %c0_105] : memref<16x16x64xbf16, #tpu.memory_space<vmem>>, vector<1x16x64xbf16>
    %152 = vector.shape_cast %151 : vector<1x16x64xbf16> to vector<16x64xbf16>
    %153 = vector.extract_strided_slice %94 {offsets = [0, 352], sizes = [64, 32], strides = [1, 1]} : vector<64x512xbf16> to vector<64x32xbf16>
    %cst_106 = arith.constant dense<0.000000e+00> : vector<16x32xf32>
    %154 = tpu.matmul %152, %153, %cst_106 {dimension_numbers = #tpu.dot_dimension_numbers<[1], [0], [0], [1], [0, 0, 1, 1], [], []>} : vector<16x64xbf16>, vector<64x32xbf16>, vector<16x32xf32> -> vector<16x32xf32>
    %155 = arith.addf %150, %154 : vector<16x32xf32>
    %c12_107 = arith.constant 12 : index
    %c0_108 = arith.constant 0 : index
    %c0_109 = arith.constant 0 : index
    %156 = vector.load %arg4[%c12_107, %c0_108, %c0_109] : memref<16x16x64xbf16, #tpu.memory_space<vmem>>, vector<1x16x64xbf16>
    %157 = vector.shape_cast %156 : vector<1x16x64xbf16> to vector<16x64xbf16>
    %158 = vector.extract_strided_slice %94 {offsets = [0, 384], sizes = [64, 32], strides = [1, 1]} : vector<64x512xbf16> to vector<64x32xbf16>
    %cst_110 = arith.constant dense<0.000000e+00> : vector<16x32xf32>
    %159 = tpu.matmul %157, %158, %cst_110 {dimension_numbers = #tpu.dot_dimension_numbers<[1], [0], [0], [1], [0, 0, 1, 1], [], []>} : vector<16x64xbf16>, vector<64x32xbf16>, vector<16x32xf32> -> vector<16x32xf32>
    %160 = arith.addf %155, %159 : vector<16x32xf32>
    %c13_111 = arith.constant 13 : index
    %c0_112 = arith.constant 0 : index
    %c0_113 = arith.constant 0 : index
    %161 = vector.load %arg4[%c13_111, %c0_112, %c0_113] : memref<16x16x64xbf16, #tpu.memory_space<vmem>>, vector<1x16x64xbf16>
    %162 = vector.shape_cast %161 : vector<1x16x64xbf16> to vector<16x64xbf16>
    %163 = vector.extract_strided_slice %94 {offsets = [0, 416], sizes = [64, 32], strides = [1, 1]} : vector<64x512xbf16> to vector<64x32xbf16>
    %cst_114 = arith.constant dense<0.000000e+00> : vector<16x32xf32>
    %164 = tpu.matmul %162, %163, %cst_114 {dimension_numbers = #tpu.dot_dimension_numbers<[1], [0], [0], [1], [0, 0, 1, 1], [], []>} : vector<16x64xbf16>, vector<64x32xbf16>, vector<16x32xf32> -> vector<16x32xf32>
    %165 = arith.addf %160, %164 : vector<16x32xf32>
    %c14_115 = arith.constant 14 : index
    %c0_116 = arith.constant 0 : index
    %c0_117 = arith.constant 0 : index
    %166 = vector.load %arg4[%c14_115, %c0_116, %c0_117] : memref<16x16x64xbf16, #tpu.memory_space<vmem>>, vector<1x16x64xbf16>
    %167 = vector.shape_cast %166 : vector<1x16x64xbf16> to vector<16x64xbf16>
    %168 = vector.extract_strided_slice %94 {offsets = [0, 448], sizes = [64, 32], strides = [1, 1]} : vector<64x512xbf16> to vector<64x32xbf16>
    %cst_118 = arith.constant dense<0.000000e+00> : vector<16x32xf32>
    %169 = tpu.matmul %167, %168, %cst_118 {dimension_numbers = #tpu.dot_dimension_numbers<[1], [0], [0], [1], [0, 0, 1, 1], [], []>} : vector<16x64xbf16>, vector<64x32xbf16>, vector<16x32xf32> -> vector<16x32xf32>
    %170 = arith.addf %165, %169 : vector<16x32xf32>
    %c15_119 = arith.constant 15 : index
    %c0_120 = arith.constant 0 : index
    %c0_121 = arith.constant 0 : index
    %171 = vector.load %arg4[%c15_119, %c0_120, %c0_121] : memref<16x16x64xbf16, #tpu.memory_space<vmem>>, vector<1x16x64xbf16>
    %172 = vector.shape_cast %171 : vector<1x16x64xbf16> to vector<16x64xbf16>
    %173 = vector.extract_strided_slice %94 {offsets = [0, 480], sizes = [64, 32], strides = [1, 1]} : vector<64x512xbf16> to vector<64x32xbf16>
    %cst_122 = arith.constant dense<0.000000e+00> : vector<16x32xf32>
    %174 = tpu.matmul %172, %173, %cst_122 {dimension_numbers = #tpu.dot_dimension_numbers<[1], [0], [0], [1], [0, 0, 1, 1], [], []>} : vector<16x64xbf16>, vector<64x32xbf16>, vector<16x32xf32> -> vector<16x32xf32>
    %175 = arith.addf %170, %174 : vector<16x32xf32>
    %cst_123 = arith.constant dense<0.000000e+00> : vector<32xf32>
    %176 = vector.multi_reduction <add>, %175, %cst_123 [0] : vector<16x32xf32> to vector<32xf32>
    %177 = vector.shape_cast %176 : vector<32xf32> to vector<1x32xf32>
    %178 = arith.mulf %175, %175 : vector<16x32xf32>
    %cst_124 = arith.constant dense<0.000000e+00> : vector<32xf32>
    %179 = vector.multi_reduction <add>, %178, %cst_124 [0] : vector<16x32xf32> to vector<32xf32>
    %180 = vector.shape_cast %179 : vector<32xf32> to vector<1x32xf32>
    %cst_125 = arith.constant 0.000000e+00 : f32
    %181 = vector.broadcast %cst_125 : f32 to vector<1x16xf32>
    %cst_126 = arith.constant 0.000000e+00 : f32
    %182 = vector.broadcast %cst_126 : f32 to vector<1x16xf32>
    %183 = vector.extract_strided_slice %177 {offsets = [0, 0], sizes = [1, 16], strides = [1, 1]} : vector<1x32xf32> to vector<1x16xf32>
    %184 = arith.addf %181, %183 : vector<1x16xf32>
    %185 = vector.extract_strided_slice %180 {offsets = [0, 0], sizes = [1, 16], strides = [1, 1]} : vector<1x32xf32> to vector<1x16xf32>
    %186 = arith.addf %182, %185 : vector<1x16xf32>
    %187 = vector.extract_strided_slice %177 {offsets = [0, 16], sizes = [1, 16], strides = [1, 1]} : vector<1x32xf32> to vector<1x16xf32>
    %188 = arith.addf %184, %187 : vector<1x16xf32>
    %189 = vector.extract_strided_slice %180 {offsets = [0, 16], sizes = [1, 16], strides = [1, 1]} : vector<1x32xf32> to vector<1x16xf32>
    %190 = arith.addf %186, %189 : vector<1x16xf32>
    %cst_127 = arith.constant 3.125000e-02 : f32
    %191 = vector.broadcast %cst_127 : f32 to vector<1x16xf32>
    %192 = arith.mulf %188, %191 : vector<1x16xf32>
    %cst_128 = arith.constant 3.125000e-02 : f32
    %193 = vector.broadcast %cst_128 : f32 to vector<1x16xf32>
    %194 = arith.mulf %190, %193 : vector<1x16xf32>
    %195 = arith.mulf %192, %192 : vector<1x16xf32>
    %196 = arith.subf %194, %195 : vector<1x16xf32>
    %cst_129 = arith.constant 9.99999974E-6 : f32
    %197 = vector.broadcast %cst_129 : f32 to vector<1x16xf32>
    %198 = arith.addf %196, %197 : vector<1x16xf32>
    %199 = math.rsqrt %198 : vector<1x16xf32>
    %200 = tpu.concatenate %192, %192 in 1 : vector<1x16xf32>, vector<1x16xf32> -> vector<1x32xf32>
    %201 = tpu.concatenate %199, %199 in 1 : vector<1x16xf32>, vector<1x16xf32> -> vector<1x32xf32>
    %202 = vector.broadcast %200 : vector<1x32xf32> to vector<16x32xf32>
    %203 = arith.subf %175, %202 : vector<16x32xf32>
    %204 = vector.broadcast %201 : vector<1x32xf32> to vector<16x32xf32>
    %205 = arith.mulf %203, %204 : vector<16x32xf32>
    %cst_130 = arith.constant 0.000000e+00 : f32
    %206 = vector.broadcast %cst_130 : f32 to vector<16x32xf32>
    %207 = arith.cmpf ogt, %205, %206 : vector<16x32xf32>
    %cst_131 = arith.constant 2.000000e-01 : f32
    %208 = vector.broadcast %cst_131 : f32 to vector<16x32xf32>
    %209 = arith.mulf %208, %205 : vector<16x32xf32>
    %210 = arith.select %207, %205, %209 : vector<16x32xi1>, vector<16x32xf32>
    %211 = arith.truncf %210 : vector<16x32xf32> to vector<16x32xbf16>
    %c0_132 = arith.constant 0 : index
    %c0_133 = arith.constant 0 : index
    %212 = vector.load %arg7[%c0_132, %c0_133] : memref<32x512xbf16, #tpu.memory_space<vmem>>, vector<32x512xbf16>
    %cst_134 = arith.constant dense<0.000000e+00> : vector<16x512xf32>
    %213 = tpu.matmul %211, %212, %cst_134 {dimension_numbers = #tpu.dot_dimension_numbers<[1], [0], [0], [1], [0, 0, 1, 1], [], []>} : vector<16x32xbf16>, vector<32x512xbf16>, vector<16x512xf32> -> vector<16x512xf32>
    %214 = arith.truncf %213 : vector<16x512xf32> to vector<16x512xbf16>
    %cst_135 = arith.constant 0.000000e+00 : f32
    %215 = vector.broadcast %cst_135 : f32 to vector<1x32xf32>
    %c0_136 = arith.constant 0 : index
    %c0_137 = arith.constant 0 : index
    %c0_138 = arith.constant 0 : index
    %216 = vector.load %arg6[%c0_136, %c0_137, %c0_138] : memref<16x1x16xbf16, #tpu.memory_space<vmem>>, vector<1x1x16xbf16>
    %217 = vector.shape_cast %216 : vector<1x1x16xbf16> to vector<1x16xbf16>
    %218 = vector.extract_strided_slice %214 {offsets = [0, 0], sizes = [16, 32], strides = [1, 1]} : vector<16x512xbf16> to vector<16x32xbf16>
    %cst_139 = arith.constant dense<0.000000e+00> : vector<1x32xf32>
    %219 = tpu.matmul %217, %218, %cst_139 {dimension_numbers = #tpu.dot_dimension_numbers<[1], [0], [0], [1], [0, 0, 1, 1], [], []>} : vector<1x16xbf16>, vector<16x32xbf16>, vector<1x32xf32> -> vector<1x32xf32>
    %220 = arith.addf %215, %219 : vector<1x32xf32>
    %c1_140 = arith.constant 1 : index
    %c0_141 = arith.constant 0 : index
    %c0_142 = arith.constant 0 : index
    %221 = vector.load %arg6[%c1_140, %c0_141, %c0_142] : memref<16x1x16xbf16, #tpu.memory_space<vmem>>, vector<1x1x16xbf16>
    %222 = vector.shape_cast %221 : vector<1x1x16xbf16> to vector<1x16xbf16>
    %223 = vector.extract_strided_slice %214 {offsets = [0, 32], sizes = [16, 32], strides = [1, 1]} : vector<16x512xbf16> to vector<16x32xbf16>
    %cst_143 = arith.constant dense<0.000000e+00> : vector<1x32xf32>
    %224 = tpu.matmul %222, %223, %cst_143 {dimension_numbers = #tpu.dot_dimension_numbers<[1], [0], [0], [1], [0, 0, 1, 1], [], []>} : vector<1x16xbf16>, vector<16x32xbf16>, vector<1x32xf32> -> vector<1x32xf32>
    %225 = arith.addf %220, %224 : vector<1x32xf32>
    %c2_144 = arith.constant 2 : index
    %c0_145 = arith.constant 0 : index
    %c0_146 = arith.constant 0 : index
    %226 = vector.load %arg6[%c2_144, %c0_145, %c0_146] : memref<16x1x16xbf16, #tpu.memory_space<vmem>>, vector<1x1x16xbf16>
    %227 = vector.shape_cast %226 : vector<1x1x16xbf16> to vector<1x16xbf16>
    %228 = vector.extract_strided_slice %214 {offsets = [0, 64], sizes = [16, 32], strides = [1, 1]} : vector<16x512xbf16> to vector<16x32xbf16>
    %cst_147 = arith.constant dense<0.000000e+00> : vector<1x32xf32>
    %229 = tpu.matmul %227, %228, %cst_147 {dimension_numbers = #tpu.dot_dimension_numbers<[1], [0], [0], [1], [0, 0, 1, 1], [], []>} : vector<1x16xbf16>, vector<16x32xbf16>, vector<1x32xf32> -> vector<1x32xf32>
    %230 = arith.addf %225, %229 : vector<1x32xf32>
    %c3_148 = arith.constant 3 : index
    %c0_149 = arith.constant 0 : index
    %c0_150 = arith.constant 0 : index
    %231 = vector.load %arg6[%c3_148, %c0_149, %c0_150] : memref<16x1x16xbf16, #tpu.memory_space<vmem>>, vector<1x1x16xbf16>
    %232 = vector.shape_cast %231 : vector<1x1x16xbf16> to vector<1x16xbf16>
    %233 = vector.extract_strided_slice %214 {offsets = [0, 96], sizes = [16, 32], strides = [1, 1]} : vector<16x512xbf16> to vector<16x32xbf16>
    %cst_151 = arith.constant dense<0.000000e+00> : vector<1x32xf32>
    %234 = tpu.matmul %232, %233, %cst_151 {dimension_numbers = #tpu.dot_dimension_numbers<[1], [0], [0], [1], [0, 0, 1, 1], [], []>} : vector<1x16xbf16>, vector<16x32xbf16>, vector<1x32xf32> -> vector<1x32xf32>
    %235 = arith.addf %230, %234 : vector<1x32xf32>
    %c4_152 = arith.constant 4 : index
    %c0_153 = arith.constant 0 : index
    %c0_154 = arith.constant 0 : index
    %236 = vector.load %arg6[%c4_152, %c0_153, %c0_154] : memref<16x1x16xbf16, #tpu.memory_space<vmem>>, vector<1x1x16xbf16>
    %237 = vector.shape_cast %236 : vector<1x1x16xbf16> to vector<1x16xbf16>
    %238 = vector.extract_strided_slice %214 {offsets = [0, 128], sizes = [16, 32], strides = [1, 1]} : vector<16x512xbf16> to vector<16x32xbf16>
    %cst_155 = arith.constant dense<0.000000e+00> : vector<1x32xf32>
    %239 = tpu.matmul %237, %238, %cst_155 {dimension_numbers = #tpu.dot_dimension_numbers<[1], [0], [0], [1], [0, 0, 1, 1], [], []>} : vector<1x16xbf16>, vector<16x32xbf16>, vector<1x32xf32> -> vector<1x32xf32>
    %240 = arith.addf %235, %239 : vector<1x32xf32>
    %c5_156 = arith.constant 5 : index
    %c0_157 = arith.constant 0 : index
    %c0_158 = arith.constant 0 : index
    %241 = vector.load %arg6[%c5_156, %c0_157, %c0_158] : memref<16x1x16xbf16, #tpu.memory_space<vmem>>, vector<1x1x16xbf16>
    %242 = vector.shape_cast %241 : vector<1x1x16xbf16> to vector<1x16xbf16>
    %243 = vector.extract_strided_slice %214 {offsets = [0, 160], sizes = [16, 32], strides = [1, 1]} : vector<16x512xbf16> to vector<16x32xbf16>
    %cst_159 = arith.constant dense<0.000000e+00> : vector<1x32xf32>
    %244 = tpu.matmul %242, %243, %cst_159 {dimension_numbers = #tpu.dot_dimension_numbers<[1], [0], [0], [1], [0, 0, 1, 1], [], []>} : vector<1x16xbf16>, vector<16x32xbf16>, vector<1x32xf32> -> vector<1x32xf32>
    %245 = arith.addf %240, %244 : vector<1x32xf32>
    %c6_160 = arith.constant 6 : index
    %c0_161 = arith.constant 0 : index
    %c0_162 = arith.constant 0 : index
    %246 = vector.load %arg6[%c6_160, %c0_161, %c0_162] : memref<16x1x16xbf16, #tpu.memory_space<vmem>>, vector<1x1x16xbf16>
    %247 = vector.shape_cast %246 : vector<1x1x16xbf16> to vector<1x16xbf16>
    %248 = vector.extract_strided_slice %214 {offsets = [0, 192], sizes = [16, 32], strides = [1, 1]} : vector<16x512xbf16> to vector<16x32xbf16>
    %cst_163 = arith.constant dense<0.000000e+00> : vector<1x32xf32>
    %249 = tpu.matmul %247, %248, %cst_163 {dimension_numbers = #tpu.dot_dimension_numbers<[1], [0], [0], [1], [0, 0, 1, 1], [], []>} : vector<1x16xbf16>, vector<16x32xbf16>, vector<1x32xf32> -> vector<1x32xf32>
    %250 = arith.addf %245, %249 : vector<1x32xf32>
    %c7_164 = arith.constant 7 : index
    %c0_165 = arith.constant 0 : index
    %c0_166 = arith.constant 0 : index
    %251 = vector.load %arg6[%c7_164, %c0_165, %c0_166] : memref<16x1x16xbf16, #tpu.memory_space<vmem>>, vector<1x1x16xbf16>
    %252 = vector.shape_cast %251 : vector<1x1x16xbf16> to vector<1x16xbf16>
    %253 = vector.extract_strided_slice %214 {offsets = [0, 224], sizes = [16, 32], strides = [1, 1]} : vector<16x512xbf16> to vector<16x32xbf16>
    %cst_167 = arith.constant dense<0.000000e+00> : vector<1x32xf32>
    %254 = tpu.matmul %252, %253, %cst_167 {dimension_numbers = #tpu.dot_dimension_numbers<[1], [0], [0], [1], [0, 0, 1, 1], [], []>} : vector<1x16xbf16>, vector<16x32xbf16>, vector<1x32xf32> -> vector<1x32xf32>
    %255 = arith.addf %250, %254 : vector<1x32xf32>
    %c8_168 = arith.constant 8 : index
    %c0_169 = arith.constant 0 : index
    %c0_170 = arith.constant 0 : index
    %256 = vector.load %arg6[%c8_168, %c0_169, %c0_170] : memref<16x1x16xbf16, #tpu.memory_space<vmem>>, vector<1x1x16xbf16>
    %257 = vector.shape_cast %256 : vector<1x1x16xbf16> to vector<1x16xbf16>
    %258 = vector.extract_strided_slice %214 {offsets = [0, 256], sizes = [16, 32], strides = [1, 1]} : vector<16x512xbf16> to vector<16x32xbf16>
    %cst_171 = arith.constant dense<0.000000e+00> : vector<1x32xf32>
    %259 = tpu.matmul %257, %258, %cst_171 {dimension_numbers = #tpu.dot_dimension_numbers<[1], [0], [0], [1], [0, 0, 1, 1], [], []>} : vector<1x16xbf16>, vector<16x32xbf16>, vector<1x32xf32> -> vector<1x32xf32>
    %260 = arith.addf %255, %259 : vector<1x32xf32>
    %c9_172 = arith.constant 9 : index
    %c0_173 = arith.constant 0 : index
    %c0_174 = arith.constant 0 : index
    %261 = vector.load %arg6[%c9_172, %c0_173, %c0_174] : memref<16x1x16xbf16, #tpu.memory_space<vmem>>, vector<1x1x16xbf16>
    %262 = vector.shape_cast %261 : vector<1x1x16xbf16> to vector<1x16xbf16>
    %263 = vector.extract_strided_slice %214 {offsets = [0, 288], sizes = [16, 32], strides = [1, 1]} : vector<16x512xbf16> to vector<16x32xbf16>
    %cst_175 = arith.constant dense<0.000000e+00> : vector<1x32xf32>
    %264 = tpu.matmul %262, %263, %cst_175 {dimension_numbers = #tpu.dot_dimension_numbers<[1], [0], [0], [1], [0, 0, 1, 1], [], []>} : vector<1x16xbf16>, vector<16x32xbf16>, vector<1x32xf32> -> vector<1x32xf32>
    %265 = arith.addf %260, %264 : vector<1x32xf32>
    %c10_176 = arith.constant 10 : index
    %c0_177 = arith.constant 0 : index
    %c0_178 = arith.constant 0 : index
    %266 = vector.load %arg6[%c10_176, %c0_177, %c0_178] : memref<16x1x16xbf16, #tpu.memory_space<vmem>>, vector<1x1x16xbf16>
    %267 = vector.shape_cast %266 : vector<1x1x16xbf16> to vector<1x16xbf16>
    %268 = vector.extract_strided_slice %214 {offsets = [0, 320], sizes = [16, 32], strides = [1, 1]} : vector<16x512xbf16> to vector<16x32xbf16>
    %cst_179 = arith.constant dense<0.000000e+00> : vector<1x32xf32>
    %269 = tpu.matmul %267, %268, %cst_179 {dimension_numbers = #tpu.dot_dimension_numbers<[1], [0], [0], [1], [0, 0, 1, 1], [], []>} : vector<1x16xbf16>, vector<16x32xbf16>, vector<1x32xf32> -> vector<1x32xf32>
    %270 = arith.addf %265, %269 : vector<1x32xf32>
    %c11_180 = arith.constant 11 : index
    %c0_181 = arith.constant 0 : index
    %c0_182 = arith.constant 0 : index
    %271 = vector.load %arg6[%c11_180, %c0_181, %c0_182] : memref<16x1x16xbf16, #tpu.memory_space<vmem>>, vector<1x1x16xbf16>
    %272 = vector.shape_cast %271 : vector<1x1x16xbf16> to vector<1x16xbf16>
    %273 = vector.extract_strided_slice %214 {offsets = [0, 352], sizes = [16, 32], strides = [1, 1]} : vector<16x512xbf16> to vector<16x32xbf16>
    %cst_183 = arith.constant dense<0.000000e+00> : vector<1x32xf32>
    %274 = tpu.matmul %272, %273, %cst_183 {dimension_numbers = #tpu.dot_dimension_numbers<[1], [0], [0], [1], [0, 0, 1, 1], [], []>} : vector<1x16xbf16>, vector<16x32xbf16>, vector<1x32xf32> -> vector<1x32xf32>
    %275 = arith.addf %270, %274 : vector<1x32xf32>
    %c12_184 = arith.constant 12 : index
    %c0_185 = arith.constant 0 : index
    %c0_186 = arith.constant 0 : index
    %276 = vector.load %arg6[%c12_184, %c0_185, %c0_186] : memref<16x1x16xbf16, #tpu.memory_space<vmem>>, vector<1x1x16xbf16>
    %277 = vector.shape_cast %276 : vector<1x1x16xbf16> to vector<1x16xbf16>
    %278 = vector.extract_strided_slice %214 {offsets = [0, 384], sizes = [16, 32], strides = [1, 1]} : vector<16x512xbf16> to vector<16x32xbf16>
    %cst_187 = arith.constant dense<0.000000e+00> : vector<1x32xf32>
    %279 = tpu.matmul %277, %278, %cst_187 {dimension_numbers = #tpu.dot_dimension_numbers<[1], [0], [0], [1], [0, 0, 1, 1], [], []>} : vector<1x16xbf16>, vector<16x32xbf16>, vector<1x32xf32> -> vector<1x32xf32>
    %280 = arith.addf %275, %279 : vector<1x32xf32>
    %c13_188 = arith.constant 13 : index
    %c0_189 = arith.constant 0 : index
    %c0_190 = arith.constant 0 : index
    %281 = vector.load %arg6[%c13_188, %c0_189, %c0_190] : memref<16x1x16xbf16, #tpu.memory_space<vmem>>, vector<1x1x16xbf16>
    %282 = vector.shape_cast %281 : vector<1x1x16xbf16> to vector<1x16xbf16>
    %283 = vector.extract_strided_slice %214 {offsets = [0, 416], sizes = [16, 32], strides = [1, 1]} : vector<16x512xbf16> to vector<16x32xbf16>
    %cst_191 = arith.constant dense<0.000000e+00> : vector<1x32xf32>
    %284 = tpu.matmul %282, %283, %cst_191 {dimension_numbers = #tpu.dot_dimension_numbers<[1], [0], [0], [1], [0, 0, 1, 1], [], []>} : vector<1x16xbf16>, vector<16x32xbf16>, vector<1x32xf32> -> vector<1x32xf32>
    %285 = arith.addf %280, %284 : vector<1x32xf32>
    %c14_192 = arith.constant 14 : index
    %c0_193 = arith.constant 0 : index
    %c0_194 = arith.constant 0 : index
    %286 = vector.load %arg6[%c14_192, %c0_193, %c0_194] : memref<16x1x16xbf16, #tpu.memory_space<vmem>>, vector<1x1x16xbf16>
    %287 = vector.shape_cast %286 : vector<1x1x16xbf16> to vector<1x16xbf16>
    %288 = vector.extract_strided_slice %214 {offsets = [0, 448], sizes = [16, 32], strides = [1, 1]} : vector<16x512xbf16> to vector<16x32xbf16>
    %cst_195 = arith.constant dense<0.000000e+00> : vector<1x32xf32>
    %289 = tpu.matmul %287, %288, %cst_195 {dimension_numbers = #tpu.dot_dimension_numbers<[1], [0], [0], [1], [0, 0, 1, 1], [], []>} : vector<1x16xbf16>, vector<16x32xbf16>, vector<1x32xf32> -> vector<1x32xf32>
    %290 = arith.addf %285, %289 : vector<1x32xf32>
    %c15_196 = arith.constant 15 : index
    %c0_197 = arith.constant 0 : index
    %c0_198 = arith.constant 0 : index
    %291 = vector.load %arg6[%c15_196, %c0_197, %c0_198] : memref<16x1x16xbf16, #tpu.memory_space<vmem>>, vector<1x1x16xbf16>
    %292 = vector.shape_cast %291 : vector<1x1x16xbf16> to vector<1x16xbf16>
    %293 = vector.extract_strided_slice %214 {offsets = [0, 480], sizes = [16, 32], strides = [1, 1]} : vector<16x512xbf16> to vector<16x32xbf16>
    %cst_199 = arith.constant dense<0.000000e+00> : vector<1x32xf32>
    %294 = tpu.matmul %292, %293, %cst_199 {dimension_numbers = #tpu.dot_dimension_numbers<[1], [0], [0], [1], [0, 0, 1, 1], [], []>} : vector<1x16xbf16>, vector<16x32xbf16>, vector<1x32xf32> -> vector<1x32xf32>
    %295 = arith.addf %290, %294 : vector<1x32xf32>
    %c0_200 = arith.constant 0 : index
    %c0_201 = arith.constant 0 : index
    %296 = vector.load %arg8[%c0_200, %c0_201] : memref<1x32xf32, #tpu.memory_space<vmem>>, vector<1x32xf32>
    %297 = arith.mulf %295, %296 : vector<1x32xf32>
    %298 = tpu.iota {dimensions = array<i32: 1>} : vector<1x128xi32>
    %cst_202 = arith.constant 0.000000e+00 : f32
    %299 = vector.broadcast %cst_202 : f32 to vector<1x128xf32>
    %300 = vector.extract_strided_slice %297 {offsets = [0, 0], sizes = [1, 16], strides = [1, 1]} : vector<1x32xf32> to vector<1x16xf32>
    %cst_203 = arith.constant dense<0.000000e+00> : vector<1xf32>
    %301 = vector.multi_reduction <add>, %300, %cst_203 [1] : vector<1x16xf32> to vector<1xf32>
    %302 = vector.shape_cast %301 : vector<1xf32> to vector<1x1xf32>
    %cst_204 = arith.constant 0.000000e+00 : f32
    %303 = vector.broadcast %cst_204 : f32 to vector<1x1xf32>
    %304 = arith.subf %303, %302 : vector<1x1xf32>
    %305 = math.exp %304 : vector<1x1xf32>
    %cst_205 = arith.constant 1.000000e+00 : f32
    %306 = vector.broadcast %cst_205 : f32 to vector<1x1xf32>
    %307 = arith.addf %306, %305 : vector<1x1xf32>
    %308 = tpu.reciprocal %307 {approx = true} : vector<1x1xf32> -> vector<1x1xf32>
    %cst_206 = arith.constant 0.000000e+00 : f32
    %cst_207 = arith.constant 1.000000e+00 : f32
    %309 = vector.broadcast %cst_206 : f32 to vector<1x1xf32>
    %310 = arith.maximumf %309, %308 : vector<1x1xf32>
    %311 = vector.broadcast %cst_207 : f32 to vector<1x1xf32>
    %312 = arith.minimumf %311, %310 : vector<1x1xf32>
    %c0_i32 = arith.constant 0 : i32
    %313 = vector.broadcast %c0_i32 : i32 to vector<1x128xi32>
    %314 = arith.cmpi eq, %298, %313 : vector<1x128xi32>
    %315 = vector.shape_cast %312 : vector<1x1xf32> to vector<1x1xf32>
    %316 = vector.broadcast %315 : vector<1x1xf32> to vector<1x128xf32>
    %317 = arith.select %314, %316, %299 : vector<1x128xi1>, vector<1x128xf32>
    %318 = vector.extract_strided_slice %297 {offsets = [0, 16], sizes = [1, 16], strides = [1, 1]} : vector<1x32xf32> to vector<1x16xf32>
    %cst_208 = arith.constant dense<0.000000e+00> : vector<1xf32>
    %319 = vector.multi_reduction <add>, %318, %cst_208 [1] : vector<1x16xf32> to vector<1xf32>
    %320 = vector.shape_cast %319 : vector<1xf32> to vector<1x1xf32>
    %cst_209 = arith.constant 0.000000e+00 : f32
    %321 = vector.broadcast %cst_209 : f32 to vector<1x1xf32>
    %322 = arith.subf %321, %320 : vector<1x1xf32>
    %323 = math.exp %322 : vector<1x1xf32>
    %cst_210 = arith.constant 1.000000e+00 : f32
    %324 = vector.broadcast %cst_210 : f32 to vector<1x1xf32>
    %325 = arith.addf %324, %323 : vector<1x1xf32>
    %326 = tpu.reciprocal %325 {approx = true} : vector<1x1xf32> -> vector<1x1xf32>
    %cst_211 = arith.constant 0.000000e+00 : f32
    %cst_212 = arith.constant 1.000000e+00 : f32
    %327 = vector.broadcast %cst_211 : f32 to vector<1x1xf32>
    %328 = arith.maximumf %327, %326 : vector<1x1xf32>
    %329 = vector.broadcast %cst_212 : f32 to vector<1x1xf32>
    %330 = arith.minimumf %329, %328 : vector<1x1xf32>
    %c1_i32 = arith.constant 1 : i32
    %331 = vector.broadcast %c1_i32 : i32 to vector<1x128xi32>
    %332 = arith.cmpi eq, %298, %331 : vector<1x128xi32>
    %333 = vector.shape_cast %330 : vector<1x1xf32> to vector<1x1xf32>
    %334 = vector.broadcast %333 : vector<1x1xf32> to vector<1x128xf32>
    %335 = arith.select %332, %334, %317 : vector<1x128xi1>, vector<1x128xf32>
    %cst_213 = arith.constant 0.000000e+00 : f32
    %336 = vector.broadcast %cst_213 : f32 to vector<1x96xf32>
    %337 = tpu.concatenate %295, %336 in 1 : vector<1x32xf32>, vector<1x96xf32> -> vector<1x128xf32>
    %cst_214 = arith.constant 0.000000e+00 : f32
    %338 = vector.broadcast %cst_214 : f32 to vector<6x128xf32>
    %339 = tpu.concatenate %337, %335, %338 in 0 : vector<1x128xf32>, vector<1x128xf32>, vector<6x128xf32> -> vector<8x128xf32>
    %c0_215 = arith.constant 0 : index
    %c0_216 = arith.constant 0 : index
    %340 = vector.load %arg9[%c0_215, %c0_216] : memref<8x128xf32, #tpu.memory_space<vmem>>, vector<8x128xf32>
    tpu.vector_store %arg9[%c0_215, %c0_216], %339 {strides = array<i32>} : memref<8x128xf32, #tpu.memory_space<vmem>>, vector<8x128xf32>,
    return
  }
  func.func @transform_0(%arg0: i32) -> (i32, i32) {
    %c0_i32 = arith.constant 0 : i32
    %c0_i32_0 = arith.constant 0 : i32
    %c0_i32_1 = arith.constant 0 : i32
    return %c0_i32, %c0_i32_0 : i32, i32
  }
  func.func @transform_1(%arg0: i32) -> (i32, i32, i32) {
    %c0_i32 = arith.constant 0 : i32
    %c0_i32_0 = arith.constant 0 : i32
    %c0_i32_1 = arith.constant 0 : i32
    %c0_i32_2 = arith.constant 0 : i32
    return %c0_i32, %c0_i32_0, %c0_i32_1 : i32, i32, i32
  }
  func.func @transform_2(%arg0: i32) -> (i32, i32) {
    %c0_i32 = arith.constant 0 : i32
    %c0_i32_0 = arith.constant 0 : i32
    %c0_i32_1 = arith.constant 0 : i32
    return %c0_i32, %c0_i32_0 : i32, i32
  }
  func.func @transform_3(%arg0: i32) -> (i32, i32, i32) {
    %c0_i32 = arith.constant 0 : i32
    %c0_i32_0 = arith.constant 0 : i32
    %c0_i32_1 = arith.constant 0 : i32
    %c0_i32_2 = arith.constant 0 : i32
    return %c0_i32, %c0_i32_0, %c0_i32_1 : i32, i32, i32
  }
  func.func @transform_4(%arg0: i32) -> (i32, i32) {
    %c0_i32 = arith.constant 0 : i32
    %c0_i32_0 = arith.constant 0 : i32
    %c0_i32_1 = arith.constant 0 : i32
    return %c0_i32, %c0_i32_0 : i32, i32
  }
  func.func @transform_5(%arg0: i32) -> (i32, i32, i32) {
    %c0_i32 = arith.constant 0 : i32
    %c0_i32_0 = arith.constant 0 : i32
    %c0_i32_1 = arith.constant 0 : i32
    %c0_i32_2 = arith.constant 0 : i32
    return %c0_i32, %c0_i32_0, %c0_i32_1 : i32, i32, i32
  }
  func.func @transform_6(%arg0: i32) -> (i32, i32) {
    %c0_i32 = arith.constant 0 : i32
    %c0_i32_0 = arith.constant 0 : i32
    %c0_i32_1 = arith.constant 0 : i32
    return %c0_i32, %c0_i32_0 : i32, i32
  }
  func.func @transform_7(%arg0: i32) -> (i32, i32) {
    %c0_i32 = arith.constant 0 : i32
    %c0_i32_0 = arith.constant 0 : i32
    %c0_i32_1 = arith.constant 0 : i32
    return %c0_i32, %c0_i32_0 : i32, i32
  }
  func.func @transform_8(%arg0: i32) -> (i32, i32) {
    %c0_i32 = arith.constant 0 : i32
    %c0_i32_0 = arith.constant 0 : i32
    %c0_i32_1 = arith.constant 0 : i32
    return %c0_i32, %c0_i32_0 : i32, i32
  }
}

</mosaic_0001>

<llo_original>
// kernel: squeeze.2
$region0: #{squeeze.2}
  %s0 = inlined_call_operand.vmem [shape: f32[32], index: 0, kind: input, shape index: {}]
  %s1 = inlined_call_operand.hbm [shape: f32[2,16,1,1], index: 1, kind: output, shape index: {}]
  $region1: #{squeeze.2} parent=0
    #allocation0 [shape = 'u8[1024]{0}', space=vmem, size = 0x400, scoped, tag = 'operand span for operand 1']
    #allocation1 [shape = 's32[1]{0}', space=sflag, size = 0x4, scoped, tag = 'scoped memory for squeeze.2']
    #allocation2 [shape = 'u8[4096]{0}', space=vmem, size = 0x1000, scoped, tag = 'scoped mem for output reshape']
    #allocation3 [shape = 'u8[4096]{0}', space=vmem, size = 0x1000, scoped, tag = 'scoped mem for input reshape']
    %2 = vsyncpa [#allocation1], 0
    %s4 = sshll.u32 1, 1
    %s5 = ssub.s32 %s4, 1
    %v6 = vld [vmem:[%s0] sm:%s5]
    %7 = vst [vmem:[#allocation3] sm:%s5] %v6
    %v8 = vld [vmem:[#allocation3] sm:$0x1]
    %vm9 = vcmask 130048
    %10 = vst.msk [vmem:[#allocation2] sm:$0x1] %vm9, %v8
    %v11 = vld [vmem:[#allocation3] sm:$0x1]
    %12 = vrot.lane.b32.xlu0 %v11, 112
    %v13 = vpop.permute.xlu0 %12
    %vm14 = vcmask 130048
    %s15 = scalar_lea.vmem [#allocation2], 1
    %16 = vst.msk [vmem:[%s15] sm:$0x1] %vm14, %v13
    %s18 = sshll.u32 1, 2
    %s19 = ssub.s32 %s18, 1
    %v21 = vld [vmem:[#allocation2] sm:%s19]
    %s22 = sshll.u32 1, 2
    %s23 = ssub.s32 %s22, 1
    %24 = vst [vmem:[#allocation0] sm:%s23] %v21
    %s26 = ssub.s32 32, 32
    %27 = vsyncadd [#allocation1], %s26
    %s29 = sshll.u32 [#allocation0], 4
    %s30 = int_to_ptr.vmem [resolvable:$true] %s29
    %32 = dma.vmem_to_hbm [thread:$0]  %s30, 32, %s1, [#allocation1]
    %33 = dma.done [#allocation1], 32
    %34 = vsyncpa [#allocation1], 1

// kernel: forward.1
$region0: #{forward.1}
  #allocation0 [shape = 'u32[]', space=smem, size = 0x4, offset = 0x4, fixed_abs, tag = 'smem constant byte address 0x4 - core index']
  #allocation1 [shape = 'u32[144,128]{1,0:T(1,128)}', space=vmem, size = 0x12000, scoped, tag = 'internal scratch']
  %s0 = inlined_call_operand.vmem [shape: f32[256,6], index: 0, kind: input, shape index: {}]
  %s1 = inlined_call_operand.hbm [shape: bf16[16,64,256], index: 1, kind: input, shape index: {}]
  %s2 = inlined_call_operand.vmem [shape: bf16[6,256], index: 2, kind: input, shape index: {}]
  %s3 = inlined_call_operand.vmem [shape: bf16[16,16,64], index: 3, kind: input, shape index: {}]
  %s4 = inlined_call_operand.vmem [shape: bf16[16,512], index: 4, kind: input, shape index: {}]
  %s5 = inlined_call_operand.vmem [shape: bf16[16,1,16], index: 5, kind: input, shape index: {}]
  %s6 = inlined_call_operand.vmem [shape: bf16[32,512], index: 6, kind: input, shape index: {}]
  %s7 = inlined_call_operand.vmem [shape: f32[1,32], index: 7, kind: input, shape index: {}]
  %s8 = inlined_call_operand.vmem [shape: f32[8,128], index: 8, kind: output, shape index: {}]
  %s9 = sld [smem:[#allocation0]]
  $region46: #{forward.1} parent=0
    _
  %s11 = ssub.s32 1, %s9
  %s12 = scalar_select 0, %s11, %s9
  $region1: #{forward.1} parent=0
    #allocation2 [shape = 'u8[524288]{0}', space=vmem, size = 0x80000, scoped, tag = 'input window, operand 1, single buffered']
    #allocation3 [shape = 's32[1]{0}', space=sflag, size = 0x4, scoped, tag = 'scoped memory for forward.1']
    %13 = vsyncpa [#allocation3], 0
    // Predicated region
    $region2: #{forward.1} parent=1 // pred_check
      _
    $region3: #{forward.1} parent=1 // pred_check_branch
      %15 = sbr.rel (0) target = $region5
    $region4: #{forward.1} parent=1 // pred_region
      _
    $region5: #{forward.1} parent=1 // pred_fallthru
      _
    // Predicated region
    $region6: #{forward.1} parent=1 // pred_check
      _
    $region7: #{forward.1} parent=1 // pred_check_branch
      %17 = sbr.rel (0) target = $region9
    $region8: #{forward.1} parent=1 // pred_region
      %s19 = ssub.s32 16384, 16384
      %20 = vsyncadd [#allocation3], %s19
      %s21 = sshll.u32 [#allocation2], 4
      %s22 = int_to_ptr.vmem [resolvable:$true] %s21
      %27 = dma.hbm_to_vmem [thread:$0]  %s1, 16384, %s22, [#allocation3], 128, 128, 8
    $region9: #{forward.1} parent=1 // pred_fallthru
      _
    // Predicated region
    $region10: #{forward.1} parent=1 // pred_check
      _
    $region11: #{forward.1} parent=1 // pred_check_branch
      %29 = sbr.rel (0) target = $region13
    $region12: #{forward.1} parent=1 // pred_region
      _
    $region13: #{forward.1} parent=1 // pred_fallthru
      _
    // Predicated region
    $region14: #{forward.1} parent=1 // pred_check
      _
    $region15: #{forward.1} parent=1 // pred_check_branch
      %31 = sbr.rel (0) target = $region17
    $region16: #{forward.1} parent=1 // pred_region
      _
    $region17: #{forward.1} parent=1 // pred_fallthru
      _
    // Predicated region
    $region18: #{forward.1} parent=1 // pred_check
      _
    $region19: #{forward.1} parent=1 // pred_check_branch
      %33 = sbr.rel (0) target = $region21
    $region20: #{forward.1} parent=1 // pred_region
      _
    $region21: #{forward.1} parent=1 // pred_fallthru
      _
    // Predicated region
    $region22: #{forward.1} parent=1 // pred_check
      _
    $region23: #{forward.1} parent=1 // pred_check_branch
      %35 = sbr.rel (0) target = $region25
    $region24: #{forward.1} parent=1 // pred_region
      _
    $region25: #{forward.1} parent=1 // pred_fallthru
      _
    // Predicated region
    $region26: #{forward.1} parent=1 // pred_check
      _
    $region27: #{forward.1} parent=1 // pred_check_branch
      %37 = sbr.rel (0) target = $region29
    $region28: #{forward.1} parent=1 // pred_region
      _
    $region29: #{forward.1} parent=1 // pred_fallthru
      _
    // Predicated region
    $region30: #{forward.1} parent=1 // pred_check
      _
    $region31: #{forward.1} parent=1 // pred_check_branch
      %39 = sbr.rel (0) target = $region33
    $region32: #{forward.1} parent=1 // pred_region
      _
    $region33: #{forward.1} parent=1 // pred_fallthru
      _
    // Predicated region
    $region34: #{forward.1} parent=1 // pred_check
      _
    $region35: #{forward.1} parent=1 // pred_check_branch
      %41 = sbr.rel (0) target = $region37
    $region36: #{forward.1} parent=1 // pred_region
      %42 = dma.done [#allocation3], 16384
    $region37: #{forward.1} parent=1 // pred_fallthru
      _
    %v44 = vld [vmem:[%s0] sm:$0xff]
    %v45 = vld [vmem:[%s0 + $0x8] sm:$0xff]
    %v46 = vld [vmem:[%s0 + $0x10] sm:$0xff]
    %v47 = vld [vmem:[%s0 + $0x18] sm:$0xff]
    %v48 = vld [vmem:[%s0 + $0x20] sm:$0xff]
    %v49 = vld [vmem:[%s0 + $0x28] sm:$0xff]
    %v50 = vld [vmem:[%s0 + $0x30] sm:$0xff]
    %v51 = vld [vmem:[%s0 + $0x38] sm:$0xff]
    %v52 = vld [vmem:[%s0 + $0x40] sm:$0xff]
    %v53 = vld [vmem:[%s0 + $0x48] sm:$0xff]
    %v54 = vld [vmem:[%s0 + $0x50] sm:$0xff]
    %v55 = vld [vmem:[%s0 + $0x58] sm:$0xff]
    %v56 = vld [vmem:[%s0 + $0x60] sm:$0xff]
    %v57 = vld [vmem:[%s0 + $0x68] sm:$0xff]
    %v58 = vld [vmem:[%s0 + $0x70] sm:$0xff]
    %v59 = vld [vmem:[%s0 + $0x78] sm:$0xff]
    %v60 = vld [vmem:[%s0 + $0x80] sm:$0xff]
    %v61 = vld [vmem:[%s0 + $0x88] sm:$0xff]
    %v62 = vld [vmem:[%s0 + $0x90] sm:$0xff]
    %v63 = vld [vmem:[%s0 + $0x98] sm:$0xff]
    %v64 = vld [vmem:[%s0 + $0xa0] sm:$0xff]
    %v65 = vld [vmem:[%s0 + $0xa8] sm:$0xff]
    %v66 = vld [vmem:[%s0 + $0xb0] sm:$0xff]
    %v67 = vld [vmem:[%s0 + $0xb8] sm:$0xff]
    %v68 = vld [vmem:[%s0 + $0xc0] sm:$0xff]
    %v69 = vld [vmem:[%s0 + $0xc8] sm:$0xff]
    %v70 = vld [vmem:[%s0 + $0xd0] sm:$0xff]
    %v71 = vld [vmem:[%s0 + $0xd8] sm:$0xff]
    %v72 = vld [vmem:[%s0 + $0xe0] sm:$0xff]
    %v73 = vld [vmem:[%s0 + $0xe8] sm:$0xff]
    %v74 = vld [vmem:[%s0 + $0xf0] sm:$0xff]
    %v75 = vld [vmem:[%s0 + $0xf8] sm:$0xff]
    %v76 = vpack.c.bf16 %v45, %v44
    %v77 = vpack.c.bf16 %v47, %v46
    %v78 = vpack.c.bf16 %v49, %v48
    %v79 = vpack.c.bf16 %v51, %v50
    %v80 = vpack.c.bf16 %v53, %v52
    %v81 = vpack.c.bf16 %v55, %v54
    %v82 = vpack.c.bf16 %v57, %v56
    %v83 = vpack.c.bf16 %v59, %v58
    %v84 = vpack.c.bf16 %v61, %v60
    %v85 = vpack.c.bf16 %v63, %v62
    %v86 = vpack.c.bf16 %v65, %v64
    %v87 = vpack.c.bf16 %v67, %v66
    %v88 = vpack.c.bf16 %v69, %v68
    %v89 = vpack.c.bf16 %v71, %v70
    %v90 = vpack.c.bf16 %v73, %v72
    %v91 = vpack.c.bf16 %v75, %v74
    %v92 = vld [vmem:[%s2] sm:$0x77]
    %v94 = vunpack.c.l.b16 %v92
    %v95 = vunpack.c.h.b16 %v92
    %v96 = vpack.c.b16 %v94, %v94
    %v97 = vpack.c.b16 %v95, %v95
    %vm98 = vcmask 48128
    %v100 = vsel %vm98, %v76, 0
    %v103 = vsel %vm98, %v77, 0
    %v106 = vsel %vm98, %v78, 0
    %v109 = vsel %vm98, %v79, 0
    %v112 = vsel %vm98, %v80, 0
    %v115 = vsel %vm98, %v81, 0
    %v118 = vsel %vm98, %v82, 0
    %v121 = vsel %vm98, %v83, 0
    %v124 = vsel %vm98, %v84, 0
    %v127 = vsel %vm98, %v85, 0
    %v130 = vsel %vm98, %v86, 0
    %v133 = vsel %vm98, %v87, 0
    %v136 = vsel %vm98, %v88, 0
    %v139 = vsel %vm98, %v89, 0
    %v142 = vsel %vm98, %v90, 0
    %v145 = vsel %vm98, %v91, 0
    %vm147 = vcmask 1042432
    %v149 = vsel %vm147, %v96, 0
    %v152 = vsel %vm147, %v97, 0
    %154 = vmatprep.subr.bf16.mxu0 0
    %155 = vmatpush1.bf16.msra.mxu0 0
    %156 = vmatprep.subr.bf16.mxu0 0
    %157 = vmatpush1.bf16.msra.mxu0 0
    %158 = vmatprep.subr.bf16.mxu0 0
    %159 = vmatpush1.bf16.msra.mxu0 0
    %160 = vmatprep.subr.bf16.mxu0 0
    %161 = vmatpush1.bf16.msra.mxu0 0
    %162 = vmatprep.subr.bf16.mxu0 0
    %163 = vmatpush1.bf16.msra.mxu0 0
    %164 = vmatprep.subr.bf16.mxu0 0
    %165 = vmatpush1.bf16.msra.mxu0 0
    %166 = vmatprep.subr.bf16.mxu0 0
    %167 = vmatpush1.bf16.msra.mxu0 0
    %168 = vmatprep.subr.bf16.mxu0 %v152
    %169 = vmatpush1.bf16.msra.mxu0 %v149
    %170 = vmatprep.subr.bf16.mxu0 0
    %171 = vmatpush2.bf16.msra.mxu0 0
    %172 = vmatprep.subr.bf16.mxu0 0
    %173 = vmatpush2.bf16.msra.mxu0 0
    %174 = vmatprep.subr.bf16.mxu0 0
    %175 = vmatpush2.bf16.msra.mxu0 0
    %176 = vmatprep.subr.bf16.mxu0 0
    %177 = vmatpush2.bf16.msra.mxu0 0
    %178 = vmatprep.subr.bf16.mxu0 0
    %179 = vmatpush2.bf16.msra.mxu0 0
    %180 = vmatprep.subr.bf16.mxu0 0
    %181 = vmatpush2.bf16.msra.mxu0 0
    %182 = vmatprep.subr.bf16.mxu0 0
    %183 = vmatpush2.bf16.msra.mxu0 0
    %184 = vmatprep.subr.bf16.mxu0 0
    %185 = vmatpush2.bf16.msra.mxu0 0
    %186 = vmatprep.mubr.bf16.mxu0 0
    %187 = vmatmul.mubr.bf16.gmra.mxu0 %v100
    %v188 = vpop.f32.mrf.mxu0
    %v189 = vadd.f32 0.0, %v188
    %v190 = vpop.f32.mrf.mxu0
    %v191 = vadd.f32 0.0, %v190
    %v192 = vpop.f32.mrf.mxu0
    %v193 = vadd.f32 0.0, %v192
    %v194 = vpop.f32.mrf.mxu0
    %v195 = vadd.f32 0.0, %v194
    %196 = vmatprep.mubr.bf16.mxu0 0
    %197 = vmatmul.mubr.bf16.gmra.mxu0 %v103
    %v198 = vpop.f32.mrf.mxu0
    %v199 = vadd.f32 0.0, %v198
    %v200 = vpop.f32.mrf.mxu0
    %v201 = vadd.f32 0.0, %v200
    %v202 = vpop.f32.mrf.mxu0
    %v203 = vadd.f32 0.0, %v202
    %v204 = vpop.f32.mrf.mxu0
    %v205 = vadd.f32 0.0, %v204
    %206 = vmatprep.mubr.bf16.mxu0 0
    %207 = vmatmul.mubr.bf16.gmra.mxu0 %v106
    %v208 = vpop.f32.mrf.mxu0
    %v209 = vadd.f32 0.0, %v208
    %v210 = vpop.f32.mrf.mxu0
    %v211 = vadd.f32 0.0, %v210
    %v212 = vpop.f32.mrf.mxu0
    %v213 = vadd.f32 0.0, %v212
    %v214 = vpop.f32.mrf.mxu0
    %v215 = vadd.f32 0.0, %v214
    %216 = vmatprep.mubr.bf16.mxu0 0
    %217 = vmatmul.mubr.bf16.gmra.mxu0 %v109
    %v218 = vpop.f32.mrf.mxu0
    %v219 = vadd.f32 0.0, %v218
    %v220 = vpop.f32.mrf.mxu0
    %v221 = vadd.f32 0.0, %v220
    %v222 = vpop.f32.mrf.mxu0
    %v223 = vadd.f32 0.0, %v222
    %v224 = vpop.f32.mrf.mxu0
    %v225 = vadd.f32 0.0, %v224
    %226 = vmatprep.mubr.bf16.mxu0 0
    %227 = vmatmul.mubr.bf16.gmra.mxu0 %v112
    %v228 = vpop.f32.mrf.mxu0
    %v229 = vadd.f32 0.0, %v228
    %v230 = vpop.f32.mrf.mxu0
    %v231 = vadd.f32 0.0, %v230
    %v232 = vpop.f32.mrf.mxu0
    %v233 = vadd.f32 0.0, %v232
    %v234 = vpop.f32.mrf.mxu0
    %v235 = vadd.f32 0.0, %v234
    %236 = vmatprep.mubr.bf16.mxu0 0
    %237 = vmatmul.mubr.bf16.gmra.mxu0 %v115
    %v238 = vpop.f32.mrf.mxu0
    %v239 = vadd.f32 0.0, %v238
    %v240 = vpop.f32.mrf.mxu0
    %v241 = vadd.f32 0.0, %v240
    %v242 = vpop.f32.mrf.mxu0
    %v243 = vadd.f32 0.0, %v242
    %v244 = vpop.f32.mrf.mxu0
    %v245 = vadd.f32 0.0, %v244
    %246 = vmatprep.mubr.bf16.mxu0 0
    %247 = vmatmul.mubr.bf16.gmra.mxu0 %v118
    %v248 = vpop.f32.mrf.mxu0
    %v249 = vadd.f32 0.0, %v248
    %v250 = vpop.f32.mrf.mxu0
    %v251 = vadd.f32 0.0, %v250
    %v252 = vpop.f32.mrf.mxu0
    %v253 = vadd.f32 0.0, %v252
    %v254 = vpop.f32.mrf.mxu0
    %v255 = vadd.f32 0.0, %v254
    %256 = vmatprep.mubr.bf16.mxu0 0
    %257 = vmatmul.mubr.bf16.gmra.mxu0 %v121
    %v258 = vpop.f32.mrf.mxu0
    %v259 = vadd.f32 0.0, %v258
    %v260 = vpop.f32.mrf.mxu0
    %v261 = vadd.f32 0.0, %v260
    %v262 = vpop.f32.mrf.mxu0
    %v263 = vadd.f32 0.0, %v262
    %v264 = vpop.f32.mrf.mxu0
    %v265 = vadd.f32 0.0, %v264
    %266 = vmatprep.mubr.bf16.mxu0 0
    %267 = vmatmul.mubr.bf16.gmra.mxu0 %v124
    %v268 = vpop.f32.mrf.mxu0
    %v269 = vadd.f32 0.0, %v268
    %v270 = vpop.f32.mrf.mxu0
    %v271 = vadd.f32 0.0, %v270
    %v272 = vpop.f32.mrf.mxu0
    %v273 = vadd.f32 0.0, %v272
    %v274 = vpop.f32.mrf.mxu0
    %v275 = vadd.f32 0.0, %v274
    %276 = vmatprep.mubr.bf16.mxu0 0
    %277 = vmatmul.mubr.bf16.gmra.mxu0 %v127
    %v278 = vpop.f32.mrf.mxu0
    %v279 = vadd.f32 0.0, %v278
    %v280 = vpop.f32.mrf.mxu0
    %v281 = vadd.f32 0.0, %v280
    %v282 = vpop.f32.mrf.mxu0
    %v283 = vadd.f32 0.0, %v282
    %v284 = vpop.f32.mrf.mxu0
    %v285 = vadd.f32 0.0, %v284
    %286 = vmatprep.mubr.bf16.mxu0 0
    %287 = vmatmul.mubr.bf16.gmra.mxu0 %v130
    %v288 = vpop.f32.mrf.mxu0
    %v289 = vadd.f32 0.0, %v288
    %v290 = vpop.f32.mrf.mxu0
    %v291 = vadd.f32 0.0, %v290
    %v292 = vpop.f32.mrf.mxu0
    %v293 = vadd.f32 0.0, %v292
    %v294 = vpop.f32.mrf.mxu0
    %v295 = vadd.f32 0.0, %v294
    %296 = vmatprep.mubr.bf16.mxu0 0
    %297 = vmatmul.mubr.bf16.gmra.mxu0 %v133
    %v298 = vpop.f32.mrf.mxu0
    %v299 = vadd.f32 0.0, %v298
    %v300 = vpop.f32.mrf.mxu0
    %v301 = vadd.f32 0.0, %v300
    %v302 = vpop.f32.mrf.mxu0
    %v303 = vadd.f32 0.0, %v302
    %v304 = vpop.f32.mrf.mxu0
    %v305 = vadd.f32 0.0, %v304
    %306 = vmatprep.mubr.bf16.mxu0 0
    %307 = vmatmul.mubr.bf16.gmra.mxu0 %v136
    %v308 = vpop.f32.mrf.mxu0
    %v309 = vadd.f32 0.0, %v308
    %v310 = vpop.f32.mrf.mxu0
    %v311 = vadd.f32 0.0, %v310
    %v312 = vpop.f32.mrf.mxu0
    %v313 = vadd.f32 0.0, %v312
    %v314 = vpop.f32.mrf.mxu0
    %v315 = vadd.f32 0.0, %v314
    %316 = vmatprep.mubr.bf16.mxu0 0
    %317 = vmatmul.mubr.bf16.gmra.mxu0 %v139
    %v318 = vpop.f32.mrf.mxu0
    %v319 = vadd.f32 0.0, %v318
    %v320 = vpop.f32.mrf.mxu0
    %v321 = vadd.f32 0.0, %v320
    %v322 = vpop.f32.mrf.mxu0
    %v323 = vadd.f32 0.0, %v322
    %v324 = vpop.f32.mrf.mxu0
    %v325 = vadd.f32 0.0, %v324
    %326 = vmatprep.mubr.bf16.mxu0 0
    %327 = vmatmul.mubr.bf16.gmra.mxu0 %v142
    %v328 = vpop.f32.mrf.mxu0
    %v329 = vadd.f32 0.0, %v328
    %v330 = vpop.f32.mrf.mxu0
    %v331 = vadd.f32 0.0, %v330
    %v332 = vpop.f32.mrf.mxu0
    %v333 = vadd.f32 0.0, %v332
    %v334 = vpop.f32.mrf.mxu0
    %v335 = vadd.f32 0.0, %v334
    %336 = vmatprep.mubr.bf16.mxu0 0
    %337 = vmatmul.mubr.bf16.gmra.mxu0 %v145
    %v338 = vpop.f32.mrf.mxu0
    %v339 = vadd.f32 0.0, %v338
    %v340 = vpop.f32.mrf.mxu0
    %v341 = vadd.f32 0.0, %v340
    %v342 = vpop.f32.mrf.mxu0
    %v343 = vadd.f32 0.0, %v342
    %v344 = vpop.f32.mrf.mxu0
    %v345 = vadd.f32 0.0, %v344
    %346 = vdwg.mxu0
    %v347 = vpack.c.bf16 %v193, %v189
    %v348 = vpack.c.bf16 %v195, %v191
    %v349 = vpack.c.bf16 %v203, %v199
    %v350 = vpack.c.bf16 %v205, %v201
    %v351 = vpack.c.bf16 %v213, %v209
    %v352 = vpack.c.bf16 %v215, %v211
    %v353 = vpack.c.bf16 %v223, %v219
    %v354 = vpack.c.bf16 %v225, %v221
    %v355 = vpack.c.bf16 %v233, %v229
    %v356 = vpack.c.bf16 %v235, %v231
    %v357 = vpack.c.bf16 %v243, %v239
    %v358 = vpack.c.bf16 %v245, %v241
    %v359 = vpack.c.bf16 %v253, %v249
    %v360 = vpack.c.bf16 %v255, %v251
    %v361 = vpack.c.bf16 %v263, %v259
    %v362 = vpack.c.bf16 %v265, %v261
    %v363 = vpack.c.bf16 %v273, %v269
    %v364 = vpack.c.bf16 %v275, %v271
    %v365 = vpack.c.bf16 %v283, %v279
    %v366 = vpack.c.bf16 %v285, %v281
    %v367 = vpack.c.bf16 %v293, %v289
    %v368 = vpack.c.bf16 %v295, %v291
    %v369 = vpack.c.bf16 %v303, %v299
    %v370 = vpack.c.bf16 %v305, %v301
    %v371 = vpack.c.bf16 %v313, %v309
    %v372 = vpack.c.bf16 %v315, %v311
    %v373 = vpack.c.bf16 %v323, %v319
    %v374 = vpack.c.bf16 %v325, %v321
    %v375 = vpack.c.bf16 %v333, %v329
    %v376 = vpack.c.bf16 %v335, %v331
    %v377 = vpack.c.bf16 %v343, %v339
    %v378 = vpack.c.bf16 %v345, %v341
    %v379 = vld [vmem:[#allocation2] sm:$0xff]
    %v380 = vld [vmem:[#allocation2 + $0x8] sm:$0xff]
    %v381 = vld [vmem:[#allocation2 + $0x10] sm:$0xff]
    %v382 = vld [vmem:[#allocation2 + $0x18] sm:$0xff]
    %v383 = vld [vmem:[#allocation2 + $0x20] sm:$0xff]
    %v384 = vld [vmem:[#allocation2 + $0x28] sm:$0xff]
    %v385 = vld [vmem:[#allocation2 + $0x30] sm:$0xff]
    %v386 = vld [vmem:[#allocation2 + $0x38] sm:$0xff]
    %s387 = scalar_lea.vmem [#allocation2], 64
    %v388 = vld [vmem:[%s387] sm:$0xff]
    %v389 = vld [vmem:[%s387 + $0x8] sm:$0xff]
    %v390 = vld [vmem:[%s387 + $0x10] sm:$0xff]
    %v391 = vld [vmem:[%s387 + $0x18] sm:$0xff]
    %v392 = vld [vmem:[%s387 + $0x20] sm:$0xff]
    %v393 = vld [vmem:[%s387 + $0x28] sm:$0xff]
    %v394 = vld [vmem:[%s387 + $0x30] sm:$0xff]
    %v395 = vld [vmem:[%s387 + $0x38] sm:$0xff]
    %v404 = vunpack.c.l.b16 %v388
    %v405 = vunpack.c.h.b16 %v388
    %v406 = vunpack.c.l.b16 %v389
    %v407 = vunpack.c.h.b16 %v389
    %v408 = vunpack.c.l.b16 %v390
    %v409 = vunpack.c.h.b16 %v390
    %v410 = vunpack.c.l.b16 %v391
    %v411 = vunpack.c.h.b16 %v391
    %v412 = vunpack.c.l.b16 %v392
    %v413 = vunpack.c.h.b16 %v392
    %v414 = vunpack.c.l.b16 %v393
    %v415 = vunpack.c.h.b16 %v393
    %v416 = vunpack.c.l.b16 %v394
    %v417 = vunpack.c.h.b16 %v394
    %v418 = vunpack.c.l.b16 %v395
    %v419 = vunpack.c.h.b16 %v395
    %v420 = vpack.c.b16 %v406, %v404
    %v421 = vpack.c.b16 %v407, %v405
    %v422 = vpack.c.b16 %v410, %v408
    %v423 = vpack.c.b16 %v411, %v409
    %v424 = vpack.c.b16 %v414, %v412
    %v425 = vpack.c.b16 %v415, %v413
    %v426 = vpack.c.b16 %v418, %v416
    %v427 = vpack.c.b16 %v419, %v417
    %452 = vrot.lane.b32.xlu0 %v347, 112
    %v453 = vpop.permute.xlu0 %452
    %454 = vrot.lane.b32.xlu0 %v349, 112
    %v455 = vpop.permute.xlu0 %454
    %456 = vrot.lane.b32.xlu0 %v351, 112
    %v457 = vpop.permute.xlu0 %456
    %458 = vrot.lane.b32.xlu0 %v353, 112
    %v459 = vpop.permute.xlu0 %458
    %460 = vrot.lane.b32.xlu0 %v355, 112
    %v461 = vpop.permute.xlu0 %460
    %462 = vrot.lane.b32.xlu0 %v357, 112
    %v463 = vpop.permute.xlu0 %462
    %464 = vrot.lane.b32.xlu0 %v359, 112
    %v465 = vpop.permute.xlu0 %464
    %466 = vrot.lane.b32.xlu0 %v361, 112
    %v467 = vpop.permute.xlu0 %466
    %468 = vrot.lane.b32.xlu0 %v363, 112
    %v469 = vpop.permute.xlu0 %468
    %470 = vrot.lane.b32.xlu0 %v365, 112
    %v471 = vpop.permute.xlu0 %470
    %472 = vrot.lane.b32.xlu0 %v367, 112
    %v473 = vpop.permute.xlu0 %472
    %474 = vrot.lane.b32.xlu0 %v369, 112
    %v475 = vpop.permute.xlu0 %474
    %476 = vrot.lane.b32.xlu0 %v371, 112
    %v477 = vpop.permute.xlu0 %476
    %478 = vrot.lane.b32.xlu0 %v373, 112
    %v479 = vpop.permute.xlu0 %478
    %480 = vrot.lane.b32.xlu0 %v375, 112
    %v481 = vpop.permute.xlu0 %480
    %482 = vrot.lane.b32.xlu0 %v377, 112
    %v483 = vpop.permute.xlu0 %482
    %500 = vmatprep.subr.bf16.mxu0 0
    %501 = vmatpush1.bf16.msra.mxu0 %v467
    %502 = vmatprep.subr.bf16.mxu0 0
    %503 = vmatpush1.bf16.msra.mxu0 %v465
    %504 = vmatprep.subr.bf16.mxu0 0
    %505 = vmatpush1.bf16.msra.mxu0 %v463
    %506 = vmatprep.subr.bf16.mxu0 0
    %507 = vmatpush1.bf16.msra.mxu0 %v461
    %508 = vmatprep.subr.bf16.mxu0 0
    %509 = vmatpush1.bf16.msra.mxu0 %v459
    %510 = vmatprep.subr.bf16.mxu0 0
    %511 = vmatpush1.bf16.msra.mxu0 %v457
    %512 = vmatprep.subr.bf16.mxu0 0
    %513 = vmatpush1.bf16.msra.mxu0 %v455
    %514 = vmatprep.subr.bf16.mxu0 0
    %515 = vmatpush1.bf16.msra.mxu0 %v453
    %516 = vmatprep.subr.bf16.mxu0 0
    %517 = vmatpush2.bf16.msra.mxu0 %v483
    %518 = vmatprep.subr.bf16.mxu0 0
    %519 = vmatpush2.bf16.msra.mxu0 %v481
    %520 = vmatprep.subr.bf16.mxu0 0
    %521 = vmatpush2.bf16.msra.mxu0 %v479
    %522 = vmatprep.subr.bf16.mxu0 0
    %523 = vmatpush2.bf16.msra.mxu0 %v477
    %524 = vmatprep.subr.bf16.mxu0 0
    %525 = vmatpush2.bf16.msra.mxu0 %v475
    %526 = vmatprep.subr.bf16.mxu0 0
    %527 = vmatpush2.bf16.msra.mxu0 %v473
    %528 = vmatprep.subr.bf16.mxu0 0
    %529 = vmatpush2.bf16.msra.mxu0 %v471
    %530 = vmatprep.subr.bf16.mxu0 0
    %531 = vmatpush2.bf16.msra.mxu0 %v469
    %532 = vmatprep.mubr.bf16.mxu0 %v421
    %533 = vmatmul.mubr.bf16.gmra.mxu0 %v420
    %v534 = vpop.f32.mrf.mxu0
    %v535 = vadd.f32 0.0, %v534
    %v536 = vpop.f32.mrf.mxu0
    %v537 = vpop.f32.mrf.mxu0
    %v538 = vadd.f32 0.0, %v537
    %v539 = vpop.f32.mrf.mxu0
    %540 = vmatprep.mubr.bf16.mxu0 %v423
    %541 = vmatmul.mubr.bf16.gmra.mxu0 %v422
    %v542 = vpop.f32.mrf.mxu0
    %v543 = vadd.f32 0.0, %v542
    %v544 = vpop.f32.mrf.mxu0
    %v545 = vpop.f32.mrf.mxu0
    %v546 = vadd.f32 0.0, %v545
    %v547 = vpop.f32.mrf.mxu0
    %548 = vmatprep.mubr.bf16.mxu0 %v425
    %549 = vmatmul.mubr.bf16.gmra.mxu0 %v424
    %v550 = vpop.f32.mrf.mxu0
    %v551 = vadd.f32 0.0, %v550
    %v552 = vpop.f32.mrf.mxu0
    %v553 = vpop.f32.mrf.mxu0
    %v554 = vadd.f32 0.0, %v553
    %v555 = vpop.f32.mrf.mxu0
    %556 = vmatprep.mubr.bf16.mxu0 %v427
    %557 = vmatmul.mubr.bf16.gmra.mxu0 %v426
    %v558 = vpop.f32.mrf.mxu0
    %v559 = vadd.f32 0.0, %v558
    %v560 = vpop.f32.mrf.mxu0
    %v561 = vpop.f32.mrf.mxu0
    %v562 = vadd.f32 0.0, %v561
    %v563 = vpop.f32.mrf.mxu0
    %564 = vdwg.mxu0
    %v573 = vunpack.c.l.b16 %v379
    %v574 = vunpack.c.h.b16 %v379
    %v575 = vunpack.c.l.b16 %v380
    %v576 = vunpack.c.h.b16 %v380
    %v577 = vunpack.c.l.b16 %v381
    %v578 = vunpack.c.h.b16 %v381
    %v579 = vunpack.c.l.b16 %v382
    %v580 = vunpack.c.h.b16 %v382
    %v581 = vunpack.c.l.b16 %v383
    %v582 = vunpack.c.h.b16 %v383
    %v583 = vunpack.c.l.b16 %v384
    %v584 = vunpack.c.h.b16 %v384
    %v585 = vunpack.c.l.b16 %v385
    %v586 = vunpack.c.h.b16 %v385
    %v587 = vunpack.c.l.b16 %v386
    %v588 = vunpack.c.h.b16 %v386
    %v589 = vpack.c.b16 %v575, %v573
    %v590 = vpack.c.b16 %v576, %v574
    %v591 = vpack.c.b16 %v579, %v577
    %v592 = vpack.c.b16 %v580, %v578
    %v593 = vpack.c.b16 %v583, %v581
    %v594 = vpack.c.b16 %v584, %v582
    %v595 = vpack.c.b16 %v587, %v585
    %v596 = vpack.c.b16 %v588, %v586
    %605 = vmatprep.subr.bf16.mxu0 0
    %606 = vmatpush1.bf16.msra.mxu0 %v361
    %607 = vmatprep.subr.bf16.mxu0 0
    %608 = vmatpush1.bf16.msra.mxu0 %v359
    %609 = vmatprep.subr.bf16.mxu0 0
    %610 = vmatpush1.bf16.msra.mxu0 %v357
    %611 = vmatprep.subr.bf16.mxu0 0
    %612 = vmatpush1.bf16.msra.mxu0 %v355
    %613 = vmatprep.subr.bf16.mxu0 0
    %614 = vmatpush1.bf16.msra.mxu0 %v353
    %615 = vmatprep.subr.bf16.mxu0 0
    %616 = vmatpush1.bf16.msra.mxu0 %v351
    %617 = vmatprep.subr.bf16.mxu0 0
    %618 = vmatpush1.bf16.msra.mxu0 %v349
    %619 = vmatprep.subr.bf16.mxu0 0
    %620 = vmatpush1.bf16.msra.mxu0 %v347
    %621 = vmatprep.subr.bf16.mxu0 0
    %622 = vmatpush2.bf16.msra.mxu0 %v377
    %623 = vmatprep.subr.bf16.mxu0 0
    %624 = vmatpush2.bf16.msra.mxu0 %v375
    %625 = vmatprep.subr.bf16.mxu0 0
    %626 = vmatpush2.bf16.msra.mxu0 %v373
    %627 = vmatprep.subr.bf16.mxu0 0
    %628 = vmatpush2.bf16.msra.mxu0 %v371
    %629 = vmatprep.subr.bf16.mxu0 0
    %630 = vmatpush2.bf16.msra.mxu0 %v369
    %631 = vmatprep.subr.bf16.mxu0 0
    %632 = vmatpush2.bf16.msra.mxu0 %v367
    %633 = vmatprep.subr.bf16.mxu0 0
    %634 = vmatpush2.bf16.msra.mxu0 %v365
    %635 = vmatprep.subr.bf16.mxu0 0
    %636 = vmatpush2.bf16.msra.mxu0 %v363
    %637 = vmatprep.mubr.bf16.mxu0 %v590
    %638 = vmatmul.mubr.bf16.gmra.mxu0 %v589
    %v639 = vpop.f32.mrf.mxu0
    %v640 = vadd.f32 %v535, %v639
    %v641 = vpop.f32.mrf.mxu0
    %v642 = vpop.f32.mrf.mxu0
    %v643 = vadd.f32 %v538, %v642
    %v644 = vpop.f32.mrf.mxu0
    %645 = vmatprep.mubr.bf16.mxu0 %v592
    %646 = vmatmul.mubr.bf16.gmra.mxu0 %v591
    %v647 = vpop.f32.mrf.mxu0
    %v648 = vadd.f32 %v543, %v647
    %v649 = vpop.f32.mrf.mxu0
    %v650 = vpop.f32.mrf.mxu0
    %v651 = vadd.f32 %v546, %v650
    %v652 = vpop.f32.mrf.mxu0
    %653 = vmatprep.mubr.bf16.mxu0 %v594
    %654 = vmatmul.mubr.bf16.gmra.mxu0 %v593
    %v655 = vpop.f32.mrf.mxu0
    %v656 = vadd.f32 %v551, %v655
    %v657 = vpop.f32.mrf.mxu0
    %v658 = vpop.f32.mrf.mxu0
    %v659 = vadd.f32 %v554, %v658
    %v660 = vpop.f32.mrf.mxu0
    %661 = vmatprep.mubr.bf16.mxu0 %v596
    %662 = vmatmul.mubr.bf16.gmra.mxu0 %v595
    %v663 = vpop.f32.mrf.mxu0
    %v664 = vadd.f32 %v559, %v663
    %v665 = vpop.f32.mrf.mxu0
    %v666 = vpop.f32.mrf.mxu0
    %v667 = vadd.f32 %v562, %v666
    %v668 = vpop.f32.mrf.mxu0
    %669 = vdwg.mxu0
    %s670 = scalar_lea.vmem [#allocation2], 128
    %v671 = vld [vmem:[%s670] sm:$0xff]
    %v672 = vld [vmem:[%s670 + $0x8] sm:$0xff]
    %v673 = vld [vmem:[%s670 + $0x10] sm:$0xff]
    %v674 = vld [vmem:[%s670 + $0x18] sm:$0xff]
    %v675 = vld [vmem:[%s670 + $0x20] sm:$0xff]
    %v676 = vld [vmem:[%s670 + $0x28] sm:$0xff]
    %v677 = vld [vmem:[%s670 + $0x30] sm:$0xff]
    %v678 = vld [vmem:[%s670 + $0x38] sm:$0xff]
    %v687 = vunpack.c.l.b16 %v671
    %v688 = vunpack.c.h.b16 %v671
    %v689 = vunpack.c.l.b16 %v672
    %v690 = vunpack.c.h.b16 %v672
    %v691 = vunpack.c.l.b16 %v673
    %v692 = vunpack.c.h.b16 %v673
    %v693 = vunpack.c.l.b16 %v674
    %v694 = vunpack.c.h.b16 %v674
    %v695 = vunpack.c.l.b16 %v675
    %v696 = vunpack.c.h.b16 %v675
    %v697 = vunpack.c.l.b16 %v676
    %v698 = vunpack.c.h.b16 %v676
    %v699 = vunpack.c.l.b16 %v677
    %v700 = vunpack.c.h.b16 %v677
    %v701 = vunpack.c.l.b16 %v678
    %v702 = vunpack.c.h.b16 %v678
    %v703 = vpack.c.b16 %v689, %v687
    %v704 = vpack.c.b16 %v690, %v688
    %v705 = vpack.c.b16 %v693, %v691
    %v706 = vpack.c.b16 %v694, %v692
    %v707 = vpack.c.b16 %v697, %v695
    %v708 = vpack.c.b16 %v698, %v696
    %v709 = vpack.c.b16 %v701, %v699
    %v710 = vpack.c.b16 %v702, %v700
    %719 = vrot.lane.b32.xlu0 %v347, 96
    %v720 = vpop.permute.xlu0 %719
    %721 = vrot.lane.b32.xlu0 %v349, 96
    %v722 = vpop.permute.xlu0 %721
    %723 = vrot.lane.b32.xlu0 %v351, 96
    %v724 = vpop.permute.xlu0 %723
    %725 = vrot.lane.b32.xlu0 %v353, 96
    %v726 = vpop.permute.xlu0 %725
    %727 = vrot.lane.b32.xlu0 %v355, 96
    %v728 = vpop.permute.xlu0 %727
    %729 = vrot.lane.b32.xlu0 %v357, 96
    %v730 = vpop.permute.xlu0 %729
    %731 = vrot.lane.b32.xlu0 %v359, 96
    %v732 = vpop.permute.xlu0 %731
    %733 = vrot.lane.b32.xlu0 %v361, 96
    %v734 = vpop.permute.xlu0 %733
    %735 = vrot.lane.b32.xlu0 %v363, 96
    %v736 = vpop.permute.xlu0 %735
    %737 = vrot.lane.b32.xlu0 %v365, 96
    %v738 = vpop.permute.xlu0 %737
    %739 = vrot.lane.b32.xlu0 %v367, 96
    %v740 = vpop.permute.xlu0 %739
    %741 = vrot.lane.b32.xlu0 %v369, 96
    %v742 = vpop.permute.xlu0 %741
    %743 = vrot.lane.b32.xlu0 %v371, 96
    %v744 = vpop.permute.xlu0 %743
    %745 = vrot.lane.b32.xlu0 %v373, 96
    %v746 = vpop.permute.xlu0 %745
    %747 = vrot.lane.b32.xlu0 %v375, 96
    %v748 = vpop.permute.xlu0 %747
    %749 = vrot.lane.b32.xlu0 %v377, 96
    %v750 = vpop.permute.xlu0 %749
    %767 = vmatprep.subr.bf16.mxu0 0
    %768 = vmatpush1.bf16.msra.mxu0 %v734
    %769 = vmatprep.subr.bf16.mxu0 0
    %770 = vmatpush1.bf16.msra.mxu0 %v732
    %771 = vmatprep.subr.bf16.mxu0 0
    %772 = vmatpush1.bf16.msra.mxu0 %v730
    %773 = vmatprep.subr.bf16.mxu0 0
    %774 = vmatpush1.bf16.msra.mxu0 %v728
    %775 = vmatprep.subr.bf16.mxu0 0
    %776 = vmatpush1.bf16.msra.mxu0 %v726
    %777 = vmatprep.subr.bf16.mxu0 0
    %778 = vmatpush1.bf16.msra.mxu0 %v724
    %779 = vmatprep.subr.bf16.mxu0 0
    %780 = vmatpush1.bf16.msra.mxu0 %v722
    %781 = vmatprep.subr.bf16.mxu0 0
    %782 = vmatpush1.bf16.msra.mxu0 %v720
    %783 = vmatprep.subr.bf16.mxu0 0
    %784 = vmatpush2.bf16.msra.mxu0 %v750
    %785 = vmatprep.subr.bf16.mxu0 0
    %786 = vmatpush2.bf16.msra.mxu0 %v748
    %787 = vmatprep.subr.bf16.mxu0 0
    %788 = vmatpush2.bf16.msra.mxu0 %v746
    %789 = vmatprep.subr.bf16.mxu0 0
    %790 = vmatpush2.bf16.msra.mxu0 %v744
    %791 = vmatprep.subr.bf16.mxu0 0
    %792 = vmatpush2.bf16.msra.mxu0 %v742
    %793 = vmatprep.subr.bf16.mxu0 0
    %794 = vmatpush2.bf16.msra.mxu0 %v740
    %795 = vmatprep.subr.bf16.mxu0 0
    %796 = vmatpush2.bf16.msra.mxu0 %v738
    %797 = vmatprep.subr.bf16.mxu0 0
    %798 = vmatpush2.bf16.msra.mxu0 %v736
    %799 = vmatprep.mubr.bf16.mxu0 %v704
    %800 = vmatmul.mubr.bf16.gmra.mxu0 %v703
    %v801 = vpop.f32.mrf.mxu0
    %v802 = vadd.f32 0.0, %v801
    %v803 = vpop.f32.mrf.mxu0
    %v804 = vpop.f32.mrf.mxu0
    %v805 = vadd.f32 0.0, %v804
    %v806 = vpop.f32.mrf.mxu0
    %807 = vmatprep.mubr.bf16.mxu0 %v706
    %808 = vmatmul.mubr.bf16.gmra.mxu0 %v705
    %v809 = vpop.f32.mrf.mxu0
    %v810 = vadd.f32 0.0, %v809
    %v811 = vpop.f32.mrf.mxu0
    %v812 = vpop.f32.mrf.mxu0
    %v813 = vadd.f32 0.0, %v812
    %v814 = vpop.f32.mrf.mxu0
    %815 = vmatprep.mubr.bf16.mxu0 %v708
    %816 = vmatmul.mubr.bf16.gmra.mxu0 %v707
    %v817 = vpop.f32.mrf.mxu0
    %v818 = vadd.f32 0.0, %v817
    %v819 = vpop.f32.mrf.mxu0
    %v820 = vpop.f32.mrf.mxu0
    %v821 = vadd.f32 0.0, %v820
    %v822 = vpop.f32.mrf.mxu0
    %823 = vmatprep.mubr.bf16.mxu0 %v710
    %824 = vmatmul.mubr.bf16.gmra.mxu0 %v709
    %v825 = vpop.f32.mrf.mxu0
    %v826 = vadd.f32 0.0, %v825
    %v827 = vpop.f32.mrf.mxu0
    %v828 = vpop.f32.mrf.mxu0
    %v829 = vadd.f32 0.0, %v828
    %v830 = vpop.f32.mrf.mxu0
    %831 = vdwg.mxu0
    %v832 = vadd.f32 %v640, %v802
    %v833 = vadd.f32 %v643, %v805
    %v834 = vadd.f32 %v648, %v810
    %v835 = vadd.f32 %v651, %v813
    %v836 = vadd.f32 %v656, %v818
    %v837 = vadd.f32 %v659, %v821
    %v838 = vadd.f32 %v664, %v826
    %v839 = vadd.f32 %v667, %v829
    %s840 = scalar_lea.vmem [#allocation2], 192
    %v841 = vld [vmem:[%s840] sm:$0xff]
    %v842 = vld [vmem:[%s840 + $0x8] sm:$0xff]
    %v843 = vld [vmem:[%s840 + $0x10] sm:$0xff]
    %v844 = vld [vmem:[%s840 + $0x18] sm:$0xff]
    %v845 = vld [vmem:[%s840 + $0x20] sm:$0xff]
    %v846 = vld [vmem:[%s840 + $0x28] sm:$0xff]
    %v847 = vld [vmem:[%s840 + $0x30] sm:$0xff]
    %v848 = vld [vmem:[%s840 + $0x38] sm:$0xff]
    %v857 = vunpack.c.l.b16 %v841
    %v858 = vunpack.c.h.b16 %v841
    %v859 = vunpack.c.l.b16 %v842
    %v860 = vunpack.c.h.b16 %v842
    %v861 = vunpack.c.l.b16 %v843
    %v862 = vunpack.c.h.b16 %v843
    %v863 = vunpack.c.l.b16 %v844
    %v864 = vunpack.c.h.b16 %v844
    %v865 = vunpack.c.l.b16 %v845
    %v866 = vunpack.c.h.b16 %v845
    %v867 = vunpack.c.l.b16 %v846
    %v868 = vunpack.c.h.b16 %v846
    %v869 = vunpack.c.l.b16 %v847
    %v870 = vunpack.c.h.b16 %v847
    %v871 = vunpack.c.l.b16 %v848
    %v872 = vunpack.c.h.b16 %v848
    %v873 = vpack.c.b16 %v859, %v857
    %v874 = vpack.c.b16 %v860, %v858
    %v875 = vpack.c.b16 %v863, %v861
    %v876 = vpack.c.b16 %v864, %v862
    %v877 = vpack.c.b16 %v867, %v865
    %v878 = vpack.c.b16 %v868, %v866
    %v879 = vpack.c.b16 %v871, %v869
    %v880 = vpack.c.b16 %v872, %v870
    %889 = vrot.lane.b32.xlu0 %v347, 80
    %v890 = vpop.permute.xlu0 %889
    %891 = vrot.lane.b32.xlu0 %v349, 80
    %v892 = vpop.permute.xlu0 %891
    %893 = vrot.lane.b32.xlu0 %v351, 80
    %v894 = vpop.permute.xlu0 %893
    %895 = vrot.lane.b32.xlu0 %v353, 80
    %v896 = vpop.permute.xlu0 %895
    %897 = vrot.lane.b32.xlu0 %v355, 80
    %v898 = vpop.permute.xlu0 %897
    %899 = vrot.lane.b32.xlu0 %v357, 80
    %v900 = vpop.permute.xlu0 %899
    %901 = vrot.lane.b32.xlu0 %v359, 80
    %v902 = vpop.permute.xlu0 %901
    %903 = vrot.lane.b32.xlu0 %v361, 80
    %v904 = vpop.permute.xlu0 %903
    %905 = vrot.lane.b32.xlu0 %v363, 80
    %v906 = vpop.permute.xlu0 %905
    %907 = vrot.lane.b32.xlu0 %v365, 80
    %v908 = vpop.permute.xlu0 %907
    %909 = vrot.lane.b32.xlu0 %v367, 80
    %v910 = vpop.permute.xlu0 %909
    %911 = vrot.lane.b32.xlu0 %v369, 80
    %v912 = vpop.permute.xlu0 %911
    %913 = vrot.lane.b32.xlu0 %v371, 80
    %v914 = vpop.permute.xlu0 %913
    %915 = vrot.lane.b32.xlu0 %v373, 80
    %v916 = vpop.permute.xlu0 %915
    %917 = vrot.lane.b32.xlu0 %v375, 80
    %v918 = vpop.permute.xlu0 %917
    %919 = vrot.lane.b32.xlu0 %v377, 80
    %v920 = vpop.permute.xlu0 %919
    %937 = vmatprep.subr.bf16.mxu0 0
    %938 = vmatpush1.bf16.msra.mxu0 %v904
    %939 = vmatprep.subr.bf16.mxu0 0
    %940 = vmatpush1.bf16.msra.mxu0 %v902
    %941 = vmatprep.subr.bf16.mxu0 0
    %942 = vmatpush1.bf16.msra.mxu0 %v900
    %943 = vmatprep.subr.bf16.mxu0 0
    %944 = vmatpush1.bf16.msra.mxu0 %v898
    %945 = vmatprep.subr.bf16.mxu0 0
    %946 = vmatpush1.bf16.msra.mxu0 %v896
    %947 = vmatprep.subr.bf16.mxu0 0
    %948 = vmatpush1.bf16.msra.mxu0 %v894
    %949 = vmatprep.subr.bf16.mxu0 0
    %950 = vmatpush1.bf16.msra.mxu0 %v892
    %951 = vmatprep.subr.bf16.mxu0 0
    %952 = vmatpush1.bf16.msra.mxu0 %v890
    %953 = vmatprep.subr.bf16.mxu0 0
    %954 = vmatpush2.bf16.msra.mxu0 %v920
    %955 = vmatprep.subr.bf16.mxu0 0
    %956 = vmatpush2.bf16.msra.mxu0 %v918
    %957 = vmatprep.subr.bf16.mxu0 0
    %958 = vmatpush2.bf16.msra.mxu0 %v916
    %959 = vmatprep.subr.bf16.mxu0 0
    %960 = vmatpush2.bf16.msra.mxu0 %v914
    %961 = vmatprep.subr.bf16.mxu0 0
    %962 = vmatpush2.bf16.msra.mxu0 %v912
    %963 = vmatprep.subr.bf16.mxu0 0
    %964 = vmatpush2.bf16.msra.mxu0 %v910
    %965 = vmatprep.subr.bf16.mxu0 0
    %966 = vmatpush2.bf16.msra.mxu0 %v908
    %967 = vmatprep.subr.bf16.mxu0 0
    %968 = vmatpush2.bf16.msra.mxu0 %v906
    %969 = vmatprep.mubr.bf16.mxu0 %v874
    %970 = vmatmul.mubr.bf16.gmra.mxu0 %v873
    %v971 = vpop.f32.mrf.mxu0
    %v972 = vadd.f32 0.0, %v971
    %v973 = vpop.f32.mrf.mxu0
    %v974 = vpop.f32.mrf.mxu0
    %v975 = vadd.f32 0.0, %v974
    %v976 = vpop.f32.mrf.mxu0
    %977 = vmatprep.mubr.bf16.mxu0 %v876
    %978 = vmatmul.mubr.bf16.gmra.mxu0 %v875
    %v979 = vpop.f32.mrf.mxu0
    %v980 = vadd.f32 0.0, %v979
    %v981 = vpop.f32.mrf.mxu0
    %v982 = vpop.f32.mrf.mxu0
    %v983 = vadd.f32 0.0, %v982
    %v984 = vpop.f32.mrf.mxu0
    %985 = vmatprep.mubr.bf16.mxu0 %v878
    %986 = vmatmul.mubr.bf16.gmra.mxu0 %v877
    %v987 = vpop.f32.mrf.mxu0
    %v988 = vadd.f32 0.0, %v987
    %v989 = vpop.f32.mrf.mxu0
    %v990 = vpop.f32.mrf.mxu0
    %v991 = vadd.f32 0.0, %v990
    %v992 = vpop.f32.mrf.mxu0
    %993 = vmatprep.mubr.bf16.mxu0 %v880
    %994 = vmatmul.mubr.bf16.gmra.mxu0 %v879
    %v995 = vpop.f32.mrf.mxu0
    %v996 = vadd.f32 0.0, %v995
    %v997 = vpop.f32.mrf.mxu0
    %v998 = vpop.f32.mrf.mxu0
    %v999 = vadd.f32 0.0, %v998
    %v1000 = vpop.f32.mrf.mxu0
    %1001 = vdwg.mxu0
    %v1002 = vadd.f32 %v832, %v972
    %v1003 = vadd.f32 %v833, %v975
    %v1004 = vadd.f32 %v834, %v980
    %v1005 = vadd.f32 %v835, %v983
    %v1006 = vadd.f32 %v836, %v988
    %v1007 = vadd.f32 %v837, %v991
    %v1008 = vadd.f32 %v838, %v996
    %v1009 = vadd.f32 %v839, %v999
    %s1010 = scalar_lea.vmem [#allocation2], 256
    %v1011 = vld [vmem:[%s1010] sm:$0xff]
    %v1012 = vld [vmem:[%s1010 + $0x8] sm:$0xff]
    %v1013 = vld [vmem:[%s1010 + $0x10] sm:$0xff]
    %v1014 = vld [vmem:[%s1010 + $0x18] sm:$0xff]
    %v1015 = vld [vmem:[%s1010 + $0x20] sm:$0xff]
    %v1016 = vld [vmem:[%s1010 + $0x28] sm:$0xff]
    %v1017 = vld [vmem:[%s1010 + $0x30] sm:$0xff]
    %v1018 = vld [vmem:[%s1010 + $0x38] sm:$0xff]
    %v1027 = vunpack.c.l.b16 %v1011
    %v1028 = vunpack.c.h.b16 %v1011
    %v1029 = vunpack.c.l.b16 %v1012
    %v1030 = vunpack.c.h.b16 %v1012
    %v1031 = vunpack.c.l.b16 %v1013
    %v1032 = vunpack.c.h.b16 %v1013
    %v1033 = vunpack.c.l.b16 %v1014
    %v1034 = vunpack.c.h.b16 %v1014
    %v1035 = vunpack.c.l.b16 %v1015
    %v1036 = vunpack.c.h.b16 %v1015
    %v1037 = vunpack.c.l.b16 %v1016
    %v1038 = vunpack.c.h.b16 %v1016
    %v1039 = vunpack.c.l.b16 %v1017
    %v1040 = vunpack.c.h.b16 %v1017
    %v1041 = vunpack.c.l.b16 %v1018
    %v1042 = vunpack.c.h.b16 %v1018
    %v1043 = vpack.c.b16 %v1029, %v1027
    %v1044 = vpack.c.b16 %v1030, %v1028
    %v1045 = vpack.c.b16 %v1033, %v1031
    %v1046 = vpack.c.b16 %v1034, %v1032
    %v1047 = vpack.c.b16 %v1037, %v1035
    %v1048 = vpack.c.b16 %v1038, %v1036
    %v1049 = vpack.c.b16 %v1041, %v1039
    %v1050 = vpack.c.b16 %v1042, %v1040
    %1059 = vrot.lane.b32.xlu0 %v347, 64
    %v1060 = vpop.permute.xlu0 %1059
    %1061 = vrot.lane.b32.xlu0 %v349, 64
    %v1062 = vpop.permute.xlu0 %1061
    %1063 = vrot.lane.b32.xlu0 %v351, 64
    %v1064 = vpop.permute.xlu0 %1063
    %1065 = vrot.lane.b32.xlu0 %v353, 64
    %v1066 = vpop.permute.xlu0 %1065
    %1067 = vrot.lane.b32.xlu0 %v355, 64
    %v1068 = vpop.permute.xlu0 %1067
    %1069 = vrot.lane.b32.xlu0 %v357, 64
    %v1070 = vpop.permute.xlu0 %1069
    %1071 = vrot.lane.b32.xlu0 %v359, 64
    %v1072 = vpop.permute.xlu0 %1071
    %1073 = vrot.lane.b32.xlu0 %v361, 64
    %v1074 = vpop.permute.xlu0 %1073
    %1075 = vrot.lane.b32.xlu0 %v363, 64
    %v1076 = vpop.permute.xlu0 %1075
    %1077 = vrot.lane.b32.xlu0 %v365, 64
    %v1078 = vpop.permute.xlu0 %1077
    %1079 = vrot.lane.b32.xlu0 %v367, 64
    %v1080 = vpop.permute.xlu0 %1079
    %1081 = vrot.lane.b32.xlu0 %v369, 64
    %v1082 = vpop.permute.xlu0 %1081
    %1083 = vrot.lane.b32.xlu0 %v371, 64
    %v1084 = vpop.permute.xlu0 %1083
    %1085 = vrot.lane.b32.xlu0 %v373, 64
    %v1086 = vpop.permute.xlu0 %1085
    %1087 = vrot.lane.b32.xlu0 %v375, 64
    %v1088 = vpop.permute.xlu0 %1087
    %1089 = vrot.lane.b32.xlu0 %v377, 64
    %v1090 = vpop.permute.xlu0 %1089
    %1107 = vmatprep.subr.bf16.mxu0 0
    %1108 = vmatpush1.bf16.msra.mxu0 %v1074
    %1109 = vmatprep.subr.bf16.mxu0 0
    %1110 = vmatpush1.bf16.msra.mxu0 %v1072
    %1111 = vmatprep.subr.bf16.mxu0 0
    %1112 = vmatpush1.bf16.msra.mxu0 %v1070
    %1113 = vmatprep.subr.bf16.mxu0 0
    %1114 = vmatpush1.bf16.msra.mxu0 %v1068
    %1115 = vmatprep.subr.bf16.mxu0 0
    %1116 = vmatpush1.bf16.msra.mxu0 %v1066
    %1117 = vmatprep.subr.bf16.mxu0 0
    %1118 = vmatpush1.bf16.msra.mxu0 %v1064
    %1119 = vmatprep.subr.bf16.mxu0 0
    %1120 = vmatpush1.bf16.msra.mxu0 %v1062
    %1121 = vmatprep.subr.bf16.mxu0 0
    %1122 = vmatpush1.bf16.msra.mxu0 %v1060
    %1123 = vmatprep.subr.bf16.mxu0 0
    %1124 = vmatpush2.bf16.msra.mxu0 %v1090
    %1125 = vmatprep.subr.bf16.mxu0 0
    %1126 = vmatpush2.bf16.msra.mxu0 %v1088
    %1127 = vmatprep.subr.bf16.mxu0 0
    %1128 = vmatpush2.bf16.msra.mxu0 %v1086
    %1129 = vmatprep.subr.bf16.mxu0 0
    %1130 = vmatpush2.bf16.msra.mxu0 %v1084
    %1131 = vmatprep.subr.bf16.mxu0 0
    %1132 = vmatpush2.bf16.msra.mxu0 %v1082
    %1133 = vmatprep.subr.bf16.mxu0 0
    %1134 = vmatpush2.bf16.msra.mxu0 %v1080
    %1135 = vmatprep.subr.bf16.mxu0 0
    %1136 = vmatpush2.bf16.msra.mxu0 %v1078
    %1137 = vmatprep.subr.bf16.mxu0 0
    %1138 = vmatpush2.bf16.msra.mxu0 %v1076
    %1139 = vmatprep.mubr.bf16.mxu0 %v1044
    %1140 = vmatmul.mubr.bf16.gmra.mxu0 %v1043
    %v1141 = vpop.f32.mrf.mxu0
    %v1142 = vadd.f32 0.0, %v1141
    %v1143 = vpop.f32.mrf.mxu0
    %v1144 = vpop.f32.mrf.mxu0
    %v1145 = vadd.f32 0.0, %v1144
    %v1146 = vpop.f32.mrf.mxu0
    %1147 = vmatprep.mubr.bf16.mxu0 %v1046
    %1148 = vmatmul.mubr.bf16.gmra.mxu0 %v1045
    %v1149 = vpop.f32.mrf.mxu0
    %v1150 = vadd.f32 0.0, %v1149
    %v1151 = vpop.f32.mrf.mxu0
    %v1152 = vpop.f32.mrf.mxu0
    %v1153 = vadd.f32 0.0, %v1152
    %v1154 = vpop.f32.mrf.mxu0
    %1155 = vmatprep.mubr.bf16.mxu0 %v1048
    %1156 = vmatmul.mubr.bf16.gmra.mxu0 %v1047
    %v1157 = vpop.f32.mrf.mxu0
    %v1158 = vadd.f32 0.0, %v1157
    %v1159 = vpop.f32.mrf.mxu0
    %v1160 = vpop.f32.mrf.mxu0
    %v1161 = vadd.f32 0.0, %v1160
    %v1162 = vpop.f32.mrf.mxu0
    %1163 = vmatprep.mubr.bf16.mxu0 %v1050
    %1164 = vmatmul.mubr.bf16.gmra.mxu0 %v1049
    %v1165 = vpop.f32.mrf.mxu0
    %v1166 = vadd.f32 0.0, %v1165
    %v1167 = vpop.f32.mrf.mxu0
    %v1168 = vpop.f32.mrf.mxu0
    %v1169 = vadd.f32 0.0, %v1168
    %v1170 = vpop.f32.mrf.mxu0
    %1171 = vdwg.mxu0
    %v1172 = vadd.f32 %v1002, %v1142
    %v1173 = vadd.f32 %v1003, %v1145
    %v1174 = vadd.f32 %v1004, %v1150
    %v1175 = vadd.f32 %v1005, %v1153
    %v1176 = vadd.f32 %v1006, %v1158
    %v1177 = vadd.f32 %v1007, %v1161
    %v1178 = vadd.f32 %v1008, %v1166
    %v1179 = vadd.f32 %v1009, %v1169
    %s1180 = scalar_lea.vmem [#allocation2], 320
    %v1181 = vld [vmem:[%s1180] sm:$0xff]
    %v1182 = vld [vmem:[%s1180 + $0x8] sm:$0xff]
    %v1183 = vld [vmem:[%s1180 + $0x10] sm:$0xff]
    %v1184 = vld [vmem:[%s1180 + $0x18] sm:$0xff]
    %v1185 = vld [vmem:[%s1180 + $0x20] sm:$0xff]
    %v1186 = vld [vmem:[%s1180 + $0x28] sm:$0xff]
    %v1187 = vld [vmem:[%s1180 + $0x30] sm:$0xff]
    %v1188 = vld [vmem:[%s1180 + $0x38] sm:$0xff]
    %v1197 = vunpack.c.l.b16 %v1181
    %v1198 = vunpack.c.h.b16 %v1181
    %v1199 = vunpack.c.l.b16 %v1182
    %v1200 = vunpack.c.h.b16 %v1182
    %v1201 = vunpack.c.l.b16 %v1183
    %v1202 = vunpack.c.h.b16 %v1183
    %v1203 = vunpack.c.l.b16 %v1184
    %v1204 = vunpack.c.h.b16 %v1184
    %v1205 = vunpack.c.l.b16 %v1185
    %v1206 = vunpack.c.h.b16 %v1185
    %v1207 = vunpack.c.l.b16 %v1186
    %v1208 = vunpack.c.h.b16 %v1186
    %v1209 = vunpack.c.l.b16 %v1187
    %v1210 = vunpack.c.h.b16 %v1187
    %v1211 = vunpack.c.l.b16 %v1188
    %v1212 = vunpack.c.h.b16 %v1188
    %v1213 = vpack.c.b16 %v1199, %v1197
    %v1214 = vpack.c.b16 %v1200, %v1198
    %v1215 = vpack.c.b16 %v1203, %v1201
    %v1216 = vpack.c.b16 %v1204, %v1202
    %v1217 = vpack.c.b16 %v1207, %v1205
    %v1218 = vpack.c.b16 %v1208, %v1206
    %v1219 = vpack.c.b16 %v1211, %v1209
    %v1220 = vpack.c.b16 %v1212, %v1210
    %1229 = vrot.lane.b32.xlu0 %v347, 48
    %v1230 = vpop.permute.xlu0 %1229
    %1231 = vrot.lane.b32.xlu0 %v349, 48
    %v1232 = vpop.permute.xlu0 %1231
    %1233 = vrot.lane.b32.xlu0 %v351, 48
    %v1234 = vpop.permute.xlu0 %1233
    %1235 = vrot.lane.b32.xlu0 %v353, 48
    %v1236 = vpop.permute.xlu0 %1235
    %1237 = vrot.lane.b32.xlu0 %v355, 48
    %v1238 = vpop.permute.xlu0 %1237
    %1239 = vrot.lane.b32.xlu0 %v357, 48
    %v1240 = vpop.permute.xlu0 %1239
    %1241 = vrot.lane.b32.xlu0 %v359, 48
    %v1242 = vpop.permute.xlu0 %1241
    %1243 = vrot.lane.b32.xlu0 %v361, 48
    %v1244 = vpop.permute.xlu0 %1243
    %1245 = vrot.lane.b32.xlu0 %v363, 48
    %v1246 = vpop.permute.xlu0 %1245
    %1247 = vrot.lane.b32.xlu0 %v365, 48
    %v1248 = vpop.permute.xlu0 %1247
    %1249 = vrot.lane.b32.xlu0 %v367, 48
    %v1250 = vpop.permute.xlu0 %1249
    %1251 = vrot.lane.b32.xlu0 %v369, 48
    %v1252 = vpop.permute.xlu0 %1251
    %1253 = vrot.lane.b32.xlu0 %v371, 48
    %v1254 = vpop.permute.xlu0 %1253
    %1255 = vrot.lane.b32.xlu0 %v373, 48
    %v1256 = vpop.permute.xlu0 %1255
    %1257 = vrot.lane.b32.xlu0 %v375, 48
    %v1258 = vpop.permute.xlu0 %1257
    %1259 = vrot.lane.b32.xlu0 %v377, 48
    %v1260 = vpop.permute.xlu0 %1259
    %1277 = vmatprep.subr.bf16.mxu0 0
    %1278 = vmatpush1.bf16.msra.mxu0 %v1244
    %1279 = vmatprep.subr.bf16.mxu0 0
    %1280 = vmatpush1.bf16.msra.mxu0 %v1242
    %1281 = vmatprep.subr.bf16.mxu0 0
    %1282 = vmatpush1.bf16.msra.mxu0 %v1240
    %1283 = vmatprep.subr.bf16.mxu0 0
    %1284 = vmatpush1.bf16.msra.mxu0 %v1238
    %1285 = vmatprep.subr.bf16.mxu0 0
    %1286 = vmatpush1.bf16.msra.mxu0 %v1236
    %1287 = vmatprep.subr.bf16.mxu0 0
    %1288 = vmatpush1.bf16.msra.mxu0 %v1234
    %1289 = vmatprep.subr.bf16.mxu0 0
    %1290 = vmatpush1.bf16.msra.mxu0 %v1232
    %1291 = vmatprep.subr.bf16.mxu0 0
    %1292 = vmatpush1.bf16.msra.mxu0 %v1230
    %1293 = vmatprep.subr.bf16.mxu0 0
    %1294 = vmatpush2.bf16.msra.mxu0 %v1260
    %1295 = vmatprep.subr.bf16.mxu0 0
    %1296 = vmatpush2.bf16.msra.mxu0 %v1258
    %1297 = vmatprep.subr.bf16.mxu0 0
    %1298 = vmatpush2.bf16.msra.mxu0 %v1256
    %1299 = vmatprep.subr.bf16.mxu0 0
    %1300 = vmatpush2.bf16.msra.mxu0 %v1254
    %1301 = vmatprep.subr.bf16.mxu0 0
    %1302 = vmatpush2.bf16.msra.mxu0 %v1252
    %1303 = vmatprep.subr.bf16.mxu0 0
    %1304 = vmatpush2.bf16.msra.mxu0 %v1250
    %1305 = vmatprep.subr.bf16.mxu0 0
    %1306 = vmatpush2.bf16.msra.mxu0 %v1248
    %1307 = vmatprep.subr.bf16.mxu0 0
    %1308 = vmatpush2.bf16.msra.mxu0 %v1246
    %1309 = vmatprep.mubr.bf16.mxu0 %v1214
    %1310 = vmatmul.mubr.bf16.gmra.mxu0 %v1213
    %v1311 = vpop.f32.mrf.mxu0
    %v1312 = vadd.f32 0.0, %v1311
    %v1313 = vpop.f32.mrf.mxu0
    %v1314 = vpop.f32.mrf.mxu0
    %v1315 = vadd.f32 0.0, %v1314
    %v1316 = vpop.f32.mrf.mxu0
    %1317 = vmatprep.mubr.bf16.mxu0 %v1216
    %1318 = vmatmul.mubr.bf16.gmra.mxu0 %v1215
    %v1319 = vpop.f32.mrf.mxu0
    %v1320 = vadd.f32 0.0, %v1319
    %v1321 = vpop.f32.mrf.mxu0
    %v1322 = vpop.f32.mrf.mxu0
    %v1323 = vadd.f32 0.0, %v1322
    %v1324 = vpop.f32.mrf.mxu0
    %1325 = vmatprep.mubr.bf16.mxu0 %v1218
    %1326 = vmatmul.mubr.bf16.gmra.mxu0 %v1217
    %v1327 = vpop.f32.mrf.mxu0
    %v1328 = vadd.f32 0.0, %v1327
    %v1329 = vpop.f32.mrf.mxu0
    %v1330 = vpop.f32.mrf.mxu0
    %v1331 = vadd.f32 0.0, %v1330
    %v1332 = vpop.f32.mrf.mxu0
    %1333 = vmatprep.mubr.bf16.mxu0 %v1220
    %1334 = vmatmul.mubr.bf16.gmra.mxu0 %v1219
    %v1335 = vpop.f32.mrf.mxu0
    %v1336 = vadd.f32 0.0, %v1335
    %v1337 = vpop.f32.mrf.mxu0
    %v1338 = vpop.f32.mrf.mxu0
    %v1339 = vadd.f32 0.0, %v1338
    %v1340 = vpop.f32.mrf.mxu0
    %1341 = vdwg.mxu0
    %v1342 = vadd.f32 %v1172, %v1312
    %v1343 = vadd.f32 %v1173, %v1315
    %v1344 = vadd.f32 %v1174, %v1320
    %v1345 = vadd.f32 %v1175, %v1323
    %v1346 = vadd.f32 %v1176, %v1328
    %v1347 = vadd.f32 %v1177, %v1331
    %v1348 = vadd.f32 %v1178, %v1336
    %v1349 = vadd.f32 %v1179, %v1339
    %s1350 = scalar_lea.vmem [#allocation2], 384
    %v1351 = vld [vmem:[%s1350] sm:$0xff]
    %v1352 = vld [vmem:[%s1350 + $0x8] sm:$0xff]
    %v1353 = vld [vmem:[%s1350 + $0x10] sm:$0xff]
    %v1354 = vld [vmem:[%s1350 + $0x18] sm:$0xff]
    %v1355 = vld [vmem:[%s1350 + $0x20] sm:$0xff]
    %v1356 = vld [vmem:[%s1350 + $0x28] sm:$0xff]
    %v1357 = vld [vmem:[%s1350 + $0x30] sm:$0xff]
    %v1358 = vld [vmem:[%s1350 + $0x38] sm:$0xff]
    %v1367 = vunpack.c.l.b16 %v1351
    %v1368 = vunpack.c.h.b16 %v1351
    %v1369 = vunpack.c.l.b16 %v1352
    %v1370 = vunpack.c.h.b16 %v1352
    %v1371 = vunpack.c.l.b16 %v1353
    %v1372 = vunpack.c.h.b16 %v1353
    %v1373 = vunpack.c.l.b16 %v1354
    %v1374 = vunpack.c.h.b16 %v1354
    %v1375 = vunpack.c.l.b16 %v1355
    %v1376 = vunpack.c.h.b16 %v1355
    %v1377 = vunpack.c.l.b16 %v1356
    %v1378 = vunpack.c.h.b16 %v1356
    %v1379 = vunpack.c.l.b16 %v1357
    %v1380 = vunpack.c.h.b16 %v1357
    %v1381 = vunpack.c.l.b16 %v1358
    %v1382 = vunpack.c.h.b16 %v1358
    %v1383 = vpack.c.b16 %v1369, %v1367
    %v1384 = vpack.c.b16 %v1370, %v1368
    %v1385 = vpack.c.b16 %v1373, %v1371
    %v1386 = vpack.c.b16 %v1374, %v1372
    %v1387 = vpack.c.b16 %v1377, %v1375
    %v1388 = vpack.c.b16 %v1378, %v1376
    %v1389 = vpack.c.b16 %v1381, %v1379
    %v1390 = vpack.c.b16 %v1382, %v1380
    %1399 = vrot.lane.b32.xlu0 %v347, 32
    %v1400 = vpop.permute.xlu0 %1399
    %1401 = vrot.lane.b32.xlu0 %v349, 32
    %v1402 = vpop.permute.xlu0 %1401
    %1403 = vrot.lane.b32.xlu0 %v351, 32
    %v1404 = vpop.permute.xlu0 %1403
    %1405 = vrot.lane.b32.xlu0 %v353, 32
    %v1406 = vpop.permute.xlu0 %1405
    %1407 = vrot.lane.b32.xlu0 %v355, 32
    %v1408 = vpop.permute.xlu0 %1407
    %1409 = vrot.lane.b32.xlu0 %v357, 32
    %v1410 = vpop.permute.xlu0 %1409
    %1411 = vrot.lane.b32.xlu0 %v359, 32
    %v1412 = vpop.permute.xlu0 %1411
    %1413 = vrot.lane.b32.xlu0 %v361, 32
    %v1414 = vpop.permute.xlu0 %1413
    %1415 = vrot.lane.b32.xlu0 %v363, 32
    %v1416 = vpop.permute.xlu0 %1415
    %1417 = vrot.lane.b32.xlu0 %v365, 32
    %v1418 = vpop.permute.xlu0 %1417
    %1419 = vrot.lane.b32.xlu0 %v367, 32
    %v1420 = vpop.permute.xlu0 %1419
    %1421 = vrot.lane.b32.xlu0 %v369, 32
    %v1422 = vpop.permute.xlu0 %1421
    %1423 = vrot.lane.b32.xlu0 %v371, 32
    %v1424 = vpop.permute.xlu0 %1423
    %1425 = vrot.lane.b32.xlu0 %v373, 32
    %v1426 = vpop.permute.xlu0 %1425
    %1427 = vrot.lane.b32.xlu0 %v375, 32
    %v1428 = vpop.permute.xlu0 %1427
    %1429 = vrot.lane.b32.xlu0 %v377, 32
    %v1430 = vpop.permute.xlu0 %1429
    %1447 = vmatprep.subr.bf16.mxu0 0
    %1448 = vmatpush1.bf16.msra.mxu0 %v1414
    %1449 = vmatprep.subr.bf16.mxu0 0
    %1450 = vmatpush1.bf16.msra.mxu0 %v1412
    %1451 = vmatprep.subr.bf16.mxu0 0
    %1452 = vmatpush1.bf16.msra.mxu0 %v1410
    %1453 = vmatprep.subr.bf16.mxu0 0
    %1454 = vmatpush1.bf16.msra.mxu0 %v1408
    %1455 = vmatprep.subr.bf16.mxu0 0
    %1456 = vmatpush1.bf16.msra.mxu0 %v1406
    %1457 = vmatprep.subr.bf16.mxu0 0
    %1458 = vmatpush1.bf16.msra.mxu0 %v1404
    %1459 = vmatprep.subr.bf16.mxu0 0
    %1460 = vmatpush1.bf16.msra.mxu0 %v1402
    %1461 = vmatprep.subr.bf16.mxu0 0
    %1462 = vmatpush1.bf16.msra.mxu0 %v1400
    %1463 = vmatprep.subr.bf16.mxu0 0
    %1464 = vmatpush2.bf16.msra.mxu0 %v1430
    %1465 = vmatprep.subr.bf16.mxu0 0
    %1466 = vmatpush2.bf16.msra.mxu0 %v1428
    %1467 = vmatprep.subr.bf16.mxu0 0
    %1468 = vmatpush2.bf16.msra.mxu0 %v1426
    %1469 = vmatprep.subr.bf16.mxu0 0
    %1470 = vmatpush2.bf16.msra.mxu0 %v1424
    %1471 = vmatprep.subr.bf16.mxu0 0
    %1472 = vmatpush2.bf16.msra.mxu0 %v1422
    %1473 = vmatprep.subr.bf16.mxu0 0
    %1474 = vmatpush2.bf16.msra.mxu0 %v1420
    %1475 = vmatprep.subr.bf16.mxu0 0
    %1476 = vmatpush2.bf16.msra.mxu0 %v1418
    %1477 = vmatprep.subr.bf16.mxu0 0
    %1478 = vmatpush2.bf16.msra.mxu0 %v1416
    %1479 = vmatprep.mubr.bf16.mxu0 %v1384
    %1480 = vmatmul.mubr.bf16.gmra.mxu0 %v1383
    %v1481 = vpop.f32.mrf.mxu0
    %v1482 = vadd.f32 0.0, %v1481
    %v1483 = vpop.f32.mrf.mxu0
    %v1484 = vpop.f32.mrf.mxu0
    %v1485 = vadd.f32 0.0, %v1484
    %v1486 = vpop.f32.mrf.mxu0
    %1487 = vmatprep.mubr.bf16.mxu0 %v1386
    %1488 = vmatmul.mubr.bf16.gmra.mxu0 %v1385
    %v1489 = vpop.f32.mrf.mxu0
    %v1490 = vadd.f32 0.0, %v1489
    %v1491 = vpop.f32.mrf.mxu0
    %v1492 = vpop.f32.mrf.mxu0
    %v1493 = vadd.f32 0.0, %v1492
    %v1494 = vpop.f32.mrf.mxu0
    %1495 = vmatprep.mubr.bf16.mxu0 %v1388
    %1496 = vmatmul.mubr.bf16.gmra.mxu0 %v1387
    %v1497 = vpop.f32.mrf.mxu0
    %v1498 = vadd.f32 0.0, %v1497
    %v1499 = vpop.f32.mrf.mxu0
    %v1500 = vpop.f32.mrf.mxu0
    %v1501 = vadd.f32 0.0, %v1500
    %v1502 = vpop.f32.mrf.mxu0
    %1503 = vmatprep.mubr.bf16.mxu0 %v1390
    %1504 = vmatmul.mubr.bf16.gmra.mxu0 %v1389
    %v1505 = vpop.f32.mrf.mxu0
    %v1506 = vadd.f32 0.0, %v1505
    %v1507 = vpop.f32.mrf.mxu0
    %v1508 = vpop.f32.mrf.mxu0
    %v1509 = vadd.f32 0.0, %v1508
    %v1510 = vpop.f32.mrf.mxu0
    %1511 = vdwg.mxu0
    %v1512 = vadd.f32 %v1342, %v1482
    %v1513 = vadd.f32 %v1343, %v1485
    %v1514 = vadd.f32 %v1344, %v1490
    %v1515 = vadd.f32 %v1345, %v1493
    %v1516 = vadd.f32 %v1346, %v1498
    %v1517 = vadd.f32 %v1347, %v1501
    %v1518 = vadd.f32 %v1348, %v1506
    %v1519 = vadd.f32 %v1349, %v1509
    %s1520 = scalar_lea.vmem [#allocation2], 448
    %v1521 = vld [vmem:[%s1520] sm:$0xff]
    %v1522 = vld [vmem:[%s1520 + $0x8] sm:$0xff]
    %v1523 = vld [vmem:[%s1520 + $0x10] sm:$0xff]
    %v1524 = vld [vmem:[%s1520 + $0x18] sm:$0xff]
    %v1525 = vld [vmem:[%s1520 + $0x20] sm:$0xff]
    %v1526 = vld [vmem:[%s1520 + $0x28] sm:$0xff]
    %v1527 = vld [vmem:[%s1520 + $0x30] sm:$0xff]
    %v1528 = vld [vmem:[%s1520 + $0x38] sm:$0xff]
    %v1537 = vunpack.c.l.b16 %v1521
    %v1538 = vunpack.c.h.b16 %v1521
    %v1539 = vunpack.c.l.b16 %v1522
    %v1540 = vunpack.c.h.b16 %v1522
    %v1541 = vunpack.c.l.b16 %v1523
    %v1542 = vunpack.c.h.b16 %v1523
    %v1543 = vunpack.c.l.b16 %v1524
    %v1544 = vunpack.c.h.b16 %v1524
    %v1545 = vunpack.c.l.b16 %v1525
    %v1546 = vunpack.c.h.b16 %v1525
    %v1547 = vunpack.c.l.b16 %v1526
    %v1548 = vunpack.c.h.b16 %v1526
    %v1549 = vunpack.c.l.b16 %v1527
    %v1550 = vunpack.c.h.b16 %v1527
    %v1551 = vunpack.c.l.b16 %v1528
    %v1552 = vunpack.c.h.b16 %v1528
    %v1553 = vpack.c.b16 %v1539, %v1537
    %v1554 = vpack.c.b16 %v1540, %v1538
    %v1555 = vpack.c.b16 %v1543, %v1541
    %v1556 = vpack.c.b16 %v1544, %v1542
    %v1557 = vpack.c.b16 %v1547, %v1545
    %v1558 = vpack.c.b16 %v1548, %v1546
    %v1559 = vpack.c.b16 %v1551, %v1549
    %v1560 = vpack.c.b16 %v1552, %v1550
    %1569 = vrot.lane.b32.xlu0 %v347, 16
    %v1570 = vpop.permute.xlu0 %1569
    %1571 = vrot.lane.b32.xlu0 %v349, 16
    %v1572 = vpop.permute.xlu0 %1571
    %1573 = vrot.lane.b32.xlu0 %v351, 16
    %v1574 = vpop.permute.xlu0 %1573
    %1575 = vrot.lane.b32.xlu0 %v353, 16
    %v1576 = vpop.permute.xlu0 %1575
    %1577 = vrot.lane.b32.xlu0 %v355, 16
    %v1578 = vpop.permute.xlu0 %1577
    %1579 = vrot.lane.b32.xlu0 %v357, 16
    %v1580 = vpop.permute.xlu0 %1579
    %1581 = vrot.lane.b32.xlu0 %v359, 16
    %v1582 = vpop.permute.xlu0 %1581
    %1583 = vrot.lane.b32.xlu0 %v361, 16
    %v1584 = vpop.permute.xlu0 %1583
    %1585 = vrot.lane.b32.xlu0 %v363, 16
    %v1586 = vpop.permute.xlu0 %1585
    %1587 = vrot.lane.b32.xlu0 %v365, 16
    %v1588 = vpop.permute.xlu0 %1587
    %1589 = vrot.lane.b32.xlu0 %v367, 16
    %v1590 = vpop.permute.xlu0 %1589
    %1591 = vrot.lane.b32.xlu0 %v369, 16
    %v1592 = vpop.permute.xlu0 %1591
    %1593 = vrot.lane.b32.xlu0 %v371, 16
    %v1594 = vpop.permute.xlu0 %1593
    %1595 = vrot.lane.b32.xlu0 %v373, 16
    %v1596 = vpop.permute.xlu0 %1595
    %1597 = vrot.lane.b32.xlu0 %v375, 16
    %v1598 = vpop.permute.xlu0 %1597
    %1599 = vrot.lane.b32.xlu0 %v377, 16
    %v1600 = vpop.permute.xlu0 %1599
    %1617 = vmatprep.subr.bf16.mxu0 0
    %1618 = vmatpush1.bf16.msra.mxu0 %v1584
    %1619 = vmatprep.subr.bf16.mxu0 0
    %1620 = vmatpush1.bf16.msra.mxu0 %v1582
    %1621 = vmatprep.subr.bf16.mxu0 0
    %1622 = vmatpush1.bf16.msra.mxu0 %v1580
    %1623 = vmatprep.subr.bf16.mxu0 0
    %1624 = vmatpush1.bf16.msra.mxu0 %v1578
    %1625 = vmatprep.subr.bf16.mxu0 0
    %1626 = vmatpush1.bf16.msra.mxu0 %v1576
    %1627 = vmatprep.subr.bf16.mxu0 0
    %1628 = vmatpush1.bf16.msra.mxu0 %v1574
    %1629 = vmatprep.subr.bf16.mxu0 0
    %1630 = vmatpush1.bf16.msra.mxu0 %v1572
    %1631 = vmatprep.subr.bf16.mxu0 0
    %1632 = vmatpush1.bf16.msra.mxu0 %v1570
    %1633 = vmatprep.subr.bf16.mxu0 0
    %1634 = vmatpush2.bf16.msra.mxu0 %v1600
    %1635 = vmatprep.subr.bf16.mxu0 0
    %1636 = vmatpush2.bf16.msra.mxu0 %v1598
    %1637 = vmatprep.subr.bf16.mxu0 0
    %1638 = vmatpush2.bf16.msra.mxu0 %v1596
    %1639 = vmatprep.subr.bf16.mxu0 0
    %1640 = vmatpush2.bf16.msra.mxu0 %v1594
    %1641 = vmatprep.subr.bf16.mxu0 0
    %1642 = vmatpush2.bf16.msra.mxu0 %v1592
    %1643 = vmatprep.subr.bf16.mxu0 0
    %1644 = vmatpush2.bf16.msra.mxu0 %v1590
    %1645 = vmatprep.subr.bf16.mxu0 0
    %1646 = vmatpush2.bf16.msra.mxu0 %v1588
    %1647 = vmatprep.subr.bf16.mxu0 0
    %1648 = vmatpush2.bf16.msra.mxu0 %v1586
    %1649 = vmatprep.mubr.bf16.mxu0 %v1554
    %1650 = vmatmul.mubr.bf16.gmra.mxu0 %v1553
    %v1651 = vpop.f32.mrf.mxu0
    %v1652 = vadd.f32 0.0, %v1651
    %v1653 = vpop.f32.mrf.mxu0
    %v1654 = vpop.f32.mrf.mxu0
    %v1655 = vadd.f32 0.0, %v1654
    %v1656 = vpop.f32.mrf.mxu0
    %1657 = vmatprep.mubr.bf16.mxu0 %v1556
    %1658 = vmatmul.mubr.bf16.gmra.mxu0 %v1555
    %v1659 = vpop.f32.mrf.mxu0
    %v1660 = vadd.f32 0.0, %v1659
    %v1661 = vpop.f32.mrf.mxu0
    %v1662 = vpop.f32.mrf.mxu0
    %v1663 = vadd.f32 0.0, %v1662
    %v1664 = vpop.f32.mrf.mxu0
    %1665 = vmatprep.mubr.bf16.mxu0 %v1558
    %1666 = vmatmul.mubr.bf16.gmra.mxu0 %v1557
    %v1667 = vpop.f32.mrf.mxu0
    %v1668 = vadd.f32 0.0, %v1667
    %v1669 = vpop.f32.mrf.mxu0
    %v1670 = vpop.f32.mrf.mxu0
    %v1671 = vadd.f32 0.0, %v1670
    %v1672 = vpop.f32.mrf.mxu0
    %1673 = vmatprep.mubr.bf16.mxu0 %v1560
    %1674 = vmatmul.mubr.bf16.gmra.mxu0 %v1559
    %v1675 = vpop.f32.mrf.mxu0
    %v1676 = vadd.f32 0.0, %v1675
    %v1677 = vpop.f32.mrf.mxu0
    %v1678 = vpop.f32.mrf.mxu0
    %v1679 = vadd.f32 0.0, %v1678
    %v1680 = vpop.f32.mrf.mxu0
    %1681 = vdwg.mxu0
    %v1682 = vadd.f32 %v1512, %v1652
    %v1683 = vadd.f32 %v1513, %v1655
    %v1684 = vadd.f32 %v1514, %v1660
    %v1685 = vadd.f32 %v1515, %v1663
    %v1686 = vadd.f32 %v1516, %v1668
    %v1687 = vadd.f32 %v1517, %v1671
    %v1688 = vadd.f32 %v1518, %v1676
    %v1689 = vadd.f32 %v1519, %v1679
    %s1690 = scalar_lea.vmem [#allocation2], 512
    %v1691 = vld [vmem:[%s1690] sm:$0xff]
    %v1692 = vld [vmem:[%s1690 + $0x8] sm:$0xff]
    %v1693 = vld [vmem:[%s1690 + $0x10] sm:$0xff]
    %v1694 = vld [vmem:[%s1690 + $0x18] sm:$0xff]
    %v1695 = vld [vmem:[%s1690 + $0x20] sm:$0xff]
    %v1696 = vld [vmem:[%s1690 + $0x28] sm:$0xff]
    %v1697 = vld [vmem:[%s1690 + $0x30] sm:$0xff]
    %v1698 = vld [vmem:[%s1690 + $0x38] sm:$0xff]
    %v1707 = vunpack.c.l.b16 %v1691
    %v1708 = vunpack.c.h.b16 %v1691
    %v1709 = vunpack.c.l.b16 %v1692
    %v1710 = vunpack.c.h.b16 %v1692
    %v1711 = vunpack.c.l.b16 %v1693
    %v1712 = vunpack.c.h.b16 %v1693
    %v1713 = vunpack.c.l.b16 %v1694
    %v1714 = vunpack.c.h.b16 %v1694
    %v1715 = vunpack.c.l.b16 %v1695
    %v1716 = vunpack.c.h.b16 %v1695
    %v1717 = vunpack.c.l.b16 %v1696
    %v1718 = vunpack.c.h.b16 %v1696
    %v1719 = vunpack.c.l.b16 %v1697
    %v1720 = vunpack.c.h.b16 %v1697
    %v1721 = vunpack.c.l.b16 %v1698
    %v1722 = vunpack.c.h.b16 %v1698
    %v1723 = vpack.c.b16 %v1709, %v1707
    %v1724 = vpack.c.b16 %v1710, %v1708
    %v1725 = vpack.c.b16 %v1713, %v1711
    %v1726 = vpack.c.b16 %v1714, %v1712
    %v1727 = vpack.c.b16 %v1717, %v1715
    %v1728 = vpack.c.b16 %v1718, %v1716
    %v1729 = vpack.c.b16 %v1721, %v1719
    %v1730 = vpack.c.b16 %v1722, %v1720
    %1739 = vmatprep.subr.bf16.mxu0 0
    %1740 = vmatpush1.bf16.msra.mxu0 %v362
    %1741 = vmatprep.subr.bf16.mxu0 0
    %1742 = vmatpush1.bf16.msra.mxu0 %v360
    %1743 = vmatprep.subr.bf16.mxu0 0
    %1744 = vmatpush1.bf16.msra.mxu0 %v358
    %1745 = vmatprep.subr.bf16.mxu0 0
    %1746 = vmatpush1.bf16.msra.mxu0 %v356
    %1747 = vmatprep.subr.bf16.mxu0 0
    %1748 = vmatpush1.bf16.msra.mxu0 %v354
    %1749 = vmatprep.subr.bf16.mxu0 0
    %1750 = vmatpush1.bf16.msra.mxu0 %v352
    %1751 = vmatprep.subr.bf16.mxu0 0
    %1752 = vmatpush1.bf16.msra.mxu0 %v350
    %1753 = vmatprep.subr.bf16.mxu0 0
    %1754 = vmatpush1.bf16.msra.mxu0 %v348
    %1755 = vmatprep.subr.bf16.mxu0 0
    %1756 = vmatpush2.bf16.msra.mxu0 %v378
    %1757 = vmatprep.subr.bf16.mxu0 0
    %1758 = vmatpush2.bf16.msra.mxu0 %v376
    %1759 = vmatprep.subr.bf16.mxu0 0
    %1760 = vmatpush2.bf16.msra.mxu0 %v374
    %1761 = vmatprep.subr.bf16.mxu0 0
    %1762 = vmatpush2.bf16.msra.mxu0 %v372
    %1763 = vmatprep.subr.bf16.mxu0 0
    %1764 = vmatpush2.bf16.msra.mxu0 %v370
    %1765 = vmatprep.subr.bf16.mxu0 0
    %1766 = vmatpush2.bf16.msra.mxu0 %v368
    %1767 = vmatprep.subr.bf16.mxu0 0
    %1768 = vmatpush2.bf16.msra.mxu0 %v366
    %1769 = vmatprep.subr.bf16.mxu0 0
    %1770 = vmatpush2.bf16.msra.mxu0 %v364
    %1771 = vmatprep.mubr.bf16.mxu0 %v1724
    %1772 = vmatmul.mubr.bf16.gmra.mxu0 %v1723
    %v1773 = vpop.f32.mrf.mxu0
    %v1774 = vadd.f32 0.0, %v1773
    %v1775 = vpop.f32.mrf.mxu0
    %v1776 = vpop.f32.mrf.mxu0
    %v1777 = vadd.f32 0.0, %v1776
    %v1778 = vpop.f32.mrf.mxu0
    %1779 = vmatprep.mubr.bf16.mxu0 %v1726
    %1780 = vmatmul.mubr.bf16.gmra.mxu0 %v1725
    %v1781 = vpop.f32.mrf.mxu0
    %v1782 = vadd.f32 0.0, %v1781
    %v1783 = vpop.f32.mrf.mxu0
    %v1784 = vpop.f32.mrf.mxu0
    %v1785 = vadd.f32 0.0, %v1784
    %v1786 = vpop.f32.mrf.mxu0
    %1787 = vmatprep.mubr.bf16.mxu0 %v1728
    %1788 = vmatmul.mubr.bf16.gmra.mxu0 %v1727
    %v1789 = vpop.f32.mrf.mxu0
    %v1790 = vadd.f32 0.0, %v1789
    %v1791 = vpop.f32.mrf.mxu0
    %v1792 = vpop.f32.mrf.mxu0
    %v1793 = vadd.f32 0.0, %v1792
    %v1794 = vpop.f32.mrf.mxu0
    %1795 = vmatprep.mubr.bf16.mxu0 %v1730
    %1796 = vmatmul.mubr.bf16.gmra.mxu0 %v1729
    %v1797 = vpop.f32.mrf.mxu0
    %v1798 = vadd.f32 0.0, %v1797
    %v1799 = vpop.f32.mrf.mxu0
    %v1800 = vpop.f32.mrf.mxu0
    %v1801 = vadd.f32 0.0, %v1800
    %v1802 = vpop.f32.mrf.mxu0
    %1803 = vdwg.mxu0
    %v1804 = vadd.f32 %v1682, %v1774
    %v1805 = vadd.f32 %v1683, %v1777
    %v1806 = vadd.f32 %v1684, %v1782
    %v1807 = vadd.f32 %v1685, %v1785
    %v1808 = vadd.f32 %v1686, %v1790
    %v1809 = vadd.f32 %v1687, %v1793
    %v1810 = vadd.f32 %v1688, %v1798
    %v1811 = vadd.f32 %v1689, %v1801
    %s1812 = scalar_lea.vmem [#allocation2], 576
    %v1813 = vld [vmem:[%s1812] sm:$0xff]
    %v1814 = vld [vmem:[%s1812 + $0x8] sm:$0xff]
    %v1815 = vld [vmem:[%s1812 + $0x10] sm:$0xff]
    %v1816 = vld [vmem:[%s1812 + $0x18] sm:$0xff]
    %v1817 = vld [vmem:[%s1812 + $0x20] sm:$0xff]
    %v1818 = vld [vmem:[%s1812 + $0x28] sm:$0xff]
    %v1819 = vld [vmem:[%s1812 + $0x30] sm:$0xff]
    %v1820 = vld [vmem:[%s1812 + $0x38] sm:$0xff]
    %v1829 = vunpack.c.l.b16 %v1813
    %v1830 = vunpack.c.h.b16 %v1813
    %v1831 = vunpack.c.l.b16 %v1814
    %v1832 = vunpack.c.h.b16 %v1814
    %v1833 = vunpack.c.l.b16 %v1815
    %v1834 = vunpack.c.h.b16 %v1815
    %v1835 = vunpack.c.l.b16 %v1816
    %v1836 = vunpack.c.h.b16 %v1816
    %v1837 = vunpack.c.l.b16 %v1817
    %v1838 = vunpack.c.h.b16 %v1817
    %v1839 = vunpack.c.l.b16 %v1818
    %v1840 = vunpack.c.h.b16 %v1818
    %v1841 = vunpack.c.l.b16 %v1819
    %v1842 = vunpack.c.h.b16 %v1819
    %v1843 = vunpack.c.l.b16 %v1820
    %v1844 = vunpack.c.h.b16 %v1820
    %v1845 = vpack.c.b16 %v1831, %v1829
    %v1846 = vpack.c.b16 %v1832, %v1830
    %v1847 = vpack.c.b16 %v1835, %v1833
    %v1848 = vpack.c.b16 %v1836, %v1834
    %v1849 = vpack.c.b16 %v1839, %v1837
    %v1850 = vpack.c.b16 %v1840, %v1838
    %v1851 = vpack.c.b16 %v1843, %v1841
    %v1852 = vpack.c.b16 %v1844, %v1842
    %1877 = vrot.lane.b32.xlu0 %v348, 112
    %v1878 = vpop.permute.xlu0 %1877
    %1879 = vrot.lane.b32.xlu0 %v350, 112
    %v1880 = vpop.permute.xlu0 %1879
    %1881 = vrot.lane.b32.xlu0 %v352, 112
    %v1882 = vpop.permute.xlu0 %1881
    %1883 = vrot.lane.b32.xlu0 %v354, 112
    %v1884 = vpop.permute.xlu0 %1883
    %1885 = vrot.lane.b32.xlu0 %v356, 112
    %v1886 = vpop.permute.xlu0 %1885
    %1887 = vrot.lane.b32.xlu0 %v358, 112
    %v1888 = vpop.permute.xlu0 %1887
    %1889 = vrot.lane.b32.xlu0 %v360, 112
    %v1890 = vpop.permute.xlu0 %1889
    %1891 = vrot.lane.b32.xlu0 %v362, 112
    %v1892 = vpop.permute.xlu0 %1891
    %1893 = vrot.lane.b32.xlu0 %v364, 112
    %v1894 = vpop.permute.xlu0 %1893
    %1895 = vrot.lane.b32.xlu0 %v366, 112
    %v1896 = vpop.permute.xlu0 %1895
    %1897 = vrot.lane.b32.xlu0 %v368, 112
    %v1898 = vpop.permute.xlu0 %1897
    %1899 = vrot.lane.b32.xlu0 %v370, 112
    %v1900 = vpop.permute.xlu0 %1899
    %1901 = vrot.lane.b32.xlu0 %v372, 112
    %v1902 = vpop.permute.xlu0 %1901
    %1903 = vrot.lane.b32.xlu0 %v374, 112
    %v1904 = vpop.permute.xlu0 %1903
    %1905 = vrot.lane.b32.xlu0 %v376, 112
    %v1906 = vpop.permute.xlu0 %1905
    %1907 = vrot.lane.b32.xlu0 %v378, 112
    %v1908 = vpop.permute.xlu0 %1907
    %1925 = vmatprep.subr.bf16.mxu0 0
    %1926 = vmatpush1.bf16.msra.mxu0 %v1892
    %1927 = vmatprep.subr.bf16.mxu0 0
    %1928 = vmatpush1.bf16.msra.mxu0 %v1890
    %1929 = vmatprep.subr.bf16.mxu0 0
    %1930 = vmatpush1.bf16.msra.mxu0 %v1888
    %1931 = vmatprep.subr.bf16.mxu0 0
    %1932 = vmatpush1.bf16.msra.mxu0 %v1886
    %1933 = vmatprep.subr.bf16.mxu0 0
    %1934 = vmatpush1.bf16.msra.mxu0 %v1884
    %1935 = vmatprep.subr.bf16.mxu0 0
    %1936 = vmatpush1.bf16.msra.mxu0 %v1882
    %1937 = vmatprep.subr.bf16.mxu0 0
    %1938 = vmatpush1.bf16.msra.mxu0 %v1880
    %1939 = vmatprep.subr.bf16.mxu0 0
    %1940 = vmatpush1.bf16.msra.mxu0 %v1878
    %1941 = vmatprep.subr.bf16.mxu0 0
    %1942 = vmatpush2.bf16.msra.mxu0 %v1908
    %1943 = vmatprep.subr.bf16.mxu0 0
    %1944 = vmatpush2.bf16.msra.mxu0 %v1906
    %1945 = vmatprep.subr.bf16.mxu0 0
    %1946 = vmatpush2.bf16.msra.mxu0 %v1904
    %1947 = vmatprep.subr.bf16.mxu0 0
    %1948 = vmatpush2.bf16.msra.mxu0 %v1902
    %1949 = vmatprep.subr.bf16.mxu0 0
    %1950 = vmatpush2.bf16.msra.mxu0 %v1900
    %1951 = vmatprep.subr.bf16.mxu0 0
    %1952 = vmatpush2.bf16.msra.mxu0 %v1898
    %1953 = vmatprep.subr.bf16.mxu0 0
    %1954 = vmatpush2.bf16.msra.mxu0 %v1896
    %1955 = vmatprep.subr.bf16.mxu0 0
    %1956 = vmatpush2.bf16.msra.mxu0 %v1894
    %1957 = vmatprep.mubr.bf16.mxu0 %v1846
    %1958 = vmatmul.mubr.bf16.gmra.mxu0 %v1845
    %v1959 = vpop.f32.mrf.mxu0
    %v1960 = vadd.f32 0.0, %v1959
    %v1961 = vpop.f32.mrf.mxu0
    %v1962 = vpop.f32.mrf.mxu0
    %v1963 = vadd.f32 0.0, %v1962
    %v1964 = vpop.f32.mrf.mxu0
    %1965 = vmatprep.mubr.bf16.mxu0 %v1848
    %1966 = vmatmul.mubr.bf16.gmra.mxu0 %v1847
    %v1967 = vpop.f32.mrf.mxu0
    %v1968 = vadd.f32 0.0, %v1967
    %v1969 = vpop.f32.mrf.mxu0
    %v1970 = vpop.f32.mrf.mxu0
    %v1971 = vadd.f32 0.0, %v1970
    %v1972 = vpop.f32.mrf.mxu0
    %1973 = vmatprep.mubr.bf16.mxu0 %v1850
    %1974 = vmatmul.mubr.bf16.gmra.mxu0 %v1849
    %v1975 = vpop.f32.mrf.mxu0
    %v1976 = vadd.f32 0.0, %v1975
    %v1977 = vpop.f32.mrf.mxu0
    %v1978 = vpop.f32.mrf.mxu0
    %v1979 = vadd.f32 0.0, %v1978
    %v1980 = vpop.f32.mrf.mxu0
    %1981 = vmatprep.mubr.bf16.mxu0 %v1852
    %1982 = vmatmul.mubr.bf16.gmra.mxu0 %v1851
    %v1983 = vpop.f32.mrf.mxu0
    %v1984 = vadd.f32 0.0, %v1983
    %v1985 = vpop.f32.mrf.mxu0
    %v1986 = vpop.f32.mrf.mxu0
    %v1987 = vadd.f32 0.0, %v1986
    %v1988 = vpop.f32.mrf.mxu0
    %1989 = vdwg.mxu0
    %v1990 = vadd.f32 %v1804, %v1960
    %v1991 = vadd.f32 %v1805, %v1963
    %v1992 = vadd.f32 %v1806, %v1968
    %v1993 = vadd.f32 %v1807, %v1971
    %v1994 = vadd.f32 %v1808, %v1976
    %v1995 = vadd.f32 %v1809, %v1979
    %v1996 = vadd.f32 %v1810, %v1984
    %v1997 = vadd.f32 %v1811, %v1987
    %s1998 = scalar_lea.vmem [#allocation2], 640
    %v1999 = vld [vmem:[%s1998] sm:$0xff]
    %v2000 = vld [vmem:[%s1998 + $0x8] sm:$0xff]
    %v2001 = vld [vmem:[%s1998 + $0x10] sm:$0xff]
    %v2002 = vld [vmem:[%s1998 + $0x18] sm:$0xff]
    %v2003 = vld [vmem:[%s1998 + $0x20] sm:$0xff]
    %v2004 = vld [vmem:[%s1998 + $0x28] sm:$0xff]
    %v2005 = vld [vmem:[%s1998 + $0x30] sm:$0xff]
    %v2006 = vld [vmem:[%s1998 + $0x38] sm:$0xff]
    %v2015 = vunpack.c.l.b16 %v1999
    %v2016 = vunpack.c.h.b16 %v1999
    %v2017 = vunpack.c.l.b16 %v2000
    %v2018 = vunpack.c.h.b16 %v2000
    %v2019 = vunpack.c.l.b16 %v2001
    %v2020 = vunpack.c.h.b16 %v2001
    %v2021 = vunpack.c.l.b16 %v2002
    %v2022 = vunpack.c.h.b16 %v2002
    %v2023 = vunpack.c.l.b16 %v2003
    %v2024 = vunpack.c.h.b16 %v2003
    %v2025 = vunpack.c.l.b16 %v2004
    %v2026 = vunpack.c.h.b16 %v2004
    %v2027 = vunpack.c.l.b16 %v2005
    %v2028 = vunpack.c.h.b16 %v2005
    %v2029 = vunpack.c.l.b16 %v2006
    %v2030 = vunpack.c.h.b16 %v2006
    %v2031 = vpack.c.b16 %v2017, %v2015
    %v2032 = vpack.c.b16 %v2018, %v2016
    %v2033 = vpack.c.b16 %v2021, %v2019
    %v2034 = vpack.c.b16 %v2022, %v2020
    %v2035 = vpack.c.b16 %v2025, %v2023
    %v2036 = vpack.c.b16 %v2026, %v2024
    %v2037 = vpack.c.b16 %v2029, %v2027
    %v2038 = vpack.c.b16 %v2030, %v2028
    %2047 = vrot.lane.b32.xlu0 %v348, 96
    %v2048 = vpop.permute.xlu0 %2047
    %2049 = vrot.lane.b32.xlu0 %v350, 96
    %v2050 = vpop.permute.xlu0 %2049
    %2051 = vrot.lane.b32.xlu0 %v352, 96
    %v2052 = vpop.permute.xlu0 %2051
    %2053 = vrot.lane.b32.xlu0 %v354, 96
    %v2054 = vpop.permute.xlu0 %2053
    %2055 = vrot.lane.b32.xlu0 %v356, 96
    %v2056 = vpop.permute.xlu0 %2055
    %2057 = vrot.lane.b32.xlu0 %v358, 96
    %v2058 = vpop.permute.xlu0 %2057
    %2059 = vrot.lane.b32.xlu0 %v360, 96
    %v2060 = vpop.permute.xlu0 %2059
    %2061 = vrot.lane.b32.xlu0 %v362, 96
    %v2062 = vpop.permute.xlu0 %2061
    %2063 = vrot.lane.b32.xlu0 %v364, 96
    %v2064 = vpop.permute.xlu0 %2063
    %2065 = vrot.lane.b32.xlu0 %v366, 96
    %v2066 = vpop.permute.xlu0 %2065
    %2067 = vrot.lane.b32.xlu0 %v368, 96
    %v2068 = vpop.permute.xlu0 %2067
    %2069 = vrot.lane.b32.xlu0 %v370, 96
    %v2070 = vpop.permute.xlu0 %2069
    %2071 = vrot.lane.b32.xlu0 %v372, 96
    %v2072 = vpop.permute.xlu0 %2071
    %2073 = vrot.lane.b32.xlu0 %v374, 96
    %v2074 = vpop.permute.xlu0 %2073
    %2075 = vrot.lane.b32.xlu0 %v376, 96
    %v2076 = vpop.permute.xlu0 %2075
    %2077 = vrot.lane.b32.xlu0 %v378, 96
    %v2078 = vpop.permute.xlu0 %2077
    %2095 = vmatprep.subr.bf16.mxu0 0
    %2096 = vmatpush1.bf16.msra.mxu0 %v2062
    %2097 = vmatprep.subr.bf16.mxu0 0
    %2098 = vmatpush1.bf16.msra.mxu0 %v2060
    %2099 = vmatprep.subr.bf16.mxu0 0
    %2100 = vmatpush1.bf16.msra.mxu0 %v2058
    %2101 = vmatprep.subr.bf16.mxu0 0
    %2102 = vmatpush1.bf16.msra.mxu0 %v2056
    %2103 = vmatprep.subr.bf16.mxu0 0
    %2104 = vmatpush1.bf16.msra.mxu0 %v2054
    %2105 = vmatprep.subr.bf16.mxu0 0
    %2106 = vmatpush1.bf16.msra.mxu0 %v2052
    %2107 = vmatprep.subr.bf16.mxu0 0
    %2108 = vmatpush1.bf16.msra.mxu0 %v2050
    %2109 = vmatprep.subr.bf16.mxu0 0
    %2110 = vmatpush1.bf16.msra.mxu0 %v2048
    %2111 = vmatprep.subr.bf16.mxu0 0
    %2112 = vmatpush2.bf16.msra.mxu0 %v2078
    %2113 = vmatprep.subr.bf16.mxu0 0
    %2114 = vmatpush2.bf16.msra.mxu0 %v2076
    %2115 = vmatprep.subr.bf16.mxu0 0
    %2116 = vmatpush2.bf16.msra.mxu0 %v2074
    %2117 = vmatprep.subr.bf16.mxu0 0
    %2118 = vmatpush2.bf16.msra.mxu0 %v2072
    %2119 = vmatprep.subr.bf16.mxu0 0
    %2120 = vmatpush2.bf16.msra.mxu0 %v2070
    %2121 = vmatprep.subr.bf16.mxu0 0
    %2122 = vmatpush2.bf16.msra.mxu0 %v2068
    %2123 = vmatprep.subr.bf16.mxu0 0
    %2124 = vmatpush2.bf16.msra.mxu0 %v2066
    %2125 = vmatprep.subr.bf16.mxu0 0
    %2126 = vmatpush2.bf16.msra.mxu0 %v2064
    %2127 = vmatprep.mubr.bf16.mxu0 %v2032
    %2128 = vmatmul.mubr.bf16.gmra.mxu0 %v2031
    %v2129 = vpop.f32.mrf.mxu0
    %v2130 = vadd.f32 0.0, %v2129
    %v2131 = vpop.f32.mrf.mxu0
    %v2132 = vpop.f32.mrf.mxu0
    %v2133 = vadd.f32 0.0, %v2132
    %v2134 = vpop.f32.mrf.mxu0
    %2135 = vmatprep.mubr.bf16.mxu0 %v2034
    %2136 = vmatmul.mubr.bf16.gmra.mxu0 %v2033
    %v2137 = vpop.f32.mrf.mxu0
    %v2138 = vadd.f32 0.0, %v2137
    %v2139 = vpop.f32.mrf.mxu0
    %v2140 = vpop.f32.mrf.mxu0
    %v2141 = vadd.f32 0.0, %v2140
    %v2142 = vpop.f32.mrf.mxu0
    %2143 = vmatprep.mubr.bf16.mxu0 %v2036
    %2144 = vmatmul.mubr.bf16.gmra.mxu0 %v2035
    %v2145 = vpop.f32.mrf.mxu0
    %v2146 = vadd.f32 0.0, %v2145
    %v2147 = vpop.f32.mrf.mxu0
    %v2148 = vpop.f32.mrf.mxu0
    %v2149 = vadd.f32 0.0, %v2148
    %v2150 = vpop.f32.mrf.mxu0
    %2151 = vmatprep.mubr.bf16.mxu0 %v2038
    %2152 = vmatmul.mubr.bf16.gmra.mxu0 %v2037
    %v2153 = vpop.f32.mrf.mxu0
    %v2154 = vadd.f32 0.0, %v2153
    %v2155 = vpop.f32.mrf.mxu0
    %v2156 = vpop.f32.mrf.mxu0
    %v2157 = vadd.f32 0.0, %v2156
    %v2158 = vpop.f32.mrf.mxu0
    %2159 = vdwg.mxu0
    %v2160 = vadd.f32 %v1990, %v2130
    %v2161 = vadd.f32 %v1991, %v2133
    %v2162 = vadd.f32 %v1992, %v2138
    %v2163 = vadd.f32 %v1993, %v2141
    %v2164 = vadd.f32 %v1994, %v2146
    %v2165 = vadd.f32 %v1995, %v2149
    %v2166 = vadd.f32 %v1996, %v2154
    %v2167 = vadd.f32 %v1997, %v2157
    %s2168 = scalar_lea.vmem [#allocation2], 704
    %v2169 = vld [vmem:[%s2168] sm:$0xff]
    %v2170 = vld [vmem:[%s2168 + $0x8] sm:$0xff]
    %v2171 = vld [vmem:[%s2168 + $0x10] sm:$0xff]
    %v2172 = vld [vmem:[%s2168 + $0x18] sm:$0xff]
    %v2173 = vld [vmem:[%s2168 + $0x20] sm:$0xff]
    %v2174 = vld [vmem:[%s2168 + $0x28] sm:$0xff]
    %v2175 = vld [vmem:[%s2168 + $0x30] sm:$0xff]
    %v2176 = vld [vmem:[%s2168 + $0x38] sm:$0xff]
    %v2185 = vunpack.c.l.b16 %v2169
    %v2186 = vunpack.c.h.b16 %v2169
    %v2187 = vunpack.c.l.b16 %v2170
    %v2188 = vunpack.c.h.b16 %v2170
    %v2189 = vunpack.c.l.b16 %v2171
    %v2190 = vunpack.c.h.b16 %v2171
    %v2191 = vunpack.c.l.b16 %v2172
    %v2192 = vunpack.c.h.b16 %v2172
    %v2193 = vunpack.c.l.b16 %v2173
    %v2194 = vunpack.c.h.b16 %v2173
    %v2195 = vunpack.c.l.b16 %v2174
    %v2196 = vunpack.c.h.b16 %v2174
    %v2197 = vunpack.c.l.b16 %v2175
    %v2198 = vunpack.c.h.b16 %v2175
    %v2199 = vunpack.c.l.b16 %v2176
    %v2200 = vunpack.c.h.b16 %v2176
    %v2201 = vpack.c.b16 %v2187, %v2185
    %v2202 = vpack.c.b16 %v2188, %v2186
    %v2203 = vpack.c.b16 %v2191, %v2189
    %v2204 = vpack.c.b16 %v2192, %v2190
    %v2205 = vpack.c.b16 %v2195, %v2193
    %v2206 = vpack.c.b16 %v2196, %v2194
    %v2207 = vpack.c.b16 %v2199, %v2197
    %v2208 = vpack.c.b16 %v2200, %v2198
    %2217 = vrot.lane.b32.xlu0 %v348, 80
    %v2218 = vpop.permute.xlu0 %2217
    %2219 = vrot.lane.b32.xlu0 %v350, 80
    %v2220 = vpop.permute.xlu0 %2219
    %2221 = vrot.lane.b32.xlu0 %v352, 80
    %v2222 = vpop.permute.xlu0 %2221
    %2223 = vrot.lane.b32.xlu0 %v354, 80
    %v2224 = vpop.permute.xlu0 %2223
    %2225 = vrot.lane.b32.xlu0 %v356, 80
    %v2226 = vpop.permute.xlu0 %2225
    %2227 = vrot.lane.b32.xlu0 %v358, 80
    %v2228 = vpop.permute.xlu0 %2227
    %2229 = vrot.lane.b32.xlu0 %v360, 80
    %v2230 = vpop.permute.xlu0 %2229
    %2231 = vrot.lane.b32.xlu0 %v362, 80
    %v2232 = vpop.permute.xlu0 %2231
    %2233 = vrot.lane.b32.xlu0 %v364, 80
    %v2234 = vpop.permute.xlu0 %2233
    %2235 = vrot.lane.b32.xlu0 %v366, 80
    %v2236 = vpop.permute.xlu0 %2235
    %2237 = vrot.lane.b32.xlu0 %v368, 80
    %v2238 = vpop.permute.xlu0 %2237
    %2239 = vrot.lane.b32.xlu0 %v370, 80
    %v2240 = vpop.permute.xlu0 %2239
    %2241 = vrot.lane.b32.xlu0 %v372, 80
    %v2242 = vpop.permute.xlu0 %2241
    %2243 = vrot.lane.b32.xlu0 %v374, 80
    %v2244 = vpop.permute.xlu0 %2243
    %2245 = vrot.lane.b32.xlu0 %v376, 80
    %v2246 = vpop.permute.xlu0 %2245
    %2247 = vrot.lane.b32.xlu0 %v378, 80
    %v2248 = vpop.permute.xlu0 %2247
    %2265 = vmatprep.subr.bf16.mxu0 0
    %2266 = vmatpush1.bf16.msra.mxu0 %v2232
    %2267 = vmatprep.subr.bf16.mxu0 0
    %2268 = vmatpush1.bf16.msra.mxu0 %v2230
    %2269 = vmatprep.subr.bf16.mxu0 0
    %2270 = vmatpush1.bf16.msra.mxu0 %v2228
    %2271 = vmatprep.subr.bf16.mxu0 0
    %2272 = vmatpush1.bf16.msra.mxu0 %v2226
    %2273 = vmatprep.subr.bf16.mxu0 0
    %2274 = vmatpush1.bf16.msra.mxu0 %v2224
    %2275 = vmatprep.subr.bf16.mxu0 0
    %2276 = vmatpush1.bf16.msra.mxu0 %v2222
    %2277 = vmatprep.subr.bf16.mxu0 0
    %2278 = vmatpush1.bf16.msra.mxu0 %v2220
    %2279 = vmatprep.subr.bf16.mxu0 0
    %2280 = vmatpush1.bf16.msra.mxu0 %v2218
    %2281 = vmatprep.subr.bf16.mxu0 0
    %2282 = vmatpush2.bf16.msra.mxu0 %v2248
    %2283 = vmatprep.subr.bf16.mxu0 0
    %2284 = vmatpush2.bf16.msra.mxu0 %v2246
    %2285 = vmatprep.subr.bf16.mxu0 0
    %2286 = vmatpush2.bf16.msra.mxu0 %v2244
    %2287 = vmatprep.subr.bf16.mxu0 0
    %2288 = vmatpush2.bf16.msra.mxu0 %v2242
    %2289 = vmatprep.subr.bf16.mxu0 0
    %2290 = vmatpush2.bf16.msra.mxu0 %v2240
    %2291 = vmatprep.subr.bf16.mxu0 0
    %2292 = vmatpush2.bf16.msra.mxu0 %v2238
    %2293 = vmatprep.subr.bf16.mxu0 0
    %2294 = vmatpush2.bf16.msra.mxu0 %v2236
    %2295 = vmatprep.subr.bf16.mxu0 0
    %2296 = vmatpush2.bf16.msra.mxu0 %v2234
    %2297 = vmatprep.mubr.bf16.mxu0 %v2202
    %2298 = vmatmul.mubr.bf16.gmra.mxu0 %v2201
    %v2299 = vpop.f32.mrf.mxu0
    %v2300 = vadd.f32 0.0, %v2299
    %v2301 = vpop.f32.mrf.mxu0
    %v2302 = vpop.f32.mrf.mxu0
    %v2303 = vadd.f32 0.0, %v2302
    %v2304 = vpop.f32.mrf.mxu0
    %2305 = vmatprep.mubr.bf16.mxu0 %v2204
    %2306 = vmatmul.mubr.bf16.gmra.mxu0 %v2203
    %v2307 = vpop.f32.mrf.mxu0
    %v2308 = vadd.f32 0.0, %v2307
    %v2309 = vpop.f32.mrf.mxu0
    %v2310 = vpop.f32.mrf.mxu0
    %v2311 = vadd.f32 0.0, %v2310
    %v2312 = vpop.f32.mrf.mxu0
    %2313 = vmatprep.mubr.bf16.mxu0 %v2206
    %2314 = vmatmul.mubr.bf16.gmra.mxu0 %v2205
    %v2315 = vpop.f32.mrf.mxu0
    %v2316 = vadd.f32 0.0, %v2315
    %v2317 = vpop.f32.mrf.mxu0
    %v2318 = vpop.f32.mrf.mxu0
    %v2319 = vadd.f32 0.0, %v2318
    %v2320 = vpop.f32.mrf.mxu0
    %2321 = vmatprep.mubr.bf16.mxu0 %v2208
    %2322 = vmatmul.mubr.bf16.gmra.mxu0 %v2207
    %v2323 = vpop.f32.mrf.mxu0
    %v2324 = vadd.f32 0.0, %v2323
    %v2325 = vpop.f32.mrf.mxu0
    %v2326 = vpop.f32.mrf.mxu0
    %v2327 = vadd.f32 0.0, %v2326
    %v2328 = vpop.f32.mrf.mxu0
    %2329 = vdwg.mxu0
    %v2330 = vadd.f32 %v2160, %v2300
    %v2331 = vadd.f32 %v2161, %v2303
    %v2332 = vadd.f32 %v2162, %v2308
    %v2333 = vadd.f32 %v2163, %v2311
    %v2334 = vadd.f32 %v2164, %v2316
    %v2335 = vadd.f32 %v2165, %v2319
    %v2336 = vadd.f32 %v2166, %v2324
    %v2337 = vadd.f32 %v2167, %v2327
    %s2338 = scalar_lea.vmem [#allocation2], 768
    %v2339 = vld [vmem:[%s2338] sm:$0xff]
    %v2340 = vld [vmem:[%s2338 + $0x8] sm:$0xff]
    %v2341 = vld [vmem:[%s2338 + $0x10] sm:$0xff]
    %v2342 = vld [vmem:[%s2338 + $0x18] sm:$0xff]
    %v2343 = vld [vmem:[%s2338 + $0x20] sm:$0xff]
    %v2344 = vld [vmem:[%s2338 + $0x28] sm:$0xff]
    %v2345 = vld [vmem:[%s2338 + $0x30] sm:$0xff]
    %v2346 = vld [vmem:[%s2338 + $0x38] sm:$0xff]
    %v2355 = vunpack.c.l.b16 %v2339
    %v2356 = vunpack.c.h.b16 %v2339
    %v2357 = vunpack.c.l.b16 %v2340
    %v2358 = vunpack.c.h.b16 %v2340
    %v2359 = vunpack.c.l.b16 %v2341
    %v2360 = vunpack.c.h.b16 %v2341
    %v2361 = vunpack.c.l.b16 %v2342
    %v2362 = vunpack.c.h.b16 %v2342
    %v2363 = vunpack.c.l.b16 %v2343
    %v2364 = vunpack.c.h.b16 %v2343
    %v2365 = vunpack.c.l.b16 %v2344
    %v2366 = vunpack.c.h.b16 %v2344
    %v2367 = vunpack.c.l.b16 %v2345
    %v2368 = vunpack.c.h.b16 %v2345
    %v2369 = vunpack.c.l.b16 %v2346
    %v2370 = vunpack.c.h.b16 %v2346
    %v2371 = vpack.c.b16 %v2357, %v2355
    %v2372 = vpack.c.b16 %v2358, %v2356
    %v2373 = vpack.c.b16 %v2361, %v2359
    %v2374 = vpack.c.b16 %v2362, %v2360
    %v2375 = vpack.c.b16 %v2365, %v2363
    %v2376 = vpack.c.b16 %v2366, %v2364
    %v2377 = vpack.c.b16 %v2369, %v2367
    %v2378 = vpack.c.b16 %v2370, %v2368
    %2387 = vrot.lane.b32.xlu0 %v348, 64
    %v2388 = vpop.permute.xlu0 %2387
    %2389 = vrot.lane.b32.xlu0 %v350, 64
    %v2390 = vpop.permute.xlu0 %2389
    %2391 = vrot.lane.b32.xlu0 %v352, 64
    %v2392 = vpop.permute.xlu0 %2391
    %2393 = vrot.lane.b32.xlu0 %v354, 64
    %v2394 = vpop.permute.xlu0 %2393
    %2395 = vrot.lane.b32.xlu0 %v356, 64
    %v2396 = vpop.permute.xlu0 %2395
    %2397 = vrot.lane.b32.xlu0 %v358, 64
    %v2398 = vpop.permute.xlu0 %2397
    %2399 = vrot.lane.b32.xlu0 %v360, 64
    %v2400 = vpop.permute.xlu0 %2399
    %2401 = vrot.lane.b32.xlu0 %v362, 64
    %v2402 = vpop.permute.xlu0 %2401
    %2403 = vrot.lane.b32.xlu0 %v364, 64
    %v2404 = vpop.permute.xlu0 %2403
    %2405 = vrot.lane.b32.xlu0 %v366, 64
    %v2406 = vpop.permute.xlu0 %2405
    %2407 = vrot.lane.b32.xlu0 %v368, 64
    %v2408 = vpop.permute.xlu0 %2407
    %2409 = vrot.lane.b32.xlu0 %v370, 64
    %v2410 = vpop.permute.xlu0 %2409
    %2411 = vrot.lane.b32.xlu0 %v372, 64
    %v2412 = vpop.permute.xlu0 %2411
    %2413 = vrot.lane.b32.xlu0 %v374, 64
    %v2414 = vpop.permute.xlu0 %2413
    %2415 = vrot.lane.b32.xlu0 %v376, 64
    %v2416 = vpop.permute.xlu0 %2415
    %2417 = vrot.lane.b32.xlu0 %v378, 64
    %v2418 = vpop.permute.xlu0 %2417
    %2435 = vmatprep.subr.bf16.mxu0 0
    %2436 = vmatpush1.bf16.msra.mxu0 %v2402
    %2437 = vmatprep.subr.bf16.mxu0 0
    %2438 = vmatpush1.bf16.msra.mxu0 %v2400
    %2439 = vmatprep.subr.bf16.mxu0 0
    %2440 = vmatpush1.bf16.msra.mxu0 %v2398
    %2441 = vmatprep.subr.bf16.mxu0 0
    %2442 = vmatpush1.bf16.msra.mxu0 %v2396
    %2443 = vmatprep.subr.bf16.mxu0 0
    %2444 = vmatpush1.bf16.msra.mxu0 %v2394
    %2445 = vmatprep.subr.bf16.mxu0 0
    %2446 = vmatpush1.bf16.msra.mxu0 %v2392
    %2447 = vmatprep.subr.bf16.mxu0 0
    %2448 = vmatpush1.bf16.msra.mxu0 %v2390
    %2449 = vmatprep.subr.bf16.mxu0 0
    %2450 = vmatpush1.bf16.msra.mxu0 %v2388
    %2451 = vmatprep.subr.bf16.mxu0 0
    %2452 = vmatpush2.bf16.msra.mxu0 %v2418
    %2453 = vmatprep.subr.bf16.mxu0 0
    %2454 = vmatpush2.bf16.msra.mxu0 %v2416
    %2455 = vmatprep.subr.bf16.mxu0 0
    %2456 = vmatpush2.bf16.msra.mxu0 %v2414
    %2457 = vmatprep.subr.bf16.mxu0 0
    %2458 = vmatpush2.bf16.msra.mxu0 %v2412
    %2459 = vmatprep.subr.bf16.mxu0 0
    %2460 = vmatpush2.bf16.msra.mxu0 %v2410
    %2461 = vmatprep.subr.bf16.mxu0 0
    %2462 = vmatpush2.bf16.msra.mxu0 %v2408
    %2463 = vmatprep.subr.bf16.mxu0 0
    %2464 = vmatpush2.bf16.msra.mxu0 %v2406
    %2465 = vmatprep.subr.bf16.mxu0 0
    %2466 = vmatpush2.bf16.msra.mxu0 %v2404
    %2467 = vmatprep.mubr.bf16.mxu0 %v2372
    %2468 = vmatmul.mubr.bf16.gmra.mxu0 %v2371
    %v2469 = vpop.f32.mrf.mxu0
    %v2470 = vadd.f32 0.0, %v2469
    %v2471 = vpop.f32.mrf.mxu0
    %v2472 = vpop.f32.mrf.mxu0
    %v2473 = vadd.f32 0.0, %v2472
    %v2474 = vpop.f32.mrf.mxu0
    %2475 = vmatprep.mubr.bf16.mxu0 %v2374
    %2476 = vmatmul.mubr.bf16.gmra.mxu0 %v2373
    %v2477 = vpop.f32.mrf.mxu0
    %v2478 = vadd.f32 0.0, %v2477
    %v2479 = vpop.f32.mrf.mxu0
    %v2480 = vpop.f32.mrf.mxu0
    %v2481 = vadd.f32 0.0, %v2480
    %v2482 = vpop.f32.mrf.mxu0
    %2483 = vmatprep.mubr.bf16.mxu0 %v2376
    %2484 = vmatmul.mubr.bf16.gmra.mxu0 %v2375
    %v2485 = vpop.f32.mrf.mxu0
    %v2486 = vadd.f32 0.0, %v2485
    %v2487 = vpop.f32.mrf.mxu0
    %v2488 = vpop.f32.mrf.mxu0
    %v2489 = vadd.f32 0.0, %v2488
    %v2490 = vpop.f32.mrf.mxu0
    %2491 = vmatprep.mubr.bf16.mxu0 %v2378
    %2492 = vmatmul.mubr.bf16.gmra.mxu0 %v2377
    %v2493 = vpop.f32.mrf.mxu0
    %v2494 = vadd.f32 0.0, %v2493
    %v2495 = vpop.f32.mrf.mxu0
    %v2496 = vpop.f32.mrf.mxu0
    %v2497 = vadd.f32 0.0, %v2496
    %v2498 = vpop.f32.mrf.mxu0
    %2499 = vdwg.mxu0
    %v2500 = vadd.f32 %v2330, %v2470
    %v2501 = vadd.f32 %v2331, %v2473
    %v2502 = vadd.f32 %v2332, %v2478
    %v2503 = vadd.f32 %v2333, %v2481
    %v2504 = vadd.f32 %v2334, %v2486
    %v2505 = vadd.f32 %v2335, %v2489
    %v2506 = vadd.f32 %v2336, %v2494
    %v2507 = vadd.f32 %v2337, %v2497
    %s2508 = scalar_lea.vmem [#allocation2], 832
    %v2509 = vld [vmem:[%s2508] sm:$0xff]
    %v2510 = vld [vmem:[%s2508 + $0x8] sm:$0xff]
    %v2511 = vld [vmem:[%s2508 + $0x10] sm:$0xff]
    %v2512 = vld [vmem:[%s2508 + $0x18] sm:$0xff]
    %v2513 = vld [vmem:[%s2508 + $0x20] sm:$0xff]
    %v2514 = vld [vmem:[%s2508 + $0x28] sm:$0xff]
    %v2515 = vld [vmem:[%s2508 + $0x30] sm:$0xff]
    %v2516 = vld [vmem:[%s2508 + $0x38] sm:$0xff]
    %v2525 = vunpack.c.l.b16 %v2509
    %v2526 = vunpack.c.h.b16 %v2509
    %v2527 = vunpack.c.l.b16 %v2510
    %v2528 = vunpack.c.h.b16 %v2510
    %v2529 = vunpack.c.l.b16 %v2511
    %v2530 = vunpack.c.h.b16 %v2511
    %v2531 = vunpack.c.l.b16 %v2512
    %v2532 = vunpack.c.h.b16 %v2512
    %v2533 = vunpack.c.l.b16 %v2513
    %v2534 = vunpack.c.h.b16 %v2513
    %v2535 = vunpack.c.l.b16 %v2514
    %v2536 = vunpack.c.h.b16 %v2514
    %v2537 = vunpack.c.l.b16 %v2515
    %v2538 = vunpack.c.h.b16 %v2515
    %v2539 = vunpack.c.l.b16 %v2516
    %v2540 = vunpack.c.h.b16 %v2516
    %v2541 = vpack.c.b16 %v2527, %v2525
    %v2542 = vpack.c.b16 %v2528, %v2526
    %v2543 = vpack.c.b16 %v2531, %v2529
    %v2544 = vpack.c.b16 %v2532, %v2530
    %v2545 = vpack.c.b16 %v2535, %v2533
    %v2546 = vpack.c.b16 %v2536, %v2534
    %v2547 = vpack.c.b16 %v2539, %v2537
    %v2548 = vpack.c.b16 %v2540, %v2538
    %2557 = vrot.lane.b32.xlu0 %v348, 48
    %v2558 = vpop.permute.xlu0 %2557
    %2559 = vrot.lane.b32.xlu0 %v350, 48
    %v2560 = vpop.permute.xlu0 %2559
    %2561 = vrot.lane.b32.xlu0 %v352, 48
    %v2562 = vpop.permute.xlu0 %2561
    %2563 = vrot.lane.b32.xlu0 %v354, 48
    %v2564 = vpop.permute.xlu0 %2563
    %2565 = vrot.lane.b32.xlu0 %v356, 48
    %v2566 = vpop.permute.xlu0 %2565
    %2567 = vrot.lane.b32.xlu0 %v358, 48
    %v2568 = vpop.permute.xlu0 %2567
    %2569 = vrot.lane.b32.xlu0 %v360, 48
    %v2570 = vpop.permute.xlu0 %2569
    %2571 = vrot.lane.b32.xlu0 %v362, 48
    %v2572 = vpop.permute.xlu0 %2571
    %2573 = vrot.lane.b32.xlu0 %v364, 48
    %v2574 = vpop.permute.xlu0 %2573
    %2575 = vrot.lane.b32.xlu0 %v366, 48
    %v2576 = vpop.permute.xlu0 %2575
    %2577 = vrot.lane.b32.xlu0 %v368, 48
    %v2578 = vpop.permute.xlu0 %2577
    %2579 = vrot.lane.b32.xlu0 %v370, 48
    %v2580 = vpop.permute.xlu0 %2579
    %2581 = vrot.lane.b32.xlu0 %v372, 48
    %v2582 = vpop.permute.xlu0 %2581
    %2583 = vrot.lane.b32.xlu0 %v374, 48
    %v2584 = vpop.permute.xlu0 %2583
    %2585 = vrot.lane.b32.xlu0 %v376, 48
    %v2586 = vpop.permute.xlu0 %2585
    %2587 = vrot.lane.b32.xlu0 %v378, 48
    %v2588 = vpop.permute.xlu0 %2587
    %2605 = vmatprep.subr.bf16.mxu0 0
    %2606 = vmatpush1.bf16.msra.mxu0 %v2572
    %2607 = vmatprep.subr.bf16.mxu0 0
    %2608 = vmatpush1.bf16.msra.mxu0 %v2570
    %2609 = vmatprep.subr.bf16.mxu0 0
    %2610 = vmatpush1.bf16.msra.mxu0 %v2568
    %2611 = vmatprep.subr.bf16.mxu0 0
    %2612 = vmatpush1.bf16.msra.mxu0 %v2566
    %2613 = vmatprep.subr.bf16.mxu0 0
    %2614 = vmatpush1.bf16.msra.mxu0 %v2564
    %2615 = vmatprep.subr.bf16.mxu0 0
    %2616 = vmatpush1.bf16.msra.mxu0 %v2562
    %2617 = vmatprep.subr.bf16.mxu0 0
    %2618 = vmatpush1.bf16.msra.mxu0 %v2560
    %2619 = vmatprep.subr.bf16.mxu0 0
    %2620 = vmatpush1.bf16.msra.mxu0 %v2558
    %2621 = vmatprep.subr.bf16.mxu0 0
    %2622 = vmatpush2.bf16.msra.mxu0 %v2588
    %2623 = vmatprep.subr.bf16.mxu0 0
    %2624 = vmatpush2.bf16.msra.mxu0 %v2586
    %2625 = vmatprep.subr.bf16.mxu0 0
    %2626 = vmatpush2.bf16.msra.mxu0 %v2584
    %2627 = vmatprep.subr.bf16.mxu0 0
    %2628 = vmatpush2.bf16.msra.mxu0 %v2582
    %2629 = vmatprep.subr.bf16.mxu0 0
    %2630 = vmatpush2.bf16.msra.mxu0 %v2580
    %2631 = vmatprep.subr.bf16.mxu0 0
    %2632 = vmatpush2.bf16.msra.mxu0 %v2578
    %2633 = vmatprep.subr.bf16.mxu0 0
    %2634 = vmatpush2.bf16.msra.mxu0 %v2576
    %2635 = vmatprep.subr.bf16.mxu0 0
    %2636 = vmatpush2.bf16.msra.mxu0 %v2574
    %2637 = vmatprep.mubr.bf16.mxu0 %v2542
    %2638 = vmatmul.mubr.bf16.gmra.mxu0 %v2541
    %v2639 = vpop.f32.mrf.mxu0
    %v2640 = vadd.f32 0.0, %v2639
    %v2641 = vpop.f32.mrf.mxu0
    %v2642 = vpop.f32.mrf.mxu0
    %v2643 = vadd.f32 0.0, %v2642
    %v2644 = vpop.f32.mrf.mxu0
    %2645 = vmatprep.mubr.bf16.mxu0 %v2544
    %2646 = vmatmul.mubr.bf16.gmra.mxu0 %v2543
    %v2647 = vpop.f32.mrf.mxu0
    %v2648 = vadd.f32 0.0, %v2647
    %v2649 = vpop.f32.mrf.mxu0
    %v2650 = vpop.f32.mrf.mxu0
    %v2651 = vadd.f32 0.0, %v2650
    %v2652 = vpop.f32.mrf.mxu0
    %2653 = vmatprep.mubr.bf16.mxu0 %v2546
    %2654 = vmatmul.mubr.bf16.gmra.mxu0 %v2545
    %v2655 = vpop.f32.mrf.mxu0
    %v2656 = vadd.f32 0.0, %v2655
    %v2657 = vpop.f32.mrf.mxu0
    %v2658 = vpop.f32.mrf.mxu0
    %v2659 = vadd.f32 0.0, %v2658
    %v2660 = vpop.f32.mrf.mxu0
    %2661 = vmatprep.mubr.bf16.mxu0 %v2548
    %2662 = vmatmul.mubr.bf16.gmra.mxu0 %v2547
    %v2663 = vpop.f32.mrf.mxu0
    %v2664 = vadd.f32 0.0, %v2663
    %v2665 = vpop.f32.mrf.mxu0
    %v2666 = vpop.f32.mrf.mxu0
    %v2667 = vadd.f32 0.0, %v2666
    %v2668 = vpop.f32.mrf.mxu0
    %2669 = vdwg.mxu0
    %v2670 = vadd.f32 %v2500, %v2640
    %v2671 = vadd.f32 %v2501, %v2643
    %v2672 = vadd.f32 %v2502, %v2648
    %v2673 = vadd.f32 %v2503, %v2651
    %v2674 = vadd.f32 %v2504, %v2656
    %v2675 = vadd.f32 %v2505, %v2659
    %v2676 = vadd.f32 %v2506, %v2664
    %v2677 = vadd.f32 %v2507, %v2667
    %s2678 = scalar_lea.vmem [#allocation2], 896
    %v2679 = vld [vmem:[%s2678] sm:$0xff]
    %v2680 = vld [vmem:[%s2678 + $0x8] sm:$0xff]
    %v2681 = vld [vmem:[%s2678 + $0x10] sm:$0xff]
    %v2682 = vld [vmem:[%s2678 + $0x18] sm:$0xff]
    %v2683 = vld [vmem:[%s2678 + $0x20] sm:$0xff]
    %v2684 = vld [vmem:[%s2678 + $0x28] sm:$0xff]
    %v2685 = vld [vmem:[%s2678 + $0x30] sm:$0xff]
    %v2686 = vld [vmem:[%s2678 + $0x38] sm:$0xff]
    %v2695 = vunpack.c.l.b16 %v2679
    %v2696 = vunpack.c.h.b16 %v2679
    %v2697 = vunpack.c.l.b16 %v2680
    %v2698 = vunpack.c.h.b16 %v2680
    %v2699 = vunpack.c.l.b16 %v2681
    %v2700 = vunpack.c.h.b16 %v2681
    %v2701 = vunpack.c.l.b16 %v2682
    %v2702 = vunpack.c.h.b16 %v2682
    %v2703 = vunpack.c.l.b16 %v2683
    %v2704 = vunpack.c.h.b16 %v2683
    %v2705 = vunpack.c.l.b16 %v2684
    %v2706 = vunpack.c.h.b16 %v2684
    %v2707 = vunpack.c.l.b16 %v2685
    %v2708 = vunpack.c.h.b16 %v2685
    %v2709 = vunpack.c.l.b16 %v2686
    %v2710 = vunpack.c.h.b16 %v2686
    %v2711 = vpack.c.b16 %v2697, %v2695
    %v2712 = vpack.c.b16 %v2698, %v2696
    %v2713 = vpack.c.b16 %v2701, %v2699
    %v2714 = vpack.c.b16 %v2702, %v2700
    %v2715 = vpack.c.b16 %v2705, %v2703
    %v2716 = vpack.c.b16 %v2706, %v2704
    %v2717 = vpack.c.b16 %v2709, %v2707
    %v2718 = vpack.c.b16 %v2710, %v2708
    %2727 = vrot.lane.b32.xlu0 %v348, 32
    %v2728 = vpop.permute.xlu0 %2727
    %2729 = vrot.lane.b32.xlu0 %v350, 32
    %v2730 = vpop.permute.xlu0 %2729
    %2731 = vrot.lane.b32.xlu0 %v352, 32
    %v2732 = vpop.permute.xlu0 %2731
    %2733 = vrot.lane.b32.xlu0 %v354, 32
    %v2734 = vpop.permute.xlu0 %2733
    %2735 = vrot.lane.b32.xlu0 %v356, 32
    %v2736 = vpop.permute.xlu0 %2735
    %2737 = vrot.lane.b32.xlu0 %v358, 32
    %v2738 = vpop.permute.xlu0 %2737
    %2739 = vrot.lane.b32.xlu0 %v360, 32
    %v2740 = vpop.permute.xlu0 %2739
    %2741 = vrot.lane.b32.xlu0 %v362, 32
    %v2742 = vpop.permute.xlu0 %2741
    %2743 = vrot.lane.b32.xlu0 %v364, 32
    %v2744 = vpop.permute.xlu0 %2743
    %2745 = vrot.lane.b32.xlu0 %v366, 32
    %v2746 = vpop.permute.xlu0 %2745
    %2747 = vrot.lane.b32.xlu0 %v368, 32
    %v2748 = vpop.permute.xlu0 %2747
    %2749 = vrot.lane.b32.xlu0 %v370, 32
    %v2750 = vpop.permute.xlu0 %2749
    %2751 = vrot.lane.b32.xlu0 %v372, 32
    %v2752 = vpop.permute.xlu0 %2751
    %2753 = vrot.lane.b32.xlu0 %v374, 32
    %v2754 = vpop.permute.xlu0 %2753
    %2755 = vrot.lane.b32.xlu0 %v376, 32
    %v2756 = vpop.permute.xlu0 %2755
    %2757 = vrot.lane.b32.xlu0 %v378, 32
    %v2758 = vpop.permute.xlu0 %2757
    %2775 = vmatprep.subr.bf16.mxu0 0
    %2776 = vmatpush1.bf16.msra.mxu0 %v2742
    %2777 = vmatprep.subr.bf16.mxu0 0
    %2778 = vmatpush1.bf16.msra.mxu0 %v2740
    %2779 = vmatprep.subr.bf16.mxu0 0
    %2780 = vmatpush1.bf16.msra.mxu0 %v2738
    %2781 = vmatprep.subr.bf16.mxu0 0
    %2782 = vmatpush1.bf16.msra.mxu0 %v2736
    %2783 = vmatprep.subr.bf16.mxu0 0
    %2784 = vmatpush1.bf16.msra.mxu0 %v2734
    %2785 = vmatprep.subr.bf16.mxu0 0
    %2786 = vmatpush1.bf16.msra.mxu0 %v2732
    %2787 = vmatprep.subr.bf16.mxu0 0
    %2788 = vmatpush1.bf16.msra.mxu0 %v2730
    %2789 = vmatprep.subr.bf16.mxu0 0
    %2790 = vmatpush1.bf16.msra.mxu0 %v2728
    %2791 = vmatprep.subr.bf16.mxu0 0
    %2792 = vmatpush2.bf16.msra.mxu0 %v2758
    %2793 = vmatprep.subr.bf16.mxu0 0
    %2794 = vmatpush2.bf16.msra.mxu0 %v2756
    %2795 = vmatprep.subr.bf16.mxu0 0
    %2796 = vmatpush2.bf16.msra.mxu0 %v2754
    %2797 = vmatprep.subr.bf16.mxu0 0
    %2798 = vmatpush2.bf16.msra.mxu0 %v2752
    %2799 = vmatprep.subr.bf16.mxu0 0
    %2800 = vmatpush2.bf16.msra.mxu0 %v2750
    %2801 = vmatprep.subr.bf16.mxu0 0
    %2802 = vmatpush2.bf16.msra.mxu0 %v2748
    %2803 = vmatprep.subr.bf16.mxu0 0
    %2804 = vmatpush2.bf16.msra.mxu0 %v2746
    %2805 = vmatprep.subr.bf16.mxu0 0
    %2806 = vmatpush2.bf16.msra.mxu0 %v2744
    %2807 = vmatprep.mubr.bf16.mxu0 %v2712
    %2808 = vmatmul.mubr.bf16.gmra.mxu0 %v2711
    %v2809 = vpop.f32.mrf.mxu0
    %v2810 = vadd.f32 0.0, %v2809
    %v2811 = vpop.f32.mrf.mxu0
    %v2812 = vpop.f32.mrf.mxu0
    %v2813 = vadd.f32 0.0, %v2812
    %v2814 = vpop.f32.mrf.mxu0
    %2815 = vmatprep.mubr.bf16.mxu0 %v2714
    %2816 = vmatmul.mubr.bf16.gmra.mxu0 %v2713
    %v2817 = vpop.f32.mrf.mxu0
    %v2818 = vadd.f32 0.0, %v2817
    %v2819 = vpop.f32.mrf.mxu0
    %v2820 = vpop.f32.mrf.mxu0
    %v2821 = vadd.f32 0.0, %v2820
    %v2822 = vpop.f32.mrf.mxu0
    %2823 = vmatprep.mubr.bf16.mxu0 %v2716
    %2824 = vmatmul.mubr.bf16.gmra.mxu0 %v2715
    %v2825 = vpop.f32.mrf.mxu0
    %v2826 = vadd.f32 0.0, %v2825
    %v2827 = vpop.f32.mrf.mxu0
    %v2828 = vpop.f32.mrf.mxu0
    %v2829 = vadd.f32 0.0, %v2828
    %v2830 = vpop.f32.mrf.mxu0
    %2831 = vmatprep.mubr.bf16.mxu0 %v2718
    %2832 = vmatmul.mubr.bf16.gmra.mxu0 %v2717
    %v2833 = vpop.f32.mrf.mxu0
    %v2834 = vadd.f32 0.0, %v2833
    %v2835 = vpop.f32.mrf.mxu0
    %v2836 = vpop.f32.mrf.mxu0
    %v2837 = vadd.f32 0.0, %v2836
    %v2838 = vpop.f32.mrf.mxu0
    %2839 = vdwg.mxu0
    %v2840 = vadd.f32 %v2670, %v2810
    %v2841 = vadd.f32 %v2671, %v2813
    %v2842 = vadd.f32 %v2672, %v2818
    %v2843 = vadd.f32 %v2673, %v2821
    %v2844 = vadd.f32 %v2674, %v2826
    %v2845 = vadd.f32 %v2675, %v2829
    %v2846 = vadd.f32 %v2676, %v2834
    %v2847 = vadd.f32 %v2677, %v2837
    %s2848 = scalar_lea.vmem [#allocation2], 960
    %v2849 = vld [vmem:[%s2848] sm:$0xff]
    %v2850 = vld [vmem:[%s2848 + $0x8] sm:$0xff]
    %v2851 = vld [vmem:[%s2848 + $0x10] sm:$0xff]
    %v2852 = vld [vmem:[%s2848 + $0x18] sm:$0xff]
    %v2853 = vld [vmem:[%s2848 + $0x20] sm:$0xff]
    %v2854 = vld [vmem:[%s2848 + $0x28] sm:$0xff]
    %v2855 = vld [vmem:[%s2848 + $0x30] sm:$0xff]
    %v2856 = vld [vmem:[%s2848 + $0x38] sm:$0xff]
    %v2865 = vunpack.c.l.b16 %v2849
    %v2866 = vunpack.c.h.b16 %v2849
    %v2867 = vunpack.c.l.b16 %v2850
    %v2868 = vunpack.c.h.b16 %v2850
    %v2869 = vunpack.c.l.b16 %v2851
    %v2870 = vunpack.c.h.b16 %v2851
    %v2871 = vunpack.c.l.b16 %v2852
    %v2872 = vunpack.c.h.b16 %v2852
    %v2873 = vunpack.c.l.b16 %v2853
    %v2874 = vunpack.c.h.b16 %v2853
    %v2875 = vunpack.c.l.b16 %v2854
    %v2876 = vunpack.c.h.b16 %v2854
    %v2877 = vunpack.c.l.b16 %v2855
    %v2878 = vunpack.c.h.b16 %v2855
    %v2879 = vunpack.c.l.b16 %v2856
    %v2880 = vunpack.c.h.b16 %v2856
    %v2881 = vpack.c.b16 %v2867, %v2865
    %v2882 = vpack.c.b16 %v2868, %v2866
    %v2883 = vpack.c.b16 %v2871, %v2869
    %v2884 = vpack.c.b16 %v2872, %v2870
    %v2885 = vpack.c.b16 %v2875, %v2873
    %v2886 = vpack.c.b16 %v2876, %v2874
    %v2887 = vpack.c.b16 %v2879, %v2877
    %v2888 = vpack.c.b16 %v2880, %v2878
    %2897 = vrot.lane.b32.xlu0 %v348, 16
    %v2898 = vpop.permute.xlu0 %2897
    %2899 = vrot.lane.b32.xlu0 %v350, 16
    %v2900 = vpop.permute.xlu0 %2899
    %2901 = vrot.lane.b32.xlu0 %v352, 16
    %v2902 = vpop.permute.xlu0 %2901
    %2903 = vrot.lane.b32.xlu0 %v354, 16
    %v2904 = vpop.permute.xlu0 %2903
    %2905 = vrot.lane.b32.xlu0 %v356, 16
    %v2906 = vpop.permute.xlu0 %2905
    %2907 = vrot.lane.b32.xlu0 %v358, 16
    %v2908 = vpop.permute.xlu0 %2907
    %2909 = vrot.lane.b32.xlu0 %v360, 16
    %v2910 = vpop.permute.xlu0 %2909
    %2911 = vrot.lane.b32.xlu0 %v362, 16
    %v2912 = vpop.permute.xlu0 %2911
    %2913 = vrot.lane.b32.xlu0 %v364, 16
    %v2914 = vpop.permute.xlu0 %2913
    %2915 = vrot.lane.b32.xlu0 %v366, 16
    %v2916 = vpop.permute.xlu0 %2915
    %2917 = vrot.lane.b32.xlu0 %v368, 16
    %v2918 = vpop.permute.xlu0 %2917
    %2919 = vrot.lane.b32.xlu0 %v370, 16
    %v2920 = vpop.permute.xlu0 %2919
    %2921 = vrot.lane.b32.xlu0 %v372, 16
    %v2922 = vpop.permute.xlu0 %2921
    %2923 = vrot.lane.b32.xlu0 %v374, 16
    %v2924 = vpop.permute.xlu0 %2923
    %2925 = vrot.lane.b32.xlu0 %v376, 16
    %v2926 = vpop.permute.xlu0 %2925
    %2927 = vrot.lane.b32.xlu0 %v378, 16
    %v2928 = vpop.permute.xlu0 %2927
    %2945 = vmatprep.subr.bf16.mxu0 0
    %2946 = vmatpush1.bf16.msra.mxu0 %v2912
    %2947 = vmatprep.subr.bf16.mxu0 0
    %2948 = vmatpush1.bf16.msra.mxu0 %v2910
    %2949 = vmatprep.subr.bf16.mxu0 0
    %2950 = vmatpush1.bf16.msra.mxu0 %v2908
    %2951 = vmatprep.subr.bf16.mxu0 0
    %2952 = vmatpush1.bf16.msra.mxu0 %v2906
    %2953 = vmatprep.subr.bf16.mxu0 0
    %2954 = vmatpush1.bf16.msra.mxu0 %v2904
    %2955 = vmatprep.subr.bf16.mxu0 0
    %2956 = vmatpush1.bf16.msra.mxu0 %v2902
    %2957 = vmatprep.subr.bf16.mxu0 0
    %2958 = vmatpush1.bf16.msra.mxu0 %v2900
    %2959 = vmatprep.subr.bf16.mxu0 0
    %2960 = vmatpush1.bf16.msra.mxu0 %v2898
    %2961 = vmatprep.subr.bf16.mxu0 0
    %2962 = vmatpush2.bf16.msra.mxu0 %v2928
    %2963 = vmatprep.subr.bf16.mxu0 0
    %2964 = vmatpush2.bf16.msra.mxu0 %v2926
    %2965 = vmatprep.subr.bf16.mxu0 0
    %2966 = vmatpush2.bf16.msra.mxu0 %v2924
    %2967 = vmatprep.subr.bf16.mxu0 0
    %2968 = vmatpush2.bf16.msra.mxu0 %v2922
    %2969 = vmatprep.subr.bf16.mxu0 0
    %2970 = vmatpush2.bf16.msra.mxu0 %v2920
    %2971 = vmatprep.subr.bf16.mxu0 0
    %2972 = vmatpush2.bf16.msra.mxu0 %v2918
    %2973 = vmatprep.subr.bf16.mxu0 0
    %2974 = vmatpush2.bf16.msra.mxu0 %v2916
    %2975 = vmatprep.subr.bf16.mxu0 0
    %2976 = vmatpush2.bf16.msra.mxu0 %v2914
    %2977 = vmatprep.mubr.bf16.mxu0 %v2882
    %2978 = vmatmul.mubr.bf16.gmra.mxu0 %v2881
    %v2979 = vpop.f32.mrf.mxu0
    %v2980 = vadd.f32 0.0, %v2979
    %v2981 = vpop.f32.mrf.mxu0
    %v2982 = vpop.f32.mrf.mxu0
    %v2983 = vadd.f32 0.0, %v2982
    %v2984 = vpop.f32.mrf.mxu0
    %2985 = vmatprep.mubr.bf16.mxu0 %v2884
    %2986 = vmatmul.mubr.bf16.gmra.mxu0 %v2883
    %v2987 = vpop.f32.mrf.mxu0
    %v2988 = vadd.f32 0.0, %v2987
    %v2989 = vpop.f32.mrf.mxu0
    %v2990 = vpop.f32.mrf.mxu0
    %v2991 = vadd.f32 0.0, %v2990
    %v2992 = vpop.f32.mrf.mxu0
    %2993 = vmatprep.mubr.bf16.mxu0 %v2886
    %2994 = vmatmul.mubr.bf16.gmra.mxu0 %v2885
    %v2995 = vpop.f32.mrf.mxu0
    %v2996 = vadd.f32 0.0, %v2995
    %v2997 = vpop.f32.mrf.mxu0
    %v2998 = vpop.f32.mrf.mxu0
    %v2999 = vadd.f32 0.0, %v2998
    %v3000 = vpop.f32.mrf.mxu0
    %3001 = vmatprep.mubr.bf16.mxu0 %v2888
    %3002 = vmatmul.mubr.bf16.gmra.mxu0 %v2887
    %v3003 = vpop.f32.mrf.mxu0
    %v3004 = vadd.f32 0.0, %v3003
    %v3005 = vpop.f32.mrf.mxu0
    %v3006 = vpop.f32.mrf.mxu0
    %v3007 = vadd.f32 0.0, %v3006
    %v3008 = vpop.f32.mrf.mxu0
    %3009 = vdwg.mxu0
    %v3010 = vadd.f32 %v2840, %v2980
    %v3011 = vadd.f32 %v2841, %v2983
    %v3012 = vadd.f32 %v2842, %v2988
    %v3013 = vadd.f32 %v2843, %v2991
    %v3014 = vadd.f32 %v2844, %v2996
    %v3015 = vadd.f32 %v2845, %v2999
    %v3016 = vadd.f32 %v2846, %v3004
    %v3017 = vadd.f32 %v2847, %v3007
    %vm3018 = vcmp.gt.f32.partialorder %v3010, 0.0
    %vm3019 = vcmp.gt.f32.partialorder %v3011, 0.0
    %vm3020 = vcmp.gt.f32.partialorder %v3012, 0.0
    %vm3021 = vcmp.gt.f32.partialorder %v3013, 0.0
    %vm3022 = vcmp.gt.f32.partialorder %v3014, 0.0
    %vm3023 = vcmp.gt.f32.partialorder %v3015, 0.0
    %vm3024 = vcmp.gt.f32.partialorder %v3016, 0.0
    %vm3025 = vcmp.gt.f32.partialorder %v3017, 0.0
    %v3026 = vmul.f32 %v3010, 0.2
    %v3027 = vmul.f32 %v3011, 0.2
    %v3028 = vmul.f32 %v3012, 0.2
    %v3029 = vmul.f32 %v3013, 0.2
    %v3030 = vmul.f32 %v3014, 0.2
    %v3031 = vmul.f32 %v3015, 0.2
    %v3032 = vmul.f32 %v3016, 0.2
    %v3033 = vmul.f32 %v3017, 0.2
    %v3034 = vsel %vm3018, %v3010, %v3026
    %v3035 = vsel %vm3019, %v3011, %v3027
    %v3036 = vsel %vm3020, %v3012, %v3028
    %v3037 = vsel %vm3021, %v3013, %v3029
    %v3038 = vsel %vm3022, %v3014, %v3030
    %v3039 = vsel %vm3023, %v3015, %v3031
    %v3040 = vsel %vm3024, %v3016, %v3032
    %v3041 = vsel %vm3025, %v3017, %v3033
    %v3042 = vpack.c.bf16 %v3035, %v3034
    %v3043 = vpack.c.bf16 %v3037, %v3036
    %v3044 = vpack.c.bf16 %v3039, %v3038
    %v3045 = vpack.c.bf16 %v3041, %v3040
    %v3046 = vld [vmem:[%s4] sm:$0xff]
    %v3047 = vld [vmem:[%s4 + $0x8] sm:$0xff]
    %v3048 = vld [vmem:[%s4 + $0x10] sm:$0xff]
    %v3049 = vld [vmem:[%s4 + $0x18] sm:$0xff]
    %v3054 = vunpack.c.l.b16 %v3046
    %v3055 = vunpack.c.h.b16 %v3046
    %v3056 = vunpack.c.l.b16 %v3047
    %v3057 = vunpack.c.h.b16 %v3047
    %v3058 = vunpack.c.l.b16 %v3048
    %v3059 = vunpack.c.h.b16 %v3048
    %v3060 = vunpack.c.l.b16 %v3049
    %v3061 = vunpack.c.h.b16 %v3049
    %v3062 = vpack.c.b16 %v3058, %v3054
    %v3063 = vpack.c.b16 %v3059, %v3055
    %v3064 = vpack.c.b16 %v3060, %v3056
    %v3065 = vpack.c.b16 %v3061, %v3057
    %vm3070 = vcmask 130048
    %v3072 = vsel %vm3070, %v3042, 0
    %v3075 = vsel %vm3070, %v3043, 0
    %v3078 = vsel %vm3070, %v3044, 0
    %v3081 = vsel %vm3070, %v3045, 0
    %3083 = vmatprep.subr.bf16.mxu0 0
    %3084 = vmatpush1.bf16.msra.mxu0 0
    %3085 = vmatprep.subr.bf16.mxu0 0
    %3086 = vmatpush1.bf16.msra.mxu0 0
    %3087 = vmatprep.subr.bf16.mxu0 0
    %3088 = vmatpush1.bf16.msra.mxu0 0
    %3089 = vmatprep.subr.bf16.mxu0 0
    %3090 = vmatpush1.bf16.msra.mxu0 0
    %3091 = vmatprep.subr.bf16.mxu0 0
    %3092 = vmatpush1.bf16.msra.mxu0 0
    %3093 = vmatprep.subr.bf16.mxu0 0
    %3094 = vmatpush1.bf16.msra.mxu0 0
    %3095 = vmatprep.subr.bf16.mxu0 0
    %3096 = vmatpush1.bf16.msra.mxu0 0
    %3097 = vmatprep.subr.bf16.mxu0 %v3063
    %3098 = vmatpush1.bf16.msra.mxu0 %v3062
    %3099 = vmatprep.subr.bf16.mxu0 0
    %3100 = vmatpush2.bf16.msra.mxu0 0
    %3101 = vmatprep.subr.bf16.mxu0 0
    %3102 = vmatpush2.bf16.msra.mxu0 0
    %3103 = vmatprep.subr.bf16.mxu0 0
    %3104 = vmatpush2.bf16.msra.mxu0 0
    %3105 = vmatprep.subr.bf16.mxu0 0
    %3106 = vmatpush2.bf16.msra.mxu0 0
    %3107 = vmatprep.subr.bf16.mxu0 0
    %3108 = vmatpush2.bf16.msra.mxu0 0
    %3109 = vmatprep.subr.bf16.mxu0 0
    %3110 = vmatpush2.bf16.msra.mxu0 0
    %3111 = vmatprep.subr.bf16.mxu0 0
    %3112 = vmatpush2.bf16.msra.mxu0 0
    %3113 = vmatprep.subr.bf16.mxu0 0
    %3114 = vmatpush2.bf16.msra.mxu0 0
    %3115 = vmatprep.mubr.bf16.mxu0 0
    %3116 = vmatmul.mubr.bf16.gmra.mxu0 %v3072
    %v3117 = vpop.f32.mrf.mxu0
    %v3118 = vadd.f32 0.0, %v3117
    %v3119 = vpop.f32.mrf.mxu0
    %v3120 = vadd.f32 0.0, %v3119
    %v3121 = vpop.f32.mrf.mxu0
    %v3122 = vadd.f32 0.0, %v3121
    %v3123 = vpop.f32.mrf.mxu0
    %v3124 = vadd.f32 0.0, %v3123
    %3125 = vmatprep.mubr.bf16.mxu0 0
    %3126 = vmatmul.mubr.bf16.gmra.mxu0 %v3075
    %v3127 = vpop.f32.mrf.mxu0
    %v3128 = vadd.f32 0.0, %v3127
    %v3129 = vpop.f32.mrf.mxu0
    %v3130 = vadd.f32 0.0, %v3129
    %v3131 = vpop.f32.mrf.mxu0
    %v3132 = vadd.f32 0.0, %v3131
    %v3133 = vpop.f32.mrf.mxu0
    %v3134 = vadd.f32 0.0, %v3133
    %3135 = vmatprep.mubr.bf16.mxu0 0
    %3136 = vmatmul.mubr.bf16.gmra.mxu0 %v3078
    %v3137 = vpop.f32.mrf.mxu0
    %v3138 = vadd.f32 0.0, %v3137
    %v3139 = vpop.f32.mrf.mxu0
    %v3140 = vadd.f32 0.0, %v3139
    %v3141 = vpop.f32.mrf.mxu0
    %v3142 = vadd.f32 0.0, %v3141
    %v3143 = vpop.f32.mrf.mxu0
    %v3144 = vadd.f32 0.0, %v3143
    %3145 = vmatprep.mubr.bf16.mxu0 0
    %3146 = vmatmul.mubr.bf16.gmra.mxu0 %v3081
    %v3147 = vpop.f32.mrf.mxu0
    %v3148 = vadd.f32 0.0, %v3147
    %v3149 = vpop.f32.mrf.mxu0
    %v3150 = vadd.f32 0.0, %v3149
    %v3151 = vpop.f32.mrf.mxu0
    %v3152 = vadd.f32 0.0, %v3151
    %v3153 = vpop.f32.mrf.mxu0
    %v3154 = vadd.f32 0.0, %v3153
    %3155 = vdwg.mxu0
    %3156 = vmatprep.subr.bf16.mxu0 0
    %3157 = vmatpush1.bf16.msra.mxu0 0
    %3158 = vmatprep.subr.bf16.mxu0 0
    %3159 = vmatpush1.bf16.msra.mxu0 0
    %3160 = vmatprep.subr.bf16.mxu0 0
    %3161 = vmatpush1.bf16.msra.mxu0 0
    %3162 = vmatprep.subr.bf16.mxu0 0
    %3163 = vmatpush1.bf16.msra.mxu0 0
    %3164 = vmatprep.subr.bf16.mxu0 0
    %3165 = vmatpush1.bf16.msra.mxu0 0
    %3166 = vmatprep.subr.bf16.mxu0 0
    %3167 = vmatpush1.bf16.msra.mxu0 0
    %3168 = vmatprep.subr.bf16.mxu0 0
    %3169 = vmatpush1.bf16.msra.mxu0 0
    %3170 = vmatprep.subr.bf16.mxu0 %v3065
    %3171 = vmatpush1.bf16.msra.mxu0 %v3064
    %3172 = vmatprep.subr.bf16.mxu0 0
    %3173 = vmatpush2.bf16.msra.mxu0 0
    %3174 = vmatprep.subr.bf16.mxu0 0
    %3175 = vmatpush2.bf16.msra.mxu0 0
    %3176 = vmatprep.subr.bf16.mxu0 0
    %3177 = vmatpush2.bf16.msra.mxu0 0
    %3178 = vmatprep.subr.bf16.mxu0 0
    %3179 = vmatpush2.bf16.msra.mxu0 0
    %3180 = vmatprep.subr.bf16.mxu0 0
    %3181 = vmatpush2.bf16.msra.mxu0 0
    %3182 = vmatprep.subr.bf16.mxu0 0
    %3183 = vmatpush2.bf16.msra.mxu0 0
    %3184 = vmatprep.subr.bf16.mxu0 0
    %3185 = vmatpush2.bf16.msra.mxu0 0
    %3186 = vmatprep.subr.bf16.mxu0 0
    %3187 = vmatpush2.bf16.msra.mxu0 0
    %3188 = vmatprep.mubr.bf16.mxu0 0
    %3189 = vmatmul.mubr.bf16.gmra.mxu0 %v3072
    %v3190 = vpop.f32.mrf.mxu0
    %v3191 = vadd.f32 0.0, %v3190
    %v3192 = vpop.f32.mrf.mxu0
    %v3193 = vadd.f32 0.0, %v3192
    %v3194 = vpop.f32.mrf.mxu0
    %v3195 = vadd.f32 0.0, %v3194
    %v3196 = vpop.f32.mrf.mxu0
    %v3197 = vadd.f32 0.0, %v3196
    %3198 = vmatprep.mubr.bf16.mxu0 0
    %3199 = vmatmul.mubr.bf16.gmra.mxu0 %v3075
    %v3200 = vpop.f32.mrf.mxu0
    %v3201 = vadd.f32 0.0, %v3200
    %v3202 = vpop.f32.mrf.mxu0
    %v3203 = vadd.f32 0.0, %v3202
    %v3204 = vpop.f32.mrf.mxu0
    %v3205 = vadd.f32 0.0, %v3204
    %v3206 = vpop.f32.mrf.mxu0
    %v3207 = vadd.f32 0.0, %v3206
    %3208 = vmatprep.mubr.bf16.mxu0 0
    %3209 = vmatmul.mubr.bf16.gmra.mxu0 %v3078
    %v3210 = vpop.f32.mrf.mxu0
    %v3211 = vadd.f32 0.0, %v3210
    %v3212 = vpop.f32.mrf.mxu0
    %v3213 = vadd.f32 0.0, %v3212
    %v3214 = vpop.f32.mrf.mxu0
    %v3215 = vadd.f32 0.0, %v3214
    %v3216 = vpop.f32.mrf.mxu0
    %v3217 = vadd.f32 0.0, %v3216
    %3218 = vmatprep.mubr.bf16.mxu0 0
    %3219 = vmatmul.mubr.bf16.gmra.mxu0 %v3081
    %v3220 = vpop.f32.mrf.mxu0
    %v3221 = vadd.f32 0.0, %v3220
    %v3222 = vpop.f32.mrf.mxu0
    %v3223 = vadd.f32 0.0, %v3222
    %v3224 = vpop.f32.mrf.mxu0
    %v3225 = vadd.f32 0.0, %v3224
    %v3226 = vpop.f32.mrf.mxu0
    %v3227 = vadd.f32 0.0, %v3226
    %3228 = vdwg.mxu0
    %v3229 = vpack.c.bf16 %v3122, %v3118
    %v3230 = vpack.c.bf16 %v3124, %v3120
    %v3231 = vpack.c.bf16 %v3195, %v3191
    %v3232 = vpack.c.bf16 %v3197, %v3193
    %v3233 = vpack.c.bf16 %v3132, %v3128
    %v3234 = vpack.c.bf16 %v3134, %v3130
    %v3235 = vpack.c.bf16 %v3205, %v3201
    %v3236 = vpack.c.bf16 %v3207, %v3203
    %v3237 = vpack.c.bf16 %v3142, %v3138
    %v3238 = vpack.c.bf16 %v3144, %v3140
    %v3239 = vpack.c.bf16 %v3215, %v3211
    %v3240 = vpack.c.bf16 %v3217, %v3213
    %v3241 = vpack.c.bf16 %v3152, %v3148
    %v3242 = vpack.c.bf16 %v3154, %v3150
    %v3243 = vpack.c.bf16 %v3225, %v3221
    %v3244 = vpack.c.bf16 %v3227, %v3223
    %v3245 = vld [vmem:[%s3] sm:$0xf]
    %v3246 = vld [vmem:[%s3 + $0x4] sm:$0xf]
    %s3247 = scalar_lea.vmem %s3, 8
    %v3248 = vld [vmem:[%s3247] sm:$0xf]
    %v3249 = vld [vmem:[%s3247 + $0x4] sm:$0xf]
    %v3252 = vunpack.c.l.b16 %v3248
    %v3253 = vunpack.c.l.b16 %v3249
    %v3254 = vpack.c.b16 %v3253, %v3252
    %3259 = vrot.lane.b32.xlu0 %v3229, 96
    %v3260 = vpop.permute.xlu0 %3259
    %3261 = vrot.lane.b32.xlu0 %v3233, 96
    %v3262 = vpop.permute.xlu0 %3261
    %3263 = vrot.lane.b32.xlu0 %v3237, 96
    %v3264 = vpop.permute.xlu0 %3263
    %3265 = vrot.lane.b32.xlu0 %v3241, 96
    %v3266 = vpop.permute.xlu0 %3265
    %vm3271 = vcmask 523264
    %v3273 = vsel %vm3271, %v3254, 0
    %3275 = vmatprep.subr.bf16.mxu0 0
    %3276 = vmatpush1.bf16.msra.mxu0 0
    %3277 = vmatprep.subr.bf16.mxu0 0
    %3278 = vmatpush1.bf16.msra.mxu0 0
    %3279 = vmatprep.subr.bf16.mxu0 0
    %3280 = vmatpush1.bf16.msra.mxu0 0
    %3281 = vmatprep.subr.bf16.mxu0 0
    %3282 = vmatpush1.bf16.msra.mxu0 0
    %3283 = vmatprep.subr.bf16.mxu0 0
    %3284 = vmatpush1.bf16.msra.mxu0 %v3266
    %3285 = vmatprep.subr.bf16.mxu0 0
    %3286 = vmatpush1.bf16.msra.mxu0 %v3264
    %3287 = vmatprep.subr.bf16.mxu0 0
    %3288 = vmatpush1.bf16.msra.mxu0 %v3262
    %3289 = vmatprep.subr.bf16.mxu0 0
    %3290 = vmatpush1.bf16.msra.mxu0 %v3260
    %3291 = vmatprep.subr.bf16.mxu0 0
    %3292 = vmatpush2.bf16.msra.mxu0 0
    %3293 = vmatprep.subr.bf16.mxu0 0
    %3294 = vmatpush2.bf16.msra.mxu0 0
    %3295 = vmatprep.subr.bf16.mxu0 0
    %3296 = vmatpush2.bf16.msra.mxu0 0
    %3297 = vmatprep.subr.bf16.mxu0 0
    %3298 = vmatpush2.bf16.msra.mxu0 0
    %3299 = vmatprep.subr.bf16.mxu0 0
    %3300 = vmatpush2.bf16.msra.mxu0 0
    %3301 = vmatprep.subr.bf16.mxu0 0
    %3302 = vmatpush2.bf16.msra.mxu0 0
    %3303 = vmatprep.subr.bf16.mxu0 0
    %3304 = vmatpush2.bf16.msra.mxu0 0
    %3305 = vmatprep.subr.bf16.mxu0 0
    %3306 = vmatpush2.bf16.msra.mxu0 0
    %3307 = vmatprep.mubr.bf16.mxu0 0
    %3308 = vmatmul.mubr.bf16.gmra.mxu0 %v3273
    %v3309 = vpop.f32.mrf.mxu0
    %v3310 = vadd.f32 0.0, %v3309
    %v3311 = vpop.f32.mrf.mxu0
    %v3312 = vpop.f32.mrf.mxu0
    %v3313 = vadd.f32 0.0, %v3312
    %v3314 = vpop.f32.mrf.mxu0
    %3315 = vdwg.mxu0
    %v3318 = vunpack.c.l.b16 %v3245
    %v3319 = vunpack.c.l.b16 %v3246
    %v3320 = vpack.c.b16 %v3319, %v3318
    %v3322 = vsel %vm3271, %v3320, 0
    %3324 = vmatprep.subr.bf16.mxu0 0
    %3325 = vmatpush1.bf16.msra.mxu0 0
    %3326 = vmatprep.subr.bf16.mxu0 0
    %3327 = vmatpush1.bf16.msra.mxu0 0
    %3328 = vmatprep.subr.bf16.mxu0 0
    %3329 = vmatpush1.bf16.msra.mxu0 0
    %3330 = vmatprep.subr.bf16.mxu0 0
    %3331 = vmatpush1.bf16.msra.mxu0 0
    %3332 = vmatprep.subr.bf16.mxu0 0
    %3333 = vmatpush1.bf16.msra.mxu0 %v3241
    %3334 = vmatprep.subr.bf16.mxu0 0
    %3335 = vmatpush1.bf16.msra.mxu0 %v3237
    %3336 = vmatprep.subr.bf16.mxu0 0
    %3337 = vmatpush1.bf16.msra.mxu0 %v3233
    %3338 = vmatprep.subr.bf16.mxu0 0
    %3339 = vmatpush1.bf16.msra.mxu0 %v3229
    %3340 = vmatprep.subr.bf16.mxu0 0
    %3341 = vmatpush2.bf16.msra.mxu0 0
    %3342 = vmatprep.subr.bf16.mxu0 0
    %3343 = vmatpush2.bf16.msra.mxu0 0
    %3344 = vmatprep.subr.bf16.mxu0 0
    %3345 = vmatpush2.bf16.msra.mxu0 0
    %3346 = vmatprep.subr.bf16.mxu0 0
    %3347 = vmatpush2.bf16.msra.mxu0 0
    %3348 = vmatprep.subr.bf16.mxu0 0
    %3349 = vmatpush2.bf16.msra.mxu0 0
    %3350 = vmatprep.subr.bf16.mxu0 0
    %3351 = vmatpush2.bf16.msra.mxu0 0
    %3352 = vmatprep.subr.bf16.mxu0 0
    %3353 = vmatpush2.bf16.msra.mxu0 0
    %3354 = vmatprep.subr.bf16.mxu0 0
    %3355 = vmatpush2.bf16.msra.mxu0 0
    %3356 = vmatprep.mubr.bf16.mxu0 0
    %3357 = vmatmul.mubr.bf16.gmra.mxu0 %v3322
    %v3358 = vpop.f32.mrf.mxu0
    %v3359 = vadd.f32 %v3310, %v3358
    %v3360 = vpop.f32.mrf.mxu0
    %v3361 = vpop.f32.mrf.mxu0
    %v3362 = vadd.f32 %v3313, %v3361
    %v3363 = vpop.f32.mrf.mxu0
    %3364 = vdwg.mxu0
    %s3365 = scalar_lea.vmem %s3, 16
    %v3366 = vld [vmem:[%s3365] sm:$0xf]
    %v3367 = vld [vmem:[%s3365 + $0x4] sm:$0xf]
    %v3370 = vunpack.c.l.b16 %v3366
    %v3371 = vunpack.c.l.b16 %v3367
    %v3372 = vpack.c.b16 %v3371, %v3370
    %3373 = vrot.lane.b32.xlu0 %v3229, 64
    %v3374 = vpop.permute.xlu0 %3373
    %3375 = vrot.lane.b32.xlu0 %v3233, 64
    %v3376 = vpop.permute.xlu0 %3375
    %3377 = vrot.lane.b32.xlu0 %v3237, 64
    %v3378 = vpop.permute.xlu0 %3377
    %3379 = vrot.lane.b32.xlu0 %v3241, 64
    %v3380 = vpop.permute.xlu0 %3379
    %v3386 = vsel %vm3271, %v3372, 0
    %3388 = vmatprep.subr.bf16.mxu0 0
    %3389 = vmatpush1.bf16.msra.mxu0 0
    %3390 = vmatprep.subr.bf16.mxu0 0
    %3391 = vmatpush1.bf16.msra.mxu0 0
    %3392 = vmatprep.subr.bf16.mxu0 0
    %3393 = vmatpush1.bf16.msra.mxu0 0
    %3394 = vmatprep.subr.bf16.mxu0 0
    %3395 = vmatpush1.bf16.msra.mxu0 0
    %3396 = vmatprep.subr.bf16.mxu0 0
    %3397 = vmatpush1.bf16.msra.mxu0 %v3380
    %3398 = vmatprep.subr.bf16.mxu0 0
    %3399 = vmatpush1.bf16.msra.mxu0 %v3378
    %3400 = vmatprep.subr.bf16.mxu0 0
    %3401 = vmatpush1.bf16.msra.mxu0 %v3376
    %3402 = vmatprep.subr.bf16.mxu0 0
    %3403 = vmatpush1.bf16.msra.mxu0 %v3374
    %3404 = vmatprep.subr.bf16.mxu0 0
    %3405 = vmatpush2.bf16.msra.mxu0 0
    %3406 = vmatprep.subr.bf16.mxu0 0
    %3407 = vmatpush2.bf16.msra.mxu0 0
    %3408 = vmatprep.subr.bf16.mxu0 0
    %3409 = vmatpush2.bf16.msra.mxu0 0
    %3410 = vmatprep.subr.bf16.mxu0 0
    %3411 = vmatpush2.bf16.msra.mxu0 0
    %3412 = vmatprep.subr.bf16.mxu0 0
    %3413 = vmatpush2.bf16.msra.mxu0 0
    %3414 = vmatprep.subr.bf16.mxu0 0
    %3415 = vmatpush2.bf16.msra.mxu0 0
    %3416 = vmatprep.subr.bf16.mxu0 0
    %3417 = vmatpush2.bf16.msra.mxu0 0
    %3418 = vmatprep.subr.bf16.mxu0 0
    %3419 = vmatpush2.bf16.msra.mxu0 0
    %3420 = vmatprep.mubr.bf16.mxu0 0
    %3421 = vmatmul.mubr.bf16.gmra.mxu0 %v3386
    %v3422 = vpop.f32.mrf.mxu0
    %v3423 = vadd.f32 0.0, %v3422
    %v3424 = vpop.f32.mrf.mxu0
    %v3425 = vpop.f32.mrf.mxu0
    %v3426 = vadd.f32 0.0, %v3425
    %v3427 = vpop.f32.mrf.mxu0
    %3428 = vdwg.mxu0
    %v3429 = vadd.f32 %v3359, %v3423
    %v3430 = vadd.f32 %v3362, %v3426
    %s3431 = scalar_lea.vmem %s3, 24
    %v3432 = vld [vmem:[%s3431] sm:$0xf]
    %v3433 = vld [vmem:[%s3431 + $0x4] sm:$0xf]
    %v3436 = vunpack.c.l.b16 %v3432
    %v3437 = vunpack.c.l.b16 %v3433
    %v3438 = vpack.c.b16 %v3437, %v3436
    %3439 = vrot.lane.b32.xlu0 %v3229, 32
    %v3440 = vpop.permute.xlu0 %3439
    %3441 = vrot.lane.b32.xlu0 %v3233, 32
    %v3442 = vpop.permute.xlu0 %3441
    %3443 = vrot.lane.b32.xlu0 %v3237, 32
    %v3444 = vpop.permute.xlu0 %3443
    %3445 = vrot.lane.b32.xlu0 %v3241, 32
    %v3446 = vpop.permute.xlu0 %3445
    %v3452 = vsel %vm3271, %v3438, 0
    %3454 = vmatprep.subr.bf16.mxu0 0
    %3455 = vmatpush1.bf16.msra.mxu0 0
    %3456 = vmatprep.subr.bf16.mxu0 0
    %3457 = vmatpush1.bf16.msra.mxu0 0
    %3458 = vmatprep.subr.bf16.mxu0 0
    %3459 = vmatpush1.bf16.msra.mxu0 0
    %3460 = vmatprep.subr.bf16.mxu0 0
    %3461 = vmatpush1.bf16.msra.mxu0 0
    %3462 = vmatprep.subr.bf16.mxu0 0
    %3463 = vmatpush1.bf16.msra.mxu0 %v3446
    %3464 = vmatprep.subr.bf16.mxu0 0
    %3465 = vmatpush1.bf16.msra.mxu0 %v3444
    %3466 = vmatprep.subr.bf16.mxu0 0
    %3467 = vmatpush1.bf16.msra.mxu0 %v3442
    %3468 = vmatprep.subr.bf16.mxu0 0
    %3469 = vmatpush1.bf16.msra.mxu0 %v3440
    %3470 = vmatprep.subr.bf16.mxu0 0
    %3471 = vmatpush2.bf16.msra.mxu0 0
    %3472 = vmatprep.subr.bf16.mxu0 0
    %3473 = vmatpush2.bf16.msra.mxu0 0
    %3474 = vmatprep.subr.bf16.mxu0 0
    %3475 = vmatpush2.bf16.msra.mxu0 0
    %3476 = vmatprep.subr.bf16.mxu0 0
    %3477 = vmatpush2.bf16.msra.mxu0 0
    %3478 = vmatprep.subr.bf16.mxu0 0
    %3479 = vmatpush2.bf16.msra.mxu0 0
    %3480 = vmatprep.subr.bf16.mxu0 0
    %3481 = vmatpush2.bf16.msra.mxu0 0
    %3482 = vmatprep.subr.bf16.mxu0 0
    %3483 = vmatpush2.bf16.msra.mxu0 0
    %3484 = vmatprep.subr.bf16.mxu0 0
    %3485 = vmatpush2.bf16.msra.mxu0 0
    %3486 = vmatprep.mubr.bf16.mxu0 0
    %3487 = vmatmul.mubr.bf16.gmra.mxu0 %v3452
    %v3488 = vpop.f32.mrf.mxu0
    %v3489 = vadd.f32 0.0, %v3488
    %v3490 = vpop.f32.mrf.mxu0
    %v3491 = vpop.f32.mrf.mxu0
    %v3492 = vadd.f32 0.0, %v3491
    %v3493 = vpop.f32.mrf.mxu0
    %3494 = vdwg.mxu0
    %v3495 = vadd.f32 %v3429, %v3489
    %v3496 = vadd.f32 %v3430, %v3492
    %s3497 = scalar_lea.vmem %s3, 32
    %v3498 = vld [vmem:[%s3497] sm:$0xf]
    %v3499 = vld [vmem:[%s3497 + $0x4] sm:$0xf]
    %v3502 = vunpack.c.l.b16 %v3498
    %v3503 = vunpack.c.l.b16 %v3499
    %v3504 = vpack.c.b16 %v3503, %v3502
    %v3506 = vsel %vm3271, %v3504, 0
    %3508 = vmatprep.subr.bf16.mxu0 0
    %3509 = vmatpush1.bf16.msra.mxu0 0
    %3510 = vmatprep.subr.bf16.mxu0 0
    %3511 = vmatpush1.bf16.msra.mxu0 0
    %3512 = vmatprep.subr.bf16.mxu0 0
    %3513 = vmatpush1.bf16.msra.mxu0 0
    %3514 = vmatprep.subr.bf16.mxu0 0
    %3515 = vmatpush1.bf16.msra.mxu0 0
    %3516 = vmatprep.subr.bf16.mxu0 0
    %3517 = vmatpush1.bf16.msra.mxu0 %v3242
    %3518 = vmatprep.subr.bf16.mxu0 0
    %3519 = vmatpush1.bf16.msra.mxu0 %v3238
    %3520 = vmatprep.subr.bf16.mxu0 0
    %3521 = vmatpush1.bf16.msra.mxu0 %v3234
    %3522 = vmatprep.subr.bf16.mxu0 0
    %3523 = vmatpush1.bf16.msra.mxu0 %v3230
    %3524 = vmatprep.subr.bf16.mxu0 0
    %3525 = vmatpush2.bf16.msra.mxu0 0
    %3526 = vmatprep.subr.bf16.mxu0 0
    %3527 = vmatpush2.bf16.msra.mxu0 0
    %3528 = vmatprep.subr.bf16.mxu0 0
    %3529 = vmatpush2.bf16.msra.mxu0 0
    %3530 = vmatprep.subr.bf16.mxu0 0
    %3531 = vmatpush2.bf16.msra.mxu0 0
    %3532 = vmatprep.subr.bf16.mxu0 0
    %3533 = vmatpush2.bf16.msra.mxu0 0
    %3534 = vmatprep.subr.bf16.mxu0 0
    %3535 = vmatpush2.bf16.msra.mxu0 0
    %3536 = vmatprep.subr.bf16.mxu0 0
    %3537 = vmatpush2.bf16.msra.mxu0 0
    %3538 = vmatprep.subr.bf16.mxu0 0
    %3539 = vmatpush2.bf16.msra.mxu0 0
    %3540 = vmatprep.mubr.bf16.mxu0 0
    %3541 = vmatmul.mubr.bf16.gmra.mxu0 %v3506
    %v3542 = vpop.f32.mrf.mxu0
    %v3543 = vadd.f32 0.0, %v3542
    %v3544 = vpop.f32.mrf.mxu0
    %v3545 = vpop.f32.mrf.mxu0
    %v3546 = vadd.f32 0.0, %v3545
    %v3547 = vpop.f32.mrf.mxu0
    %3548 = vdwg.mxu0
    %v3549 = vadd.f32 %v3495, %v3543
    %v3550 = vadd.f32 %v3496, %v3546
    %s3551 = scalar_lea.vmem %s3, 40
    %v3552 = vld [vmem:[%s3551] sm:$0xf]
    %v3553 = vld [vmem:[%s3551 + $0x4] sm:$0xf]
    %v3556 = vunpack.c.l.b16 %v3552
    %v3557 = vunpack.c.l.b16 %v3553
    %v3558 = vpack.c.b16 %v3557, %v3556
    %3563 = vrot.lane.b32.xlu0 %v3230, 96
    %v3564 = vpop.permute.xlu0 %3563
    %3565 = vrot.lane.b32.xlu0 %v3234, 96
    %v3566 = vpop.permute.xlu0 %3565
    %3567 = vrot.lane.b32.xlu0 %v3238, 96
    %v3568 = vpop.permute.xlu0 %3567
    %3569 = vrot.lane.b32.xlu0 %v3242, 96
    %v3570 = vpop.permute.xlu0 %3569
    %v3576 = vsel %vm3271, %v3558, 0
    %3578 = vmatprep.subr.bf16.mxu0 0
    %3579 = vmatpush1.bf16.msra.mxu0 0
    %3580 = vmatprep.subr.bf16.mxu0 0
    %3581 = vmatpush1.bf16.msra.mxu0 0
    %3582 = vmatprep.subr.bf16.mxu0 0
    %3583 = vmatpush1.bf16.msra.mxu0 0
    %3584 = vmatprep.subr.bf16.mxu0 0
    %3585 = vmatpush1.bf16.msra.mxu0 0
    %3586 = vmatprep.subr.bf16.mxu0 0
    %3587 = vmatpush1.bf16.msra.mxu0 %v3570
    %3588 = vmatprep.subr.bf16.mxu0 0
    %3589 = vmatpush1.bf16.msra.mxu0 %v3568
    %3590 = vmatprep.subr.bf16.mxu0 0
    %3591 = vmatpush1.bf16.msra.mxu0 %v3566
    %3592 = vmatprep.subr.bf16.mxu0 0
    %3593 = vmatpush1.bf16.msra.mxu0 %v3564
    %3594 = vmatprep.subr.bf16.mxu0 0
    %3595 = vmatpush2.bf16.msra.mxu0 0
    %3596 = vmatprep.subr.bf16.mxu0 0
    %3597 = vmatpush2.bf16.msra.mxu0 0
    %3598 = vmatprep.subr.bf16.mxu0 0
    %3599 = vmatpush2.bf16.msra.mxu0 0
    %3600 = vmatprep.subr.bf16.mxu0 0
    %3601 = vmatpush2.bf16.msra.mxu0 0
    %3602 = vmatprep.subr.bf16.mxu0 0
    %3603 = vmatpush2.bf16.msra.mxu0 0
    %3604 = vmatprep.subr.bf16.mxu0 0
    %3605 = vmatpush2.bf16.msra.mxu0 0
    %3606 = vmatprep.subr.bf16.mxu0 0
    %3607 = vmatpush2.bf16.msra.mxu0 0
    %3608 = vmatprep.subr.bf16.mxu0 0
    %3609 = vmatpush2.bf16.msra.mxu0 0
    %3610 = vmatprep.mubr.bf16.mxu0 0
    %3611 = vmatmul.mubr.bf16.gmra.mxu0 %v3576
    %v3612 = vpop.f32.mrf.mxu0
    %v3613 = vadd.f32 0.0, %v3612
    %v3614 = vpop.f32.mrf.mxu0
    %v3615 = vpop.f32.mrf.mxu0
    %v3616 = vadd.f32 0.0, %v3615
    %v3617 = vpop.f32.mrf.mxu0
    %3618 = vdwg.mxu0
    %v3619 = vadd.f32 %v3549, %v3613
    %v3620 = vadd.f32 %v3550, %v3616
    %s3621 = scalar_lea.vmem %s3, 48
    %v3622 = vld [vmem:[%s3621] sm:$0xf]
    %v3623 = vld [vmem:[%s3621 + $0x4] sm:$0xf]
    %v3626 = vunpack.c.l.b16 %v3622
    %v3627 = vunpack.c.l.b16 %v3623
    %v3628 = vpack.c.b16 %v3627, %v3626
    %3629 = vrot.lane.b32.xlu0 %v3230, 64
    %v3630 = vpop.permute.xlu0 %3629
    %3631 = vrot.lane.b32.xlu0 %v3234, 64
    %v3632 = vpop.permute.xlu0 %3631
    %3633 = vrot.lane.b32.xlu0 %v3238, 64
    %v3634 = vpop.permute.xlu0 %3633
    %3635 = vrot.lane.b32.xlu0 %v3242, 64
    %v3636 = vpop.permute.xlu0 %3635
    %v3642 = vsel %vm3271, %v3628, 0
    %3644 = vmatprep.subr.bf16.mxu0 0
    %3645 = vmatpush1.bf16.msra.mxu0 0
    %3646 = vmatprep.subr.bf16.mxu0 0
    %3647 = vmatpush1.bf16.msra.mxu0 0
    %3648 = vmatprep.subr.bf16.mxu0 0
    %3649 = vmatpush1.bf16.msra.mxu0 0
    %3650 = vmatprep.subr.bf16.mxu0 0
    %3651 = vmatpush1.bf16.msra.mxu0 0
    %3652 = vmatprep.subr.bf16.mxu0 0
    %3653 = vmatpush1.bf16.msra.mxu0 %v3636
    %3654 = vmatprep.subr.bf16.mxu0 0
    %3655 = vmatpush1.bf16.msra.mxu0 %v3634
    %3656 = vmatprep.subr.bf16.mxu0 0
    %3657 = vmatpush1.bf16.msra.mxu0 %v3632
    %3658 = vmatprep.subr.bf16.mxu0 0
    %3659 = vmatpush1.bf16.msra.mxu0 %v3630
    %3660 = vmatprep.subr.bf16.mxu0 0
    %3661 = vmatpush2.bf16.msra.mxu0 0
    %3662 = vmatprep.subr.bf16.mxu0 0
    %3663 = vmatpush2.bf16.msra.mxu0 0
    %3664 = vmatprep.subr.bf16.mxu0 0
    %3665 = vmatpush2.bf16.msra.mxu0 0
    %3666 = vmatprep.subr.bf16.mxu0 0
    %3667 = vmatpush2.bf16.msra.mxu0 0
    %3668 = vmatprep.subr.bf16.mxu0 0
    %3669 = vmatpush2.bf16.msra.mxu0 0
    %3670 = vmatprep.subr.bf16.mxu0 0
    %3671 = vmatpush2.bf16.msra.mxu0 0
    %3672 = vmatprep.subr.bf16.mxu0 0
    %3673 = vmatpush2.bf16.msra.mxu0 0
    %3674 = vmatprep.subr.bf16.mxu0 0
    %3675 = vmatpush2.bf16.msra.mxu0 0
    %3676 = vmatprep.mubr.bf16.mxu0 0
    %3677 = vmatmul.mubr.bf16.gmra.mxu0 %v3642
    %v3678 = vpop.f32.mrf.mxu0
    %v3679 = vadd.f32 0.0, %v3678
    %v3680 = vpop.f32.mrf.mxu0
    %v3681 = vpop.f32.mrf.mxu0
    %v3682 = vadd.f32 0.0, %v3681
    %v3683 = vpop.f32.mrf.mxu0
    %3684 = vdwg.mxu0
    %v3685 = vadd.f32 %v3619, %v3679
    %v3686 = vadd.f32 %v3620, %v3682
    %s3687 = scalar_lea.vmem %s3, 56
    %v3688 = vld [vmem:[%s3687] sm:$0xf]
    %v3689 = vld [vmem:[%s3687 + $0x4] sm:$0xf]
    %v3692 = vunpack.c.l.b16 %v3688
    %v3693 = vunpack.c.l.b16 %v3689
    %v3694 = vpack.c.b16 %v3693, %v3692
    %3695 = vrot.lane.b32.xlu0 %v3230, 32
    %v3696 = vpop.permute.xlu0 %3695
    %3697 = vrot.lane.b32.xlu0 %v3234, 32
    %v3698 = vpop.permute.xlu0 %3697
    %3699 = vrot.lane.b32.xlu0 %v3238, 32
    %v3700 = vpop.permute.xlu0 %3699
    %3701 = vrot.lane.b32.xlu0 %v3242, 32
    %v3702 = vpop.permute.xlu0 %3701
    %v3708 = vsel %vm3271, %v3694, 0
    %3710 = vmatprep.subr.bf16.mxu0 0
    %3711 = vmatpush1.bf16.msra.mxu0 0
    %3712 = vmatprep.subr.bf16.mxu0 0
    %3713 = vmatpush1.bf16.msra.mxu0 0
    %3714 = vmatprep.subr.bf16.mxu0 0
    %3715 = vmatpush1.bf16.msra.mxu0 0
    %3716 = vmatprep.subr.bf16.mxu0 0
    %3717 = vmatpush1.bf16.msra.mxu0 0
    %3718 = vmatprep.subr.bf16.mxu0 0
    %3719 = vmatpush1.bf16.msra.mxu0 %v3702
    %3720 = vmatprep.subr.bf16.mxu0 0
    %3721 = vmatpush1.bf16.msra.mxu0 %v3700
    %3722 = vmatprep.subr.bf16.mxu0 0
    %3723 = vmatpush1.bf16.msra.mxu0 %v3698
    %3724 = vmatprep.subr.bf16.mxu0 0
    %3725 = vmatpush1.bf16.msra.mxu0 %v3696
    %3726 = vmatprep.subr.bf16.mxu0 0
    %3727 = vmatpush2.bf16.msra.mxu0 0
    %3728 = vmatprep.subr.bf16.mxu0 0
    %3729 = vmatpush2.bf16.msra.mxu0 0
    %3730 = vmatprep.subr.bf16.mxu0 0
    %3731 = vmatpush2.bf16.msra.mxu0 0
    %3732 = vmatprep.subr.bf16.mxu0 0
    %3733 = vmatpush2.bf16.msra.mxu0 0
    %3734 = vmatprep.subr.bf16.mxu0 0
    %3735 = vmatpush2.bf16.msra.mxu0 0
    %3736 = vmatprep.subr.bf16.mxu0 0
    %3737 = vmatpush2.bf16.msra.mxu0 0
    %3738 = vmatprep.subr.bf16.mxu0 0
    %3739 = vmatpush2.bf16.msra.mxu0 0
    %3740 = vmatprep.subr.bf16.mxu0 0
    %3741 = vmatpush2.bf16.msra.mxu0 0
    %3742 = vmatprep.mubr.bf16.mxu0 0
    %3743 = vmatmul.mubr.bf16.gmra.mxu0 %v3708
    %v3744 = vpop.f32.mrf.mxu0
    %v3745 = vadd.f32 0.0, %v3744
    %v3746 = vpop.f32.mrf.mxu0
    %v3747 = vpop.f32.mrf.mxu0
    %v3748 = vadd.f32 0.0, %v3747
    %v3749 = vpop.f32.mrf.mxu0
    %3750 = vdwg.mxu0
    %v3751 = vadd.f32 %v3685, %v3745
    %v3752 = vadd.f32 %v3686, %v3748
    %s3753 = scalar_lea.vmem %s3, 64
    %v3754 = vld [vmem:[%s3753] sm:$0xf]
    %v3755 = vld [vmem:[%s3753 + $0x4] sm:$0xf]
    %v3758 = vunpack.c.l.b16 %v3754
    %v3759 = vunpack.c.l.b16 %v3755
    %v3760 = vpack.c.b16 %v3759, %v3758
    %v3762 = vsel %vm3271, %v3760, 0
    %3764 = vmatprep.subr.bf16.mxu0 0
    %3765 = vmatpush1.bf16.msra.mxu0 0
    %3766 = vmatprep.subr.bf16.mxu0 0
    %3767 = vmatpush1.bf16.msra.mxu0 0
    %3768 = vmatprep.subr.bf16.mxu0 0
    %3769 = vmatpush1.bf16.msra.mxu0 0
    %3770 = vmatprep.subr.bf16.mxu0 0
    %3771 = vmatpush1.bf16.msra.mxu0 0
    %3772 = vmatprep.subr.bf16.mxu0 0
    %3773 = vmatpush1.bf16.msra.mxu0 %v3243
    %3774 = vmatprep.subr.bf16.mxu0 0
    %3775 = vmatpush1.bf16.msra.mxu0 %v3239
    %3776 = vmatprep.subr.bf16.mxu0 0
    %3777 = vmatpush1.bf16.msra.mxu0 %v3235
    %3778 = vmatprep.subr.bf16.mxu0 0
    %3779 = vmatpush1.bf16.msra.mxu0 %v3231
    %3780 = vmatprep.subr.bf16.mxu0 0
    %3781 = vmatpush2.bf16.msra.mxu0 0
    %3782 = vmatprep.subr.bf16.mxu0 0
    %3783 = vmatpush2.bf16.msra.mxu0 0
    %3784 = vmatprep.subr.bf16.mxu0 0
    %3785 = vmatpush2.bf16.msra.mxu0 0
    %3786 = vmatprep.subr.bf16.mxu0 0
    %3787 = vmatpush2.bf16.msra.mxu0 0
    %3788 = vmatprep.subr.bf16.mxu0 0
    %3789 = vmatpush2.bf16.msra.mxu0 0
    %3790 = vmatprep.subr.bf16.mxu0 0
    %3791 = vmatpush2.bf16.msra.mxu0 0
    %3792 = vmatprep.subr.bf16.mxu0 0
    %3793 = vmatpush2.bf16.msra.mxu0 0
    %3794 = vmatprep.subr.bf16.mxu0 0
    %3795 = vmatpush2.bf16.msra.mxu0 0
    %3796 = vmatprep.mubr.bf16.mxu0 0
    %3797 = vmatmul.mubr.bf16.gmra.mxu0 %v3762
    %v3798 = vpop.f32.mrf.mxu0
    %v3799 = vadd.f32 0.0, %v3798
    %v3800 = vpop.f32.mrf.mxu0
    %v3801 = vpop.f32.mrf.mxu0
    %v3802 = vadd.f32 0.0, %v3801
    %v3803 = vpop.f32.mrf.mxu0
    %3804 = vdwg.mxu0
    %v3805 = vadd.f32 %v3751, %v3799
    %v3806 = vadd.f32 %v3752, %v3802
    %s3807 = scalar_lea.vmem %s3, 72
    %v3808 = vld [vmem:[%s3807] sm:$0xf]
    %v3809 = vld [vmem:[%s3807 + $0x4] sm:$0xf]
    %v3812 = vunpack.c.l.b16 %v3808
    %v3813 = vunpack.c.l.b16 %v3809
    %v3814 = vpack.c.b16 %v3813, %v3812
    %3819 = vrot.lane.b32.xlu0 %v3231, 96
    %v3820 = vpop.permute.xlu0 %3819
    %3821 = vrot.lane.b32.xlu0 %v3235, 96
    %v3822 = vpop.permute.xlu0 %3821
    %3823 = vrot.lane.b32.xlu0 %v3239, 96
    %v3824 = vpop.permute.xlu0 %3823
    %3825 = vrot.lane.b32.xlu0 %v3243, 96
    %v3826 = vpop.permute.xlu0 %3825
    %v3832 = vsel %vm3271, %v3814, 0
    %3834 = vmatprep.subr.bf16.mxu0 0
    %3835 = vmatpush1.bf16.msra.mxu0 0
    %3836 = vmatprep.subr.bf16.mxu0 0
    %3837 = vmatpush1.bf16.msra.mxu0 0
    %3838 = vmatprep.subr.bf16.mxu0 0
    %3839 = vmatpush1.bf16.msra.mxu0 0
    %3840 = vmatprep.subr.bf16.mxu0 0
    %3841 = vmatpush1.bf16.msra.mxu0 0
    %3842 = vmatprep.subr.bf16.mxu0 0
    %3843 = vmatpush1.bf16.msra.mxu0 %v3826
    %3844 = vmatprep.subr.bf16.mxu0 0
    %3845 = vmatpush1.bf16.msra.mxu0 %v3824
    %3846 = vmatprep.subr.bf16.mxu0 0
    %3847 = vmatpush1.bf16.msra.mxu0 %v3822
    %3848 = vmatprep.subr.bf16.mxu0 0
    %3849 = vmatpush1.bf16.msra.mxu0 %v3820
    %3850 = vmatprep.subr.bf16.mxu0 0
    %3851 = vmatpush2.bf16.msra.mxu0 0
    %3852 = vmatprep.subr.bf16.mxu0 0
    %3853 = vmatpush2.bf16.msra.mxu0 0
    %3854 = vmatprep.subr.bf16.mxu0 0
    %3855 = vmatpush2.bf16.msra.mxu0 0
    %3856 = vmatprep.subr.bf16.mxu0 0
    %3857 = vmatpush2.bf16.msra.mxu0 0
    %3858 = vmatprep.subr.bf16.mxu0 0
    %3859 = vmatpush2.bf16.msra.mxu0 0
    %3860 = vmatprep.subr.bf16.mxu0 0
    %3861 = vmatpush2.bf16.msra.mxu0 0
    %3862 = vmatprep.subr.bf16.mxu0 0
    %3863 = vmatpush2.bf16.msra.mxu0 0
    %3864 = vmatprep.subr.bf16.mxu0 0
    %3865 = vmatpush2.bf16.msra.mxu0 0
    %3866 = vmatprep.mubr.bf16.mxu0 0
    %3867 = vmatmul.mubr.bf16.gmra.mxu0 %v3832
    %v3868 = vpop.f32.mrf.mxu0
    %v3869 = vadd.f32 0.0, %v3868
    %v3870 = vpop.f32.mrf.mxu0
    %v3871 = vpop.f32.mrf.mxu0
    %v3872 = vadd.f32 0.0, %v3871
    %v3873 = vpop.f32.mrf.mxu0
    %3874 = vdwg.mxu0
    %v3875 = vadd.f32 %v3805, %v3869
    %v3876 = vadd.f32 %v3806, %v3872
    %s3877 = scalar_lea.vmem %s3, 80
    %v3878 = vld [vmem:[%s3877] sm:$0xf]
    %v3879 = vld [vmem:[%s3877 + $0x4] sm:$0xf]
    %v3882 = vunpack.c.l.b16 %v3878
    %v3883 = vunpack.c.l.b16 %v3879
    %v3884 = vpack.c.b16 %v3883, %v3882
    %3885 = vrot.lane.b32.xlu0 %v3231, 64
    %v3886 = vpop.permute.xlu0 %3885
    %3887 = vrot.lane.b32.xlu0 %v3235, 64
    %v3888 = vpop.permute.xlu0 %3887
    %3889 = vrot.lane.b32.xlu0 %v3239, 64
    %v3890 = vpop.permute.xlu0 %3889
    %3891 = vrot.lane.b32.xlu0 %v3243, 64
    %v3892 = vpop.permute.xlu0 %3891
    %v3898 = vsel %vm3271, %v3884, 0
    %3900 = vmatprep.subr.bf16.mxu0 0
    %3901 = vmatpush1.bf16.msra.mxu0 0
    %3902 = vmatprep.subr.bf16.mxu0 0
    %3903 = vmatpush1.bf16.msra.mxu0 0
    %3904 = vmatprep.subr.bf16.mxu0 0
    %3905 = vmatpush1.bf16.msra.mxu0 0
    %3906 = vmatprep.subr.bf16.mxu0 0
    %3907 = vmatpush1.bf16.msra.mxu0 0
    %3908 = vmatprep.subr.bf16.mxu0 0
    %3909 = vmatpush1.bf16.msra.mxu0 %v3892
    %3910 = vmatprep.subr.bf16.mxu0 0
    %3911 = vmatpush1.bf16.msra.mxu0 %v3890
    %3912 = vmatprep.subr.bf16.mxu0 0
    %3913 = vmatpush1.bf16.msra.mxu0 %v3888
    %3914 = vmatprep.subr.bf16.mxu0 0
    %3915 = vmatpush1.bf16.msra.mxu0 %v3886
    %3916 = vmatprep.subr.bf16.mxu0 0
    %3917 = vmatpush2.bf16.msra.mxu0 0
    %3918 = vmatprep.subr.bf16.mxu0 0
    %3919 = vmatpush2.bf16.msra.mxu0 0
    %3920 = vmatprep.subr.bf16.mxu0 0
    %3921 = vmatpush2.bf16.msra.mxu0 0
    %3922 = vmatprep.subr.bf16.mxu0 0
    %3923 = vmatpush2.bf16.msra.mxu0 0
    %3924 = vmatprep.subr.bf16.mxu0 0
    %3925 = vmatpush2.bf16.msra.mxu0 0
    %3926 = vmatprep.subr.bf16.mxu0 0
    %3927 = vmatpush2.bf16.msra.mxu0 0
    %3928 = vmatprep.subr.bf16.mxu0 0
    %3929 = vmatpush2.bf16.msra.mxu0 0
    %3930 = vmatprep.subr.bf16.mxu0 0
    %3931 = vmatpush2.bf16.msra.mxu0 0
    %3932 = vmatprep.mubr.bf16.mxu0 0
    %3933 = vmatmul.mubr.bf16.gmra.mxu0 %v3898
    %v3934 = vpop.f32.mrf.mxu0
    %v3935 = vadd.f32 0.0, %v3934
    %v3936 = vpop.f32.mrf.mxu0
    %v3937 = vpop.f32.mrf.mxu0
    %v3938 = vadd.f32 0.0, %v3937
    %v3939 = vpop.f32.mrf.mxu0
    %3940 = vdwg.mxu0
    %v3941 = vadd.f32 %v3875, %v3935
    %v3942 = vadd.f32 %v3876, %v3938
    %s3943 = scalar_lea.vmem %s3, 88
    %v3944 = vld [vmem:[%s3943] sm:$0xf]
    %v3945 = vld [vmem:[%s3943 + $0x4] sm:$0xf]
    %v3948 = vunpack.c.l.b16 %v3944
    %v3949 = vunpack.c.l.b16 %v3945
    %v3950 = vpack.c.b16 %v3949, %v3948
    %3951 = vrot.lane.b32.xlu0 %v3231, 32
    %v3952 = vpop.permute.xlu0 %3951
    %3953 = vrot.lane.b32.xlu0 %v3235, 32
    %v3954 = vpop.permute.xlu0 %3953
    %3955 = vrot.lane.b32.xlu0 %v3239, 32
    %v3956 = vpop.permute.xlu0 %3955
    %3957 = vrot.lane.b32.xlu0 %v3243, 32
    %v3958 = vpop.permute.xlu0 %3957
    %v3964 = vsel %vm3271, %v3950, 0
    %3966 = vmatprep.subr.bf16.mxu0 0
    %3967 = vmatpush1.bf16.msra.mxu0 0
    %3968 = vmatprep.subr.bf16.mxu0 0
    %3969 = vmatpush1.bf16.msra.mxu0 0
    %3970 = vmatprep.subr.bf16.mxu0 0
    %3971 = vmatpush1.bf16.msra.mxu0 0
    %3972 = vmatprep.subr.bf16.mxu0 0
    %3973 = vmatpush1.bf16.msra.mxu0 0
    %3974 = vmatprep.subr.bf16.mxu0 0
    %3975 = vmatpush1.bf16.msra.mxu0 %v3958
    %3976 = vmatprep.subr.bf16.mxu0 0
    %3977 = vmatpush1.bf16.msra.mxu0 %v3956
    %3978 = vmatprep.subr.bf16.mxu0 0
    %3979 = vmatpush1.bf16.msra.mxu0 %v3954
    %3980 = vmatprep.subr.bf16.mxu0 0
    %3981 = vmatpush1.bf16.msra.mxu0 %v3952
    %3982 = vmatprep.subr.bf16.mxu0 0
    %3983 = vmatpush2.bf16.msra.mxu0 0
    %3984 = vmatprep.subr.bf16.mxu0 0
    %3985 = vmatpush2.bf16.msra.mxu0 0
    %3986 = vmatprep.subr.bf16.mxu0 0
    %3987 = vmatpush2.bf16.msra.mxu0 0
    %3988 = vmatprep.subr.bf16.mxu0 0
    %3989 = vmatpush2.bf16.msra.mxu0 0
    %3990 = vmatprep.subr.bf16.mxu0 0
    %3991 = vmatpush2.bf16.msra.mxu0 0
    %3992 = vmatprep.subr.bf16.mxu0 0
    %3993 = vmatpush2.bf16.msra.mxu0 0
    %3994 = vmatprep.subr.bf16.mxu0 0
    %3995 = vmatpush2.bf16.msra.mxu0 0
    %3996 = vmatprep.subr.bf16.mxu0 0
    %3997 = vmatpush2.bf16.msra.mxu0 0
    %3998 = vmatprep.mubr.bf16.mxu0 0
    %3999 = vmatmul.mubr.bf16.gmra.mxu0 %v3964
    %v4000 = vpop.f32.mrf.mxu0
    %v4001 = vadd.f32 0.0, %v4000
    %v4002 = vpop.f32.mrf.mxu0
    %v4003 = vpop.f32.mrf.mxu0
    %v4004 = vadd.f32 0.0, %v4003
    %v4005 = vpop.f32.mrf.mxu0
    %4006 = vdwg.mxu0
    %v4007 = vadd.f32 %v3941, %v4001
    %v4008 = vadd.f32 %v3942, %v4004
    %s4009 = scalar_lea.vmem %s3, 96
    %v4010 = vld [vmem:[%s4009] sm:$0xf]
    %v4011 = vld [vmem:[%s4009 + $0x4] sm:$0xf]
    %v4014 = vunpack.c.l.b16 %v4010
    %v4015 = vunpack.c.l.b16 %v4011
    %v4016 = vpack.c.b16 %v4015, %v4014
    %v4018 = vsel %vm3271, %v4016, 0
    %4020 = vmatprep.subr.bf16.mxu0 0
    %4021 = vmatpush1.bf16.msra.mxu0 0
    %4022 = vmatprep.subr.bf16.mxu0 0
    %4023 = vmatpush1.bf16.msra.mxu0 0
    %4024 = vmatprep.subr.bf16.mxu0 0
    %4025 = vmatpush1.bf16.msra.mxu0 0
    %4026 = vmatprep.subr.bf16.mxu0 0
    %4027 = vmatpush1.bf16.msra.mxu0 0
    %4028 = vmatprep.subr.bf16.mxu0 0
    %4029 = vmatpush1.bf16.msra.mxu0 %v3244
    %4030 = vmatprep.subr.bf16.mxu0 0
    %4031 = vmatpush1.bf16.msra.mxu0 %v3240
    %4032 = vmatprep.subr.bf16.mxu0 0
    %4033 = vmatpush1.bf16.msra.mxu0 %v3236
    %4034 = vmatprep.subr.bf16.mxu0 0
    %4035 = vmatpush1.bf16.msra.mxu0 %v3232
    %4036 = vmatprep.subr.bf16.mxu0 0
    %4037 = vmatpush2.bf16.msra.mxu0 0
    %4038 = vmatprep.subr.bf16.mxu0 0
    %4039 = vmatpush2.bf16.msra.mxu0 0
    %4040 = vmatprep.subr.bf16.mxu0 0
    %4041 = vmatpush2.bf16.msra.mxu0 0
    %4042 = vmatprep.subr.bf16.mxu0 0
    %4043 = vmatpush2.bf16.msra.mxu0 0
    %4044 = vmatprep.subr.bf16.mxu0 0
    %4045 = vmatpush2.bf16.msra.mxu0 0
    %4046 = vmatprep.subr.bf16.mxu0 0
    %4047 = vmatpush2.bf16.msra.mxu0 0
    %4048 = vmatprep.subr.bf16.mxu0 0
    %4049 = vmatpush2.bf16.msra.mxu0 0
    %4050 = vmatprep.subr.bf16.mxu0 0
    %4051 = vmatpush2.bf16.msra.mxu0 0
    %4052 = vmatprep.mubr.bf16.mxu0 0
    %4053 = vmatmul.mubr.bf16.gmra.mxu0 %v4018
    %v4054 = vpop.f32.mrf.mxu0
    %v4055 = vadd.f32 0.0, %v4054
    %v4056 = vpop.f32.mrf.mxu0
    %v4057 = vpop.f32.mrf.mxu0
    %v4058 = vadd.f32 0.0, %v4057
    %v4059 = vpop.f32.mrf.mxu0
    %4060 = vdwg.mxu0
    %v4061 = vadd.f32 %v4007, %v4055
    %v4062 = vadd.f32 %v4008, %v4058
    %s4063 = scalar_lea.vmem %s3, 104
    %v4064 = vld [vmem:[%s4063] sm:$0xf]
    %v4065 = vld [vmem:[%s4063 + $0x4] sm:$0xf]
    %v4068 = vunpack.c.l.b16 %v4064
    %v4069 = vunpack.c.l.b16 %v4065
    %v4070 = vpack.c.b16 %v4069, %v4068
    %4075 = vrot.lane.b32.xlu0 %v3232, 96
    %v4076 = vpop.permute.xlu0 %4075
    %4077 = vrot.lane.b32.xlu0 %v3236, 96
    %v4078 = vpop.permute.xlu0 %4077
    %4079 = vrot.lane.b32.xlu0 %v3240, 96
    %v4080 = vpop.permute.xlu0 %4079
    %4081 = vrot.lane.b32.xlu0 %v3244, 96
    %v4082 = vpop.permute.xlu0 %4081
    %v4088 = vsel %vm3271, %v4070, 0
    %4090 = vmatprep.subr.bf16.mxu0 0
    %4091 = vmatpush1.bf16.msra.mxu0 0
    %4092 = vmatprep.subr.bf16.mxu0 0
    %4093 = vmatpush1.bf16.msra.mxu0 0
    %4094 = vmatprep.subr.bf16.mxu0 0
    %4095 = vmatpush1.bf16.msra.mxu0 0
    %4096 = vmatprep.subr.bf16.mxu0 0
    %4097 = vmatpush1.bf16.msra.mxu0 0
    %4098 = vmatprep.subr.bf16.mxu0 0
    %4099 = vmatpush1.bf16.msra.mxu0 %v4082
    %4100 = vmatprep.subr.bf16.mxu0 0
    %4101 = vmatpush1.bf16.msra.mxu0 %v4080
    %4102 = vmatprep.subr.bf16.mxu0 0
    %4103 = vmatpush1.bf16.msra.mxu0 %v4078
    %4104 = vmatprep.subr.bf16.mxu0 0
    %4105 = vmatpush1.bf16.msra.mxu0 %v4076
    %4106 = vmatprep.subr.bf16.mxu0 0
    %4107 = vmatpush2.bf16.msra.mxu0 0
    %4108 = vmatprep.subr.bf16.mxu0 0
    %4109 = vmatpush2.bf16.msra.mxu0 0
    %4110 = vmatprep.subr.bf16.mxu0 0
    %4111 = vmatpush2.bf16.msra.mxu0 0
    %4112 = vmatprep.subr.bf16.mxu0 0
    %4113 = vmatpush2.bf16.msra.mxu0 0
    %4114 = vmatprep.subr.bf16.mxu0 0
    %4115 = vmatpush2.bf16.msra.mxu0 0
    %4116 = vmatprep.subr.bf16.mxu0 0
    %4117 = vmatpush2.bf16.msra.mxu0 0
    %4118 = vmatprep.subr.bf16.mxu0 0
    %4119 = vmatpush2.bf16.msra.mxu0 0
    %4120 = vmatprep.subr.bf16.mxu0 0
    %4121 = vmatpush2.bf16.msra.mxu0 0
    %4122 = vmatprep.mubr.bf16.mxu0 0
    %4123 = vmatmul.mubr.bf16.gmra.mxu0 %v4088
    %v4124 = vpop.f32.mrf.mxu0
    %v4125 = vadd.f32 0.0, %v4124
    %v4126 = vpop.f32.mrf.mxu0
    %v4127 = vpop.f32.mrf.mxu0
    %v4128 = vadd.f32 0.0, %v4127
    %v4129 = vpop.f32.mrf.mxu0
    %4130 = vdwg.mxu0
    %v4131 = vadd.f32 %v4061, %v4125
    %v4132 = vadd.f32 %v4062, %v4128
    %s4133 = scalar_lea.vmem %s3, 112
    %v4134 = vld [vmem:[%s4133] sm:$0xf]
    %v4135 = vld [vmem:[%s4133 + $0x4] sm:$0xf]
    %v4138 = vunpack.c.l.b16 %v4134
    %v4139 = vunpack.c.l.b16 %v4135
    %v4140 = vpack.c.b16 %v4139, %v4138
    %4141 = vrot.lane.b32.xlu0 %v3232, 64
    %v4142 = vpop.permute.xlu0 %4141
    %4143 = vrot.lane.b32.xlu0 %v3236, 64
    %v4144 = vpop.permute.xlu0 %4143
    %4145 = vrot.lane.b32.xlu0 %v3240, 64
    %v4146 = vpop.permute.xlu0 %4145
    %4147 = vrot.lane.b32.xlu0 %v3244, 64
    %v4148 = vpop.permute.xlu0 %4147
    %v4154 = vsel %vm3271, %v4140, 0
    %4156 = vmatprep.subr.bf16.mxu0 0
    %4157 = vmatpush1.bf16.msra.mxu0 0
    %4158 = vmatprep.subr.bf16.mxu0 0
    %4159 = vmatpush1.bf16.msra.mxu0 0
    %4160 = vmatprep.subr.bf16.mxu0 0
    %4161 = vmatpush1.bf16.msra.mxu0 0
    %4162 = vmatprep.subr.bf16.mxu0 0
    %4163 = vmatpush1.bf16.msra.mxu0 0
    %4164 = vmatprep.subr.bf16.mxu0 0
    %4165 = vmatpush1.bf16.msra.mxu0 %v4148
    %4166 = vmatprep.subr.bf16.mxu0 0
    %4167 = vmatpush1.bf16.msra.mxu0 %v4146
    %4168 = vmatprep.subr.bf16.mxu0 0
    %4169 = vmatpush1.bf16.msra.mxu0 %v4144
    %4170 = vmatprep.subr.bf16.mxu0 0
    %4171 = vmatpush1.bf16.msra.mxu0 %v4142
    %4172 = vmatprep.subr.bf16.mxu0 0
    %4173 = vmatpush2.bf16.msra.mxu0 0
    %4174 = vmatprep.subr.bf16.mxu0 0
    %4175 = vmatpush2.bf16.msra.mxu0 0
    %4176 = vmatprep.subr.bf16.mxu0 0
    %4177 = vmatpush2.bf16.msra.mxu0 0
    %4178 = vmatprep.subr.bf16.mxu0 0
    %4179 = vmatpush2.bf16.msra.mxu0 0
    %4180 = vmatprep.subr.bf16.mxu0 0
    %4181 = vmatpush2.bf16.msra.mxu0 0
    %4182 = vmatprep.subr.bf16.mxu0 0
    %4183 = vmatpush2.bf16.msra.mxu0 0
    %4184 = vmatprep.subr.bf16.mxu0 0
    %4185 = vmatpush2.bf16.msra.mxu0 0
    %4186 = vmatprep.subr.bf16.mxu0 0
    %4187 = vmatpush2.bf16.msra.mxu0 0
    %4188 = vmatprep.mubr.bf16.mxu0 0
    %4189 = vmatmul.mubr.bf16.gmra.mxu0 %v4154
    %v4190 = vpop.f32.mrf.mxu0
    %v4191 = vadd.f32 0.0, %v4190
    %v4192 = vpop.f32.mrf.mxu0
    %v4193 = vpop.f32.mrf.mxu0
    %v4194 = vadd.f32 0.0, %v4193
    %v4195 = vpop.f32.mrf.mxu0
    %4196 = vdwg.mxu0
    %v4197 = vadd.f32 %v4131, %v4191
    %v4198 = vadd.f32 %v4132, %v4194
    %s4199 = scalar_lea.vmem %s3, 120
    %v4200 = vld [vmem:[%s4199] sm:$0xf]
    %v4201 = vld [vmem:[%s4199 + $0x4] sm:$0xf]
    %v4204 = vunpack.c.l.b16 %v4200
    %v4205 = vunpack.c.l.b16 %v4201
    %v4206 = vpack.c.b16 %v4205, %v4204
    %4207 = vrot.lane.b32.xlu0 %v3232, 32
    %v4208 = vpop.permute.xlu0 %4207
    %4209 = vrot.lane.b32.xlu0 %v3236, 32
    %v4210 = vpop.permute.xlu0 %4209
    %4211 = vrot.lane.b32.xlu0 %v3240, 32
    %v4212 = vpop.permute.xlu0 %4211
    %4213 = vrot.lane.b32.xlu0 %v3244, 32
    %v4214 = vpop.permute.xlu0 %4213
    %v4220 = vsel %vm3271, %v4206, 0
    %4222 = vmatprep.subr.bf16.mxu0 0
    %4223 = vmatpush1.bf16.msra.mxu0 0
    %4224 = vmatprep.subr.bf16.mxu0 0
    %4225 = vmatpush1.bf16.msra.mxu0 0
    %4226 = vmatprep.subr.bf16.mxu0 0
    %4227 = vmatpush1.bf16.msra.mxu0 0
    %4228 = vmatprep.subr.bf16.mxu0 0
    %4229 = vmatpush1.bf16.msra.mxu0 0
    %4230 = vmatprep.subr.bf16.mxu0 0
    %4231 = vmatpush1.bf16.msra.mxu0 %v4214
    %4232 = vmatprep.subr.bf16.mxu0 0
    %4233 = vmatpush1.bf16.msra.mxu0 %v4212
    %4234 = vmatprep.subr.bf16.mxu0 0
    %4235 = vmatpush1.bf16.msra.mxu0 %v4210
    %4236 = vmatprep.subr.bf16.mxu0 0
    %4237 = vmatpush1.bf16.msra.mxu0 %v4208
    %4238 = vmatprep.subr.bf16.mxu0 0
    %4239 = vmatpush2.bf16.msra.mxu0 0
    %4240 = vmatprep.subr.bf16.mxu0 0
    %4241 = vmatpush2.bf16.msra.mxu0 0
    %4242 = vmatprep.subr.bf16.mxu0 0
    %4243 = vmatpush2.bf16.msra.mxu0 0
    %4244 = vmatprep.subr.bf16.mxu0 0
    %4245 = vmatpush2.bf16.msra.mxu0 0
    %4246 = vmatprep.subr.bf16.mxu0 0
    %4247 = vmatpush2.bf16.msra.mxu0 0
    %4248 = vmatprep.subr.bf16.mxu0 0
    %4249 = vmatpush2.bf16.msra.mxu0 0
    %4250 = vmatprep.subr.bf16.mxu0 0
    %4251 = vmatpush2.bf16.msra.mxu0 0
    %4252 = vmatprep.subr.bf16.mxu0 0
    %4253 = vmatpush2.bf16.msra.mxu0 0
    %4254 = vmatprep.mubr.bf16.mxu0 0
    %4255 = vmatmul.mubr.bf16.gmra.mxu0 %v4220
    %v4256 = vpop.f32.mrf.mxu0
    %v4257 = vadd.f32 0.0, %v4256
    %v4258 = vpop.f32.mrf.mxu0
    %v4259 = vpop.f32.mrf.mxu0
    %v4260 = vadd.f32 0.0, %v4259
    %v4261 = vpop.f32.mrf.mxu0
    %4262 = vdwg.mxu0
    %v4263 = vadd.f32 %v4197, %v4257
    %v4264 = vadd.f32 %v4198, %v4260
    %vm4265 = vcmask 261120
    %v4266 = vsel %vm4265, %v4263, 0.0
    %v4267 = vsel %vm4265, %v4264, 0.0
    %v4268 = vadd.f32 %v4266, %v4267
    %v4269 = vrot.slane %v4268, 4
    %v4270 = vadd.f32 %v4268, %v4269
    %v4271 = vrot.slane %v4270, 2
    %v4272 = vadd.f32 %v4270, %v4271
    %v4273 = vrot.slane %v4272, 1
    %v4274 = vadd.f32 %v4272, %v4273
    %v4275 = vmul.f32 %v4263, %v4263
    %v4276 = vmul.f32 %v4264, %v4264
    %v4277 = vsel %vm4265, %v4275, 0.0
    %v4278 = vsel %vm4265, %v4276, 0.0
    %v4279 = vadd.f32 %v4277, %v4278
    %v4280 = vrot.slane %v4279, 4
    %v4281 = vadd.f32 %v4279, %v4280
    %v4282 = vrot.slane %v4281, 2
    %v4283 = vadd.f32 %v4281, %v4282
    %v4284 = vrot.slane %v4283, 1
    %v4285 = vadd.f32 %v4283, %v4284
    %v4286 = vadd.f32 %v4274, 0.0
    %v4287 = vadd.f32 %v4285, 0.0
    %4289 = vrot.lane.b32.xlu0 %v4274, 112
    %v4290 = vpop.permute.xlu0 %4289
    %v4292 = vadd.f32 %v4286, %v4290
    %4294 = vrot.lane.b32.xlu0 %v4285, 112
    %v4295 = vpop.permute.xlu0 %4294
    %v4297 = vadd.f32 %v4287, %v4295
    %v4298 = vmul.f32 %v4292, 0.03125
    %v4299 = vmul.f32 %v4297, 0.03125
    %v4300 = vmul.f32 %v4298, %v4298
    %v4301 = vsub.f32 %v4299, %v4300
    %v4302 = vadd.f32 %v4301, 1e-05
    %v4303 = vrsqrt.pop %v4302
    %4305 = vrot.lane.b32.xlu0 %v4298, 16
    %v4306 = vpop.permute.xlu0 %4305
    %v4308 = vsel %vm3070, %v4298, %v4306
    %4310 = vrot.lane.b32.xlu0 %v4303, 16
    %v4311 = vpop.permute.xlu0 %4310
    %v4313 = vsel %vm3070, %v4303, %v4311
    %v4314 = vlaneseq
    %v4315 = vshrl.u32 %v4314, 7
    %v4316 = vsub.s32 0, %v4315
    %v4317 = vrot.slane %v4308, %v4316
    %v4318 = vsub.f32 %v4263, %v4317
    %v4319 = vsub.f32 %v4264, %v4317
    %v4320 = vlaneseq
    %v4321 = vshrl.u32 %v4320, 7
    %v4322 = vsub.s32 0, %v4321
    %v4323 = vrot.slane %v4313, %v4322
    %v4324 = vmul.f32 %v4318, %v4323
    %v4325 = vmul.f32 %v4319, %v4323
    %vm4326 = vcmp.gt.f32.partialorder %v4324, 0.0
    %vm4327 = vcmp.gt.f32.partialorder %v4325, 0.0
    %v4328 = vmul.f32 %v4324, 0.2
    %v4329 = vmul.f32 %v4325, 0.2
    %v4330 = vsel %vm4326, %v4324, %v4328
    %v4331 = vsel %vm4327, %v4325, %v4329
    %v4332 = vpack.c.bf16 %v4331, %v4330
    %v4333 = vld [vmem:[%s6] sm:$0xff]
    %v4334 = vld [vmem:[%s6 + $0x8] sm:$0xff]
    %v4335 = vld [vmem:[%s6 + $0x10] sm:$0xff]
    %v4336 = vld [vmem:[%s6 + $0x18] sm:$0xff]
    %v4337 = vld [vmem:[%s6 + $0x20] sm:$0xff]
    %v4338 = vld [vmem:[%s6 + $0x28] sm:$0xff]
    %v4339 = vld [vmem:[%s6 + $0x30] sm:$0xff]
    %v4340 = vld [vmem:[%s6 + $0x38] sm:$0xff]
    %v4349 = vunpack.c.l.b16 %v4333
    %v4350 = vunpack.c.h.b16 %v4333
    %v4351 = vunpack.c.l.b16 %v4334
    %v4352 = vunpack.c.h.b16 %v4334
    %v4353 = vunpack.c.l.b16 %v4335
    %v4354 = vunpack.c.h.b16 %v4335
    %v4355 = vunpack.c.l.b16 %v4336
    %v4356 = vunpack.c.h.b16 %v4336
    %v4357 = vunpack.c.l.b16 %v4337
    %v4358 = vunpack.c.h.b16 %v4337
    %v4359 = vunpack.c.l.b16 %v4338
    %v4360 = vunpack.c.h.b16 %v4338
    %v4361 = vunpack.c.l.b16 %v4339
    %v4362 = vunpack.c.h.b16 %v4339
    %v4363 = vunpack.c.l.b16 %v4340
    %v4364 = vunpack.c.h.b16 %v4340
    %v4365 = vpack.c.b16 %v4353, %v4349
    %v4366 = vpack.c.b16 %v4354, %v4350
    %v4367 = vpack.c.b16 %v4355, %v4351
    %v4368 = vpack.c.b16 %v4356, %v4352
    %v4369 = vpack.c.b16 %v4361, %v4357
    %v4370 = vpack.c.b16 %v4362, %v4358
    %v4371 = vpack.c.b16 %v4363, %v4359
    %v4372 = vpack.c.b16 %v4364, %v4360
    %v4382 = vsel %vm4265, %v4332, 0
    %4384 = vmatprep.subr.bf16.mxu0 0
    %4385 = vmatpush1.bf16.msra.mxu0 0
    %4386 = vmatprep.subr.bf16.mxu0 0
    %4387 = vmatpush1.bf16.msra.mxu0 0
    %4388 = vmatprep.subr.bf16.mxu0 0
    %4389 = vmatpush1.bf16.msra.mxu0 0
    %4390 = vmatprep.subr.bf16.mxu0 0
    %4391 = vmatpush1.bf16.msra.mxu0 0
    %4392 = vmatprep.subr.bf16.mxu0 0
    %4393 = vmatpush1.bf16.msra.mxu0 0
    %4394 = vmatprep.subr.bf16.mxu0 0
    %4395 = vmatpush1.bf16.msra.mxu0 0
    %4396 = vmatprep.subr.bf16.mxu0 %v4370
    %4397 = vmatpush1.bf16.msra.mxu0 %v4369
    %4398 = vmatprep.subr.bf16.mxu0 %v4366
    %4399 = vmatpush1.bf16.msra.mxu0 %v4365
    %4400 = vmatprep.subr.bf16.mxu0 0
    %4401 = vmatpush2.bf16.msra.mxu0 0
    %4402 = vmatprep.subr.bf16.mxu0 0
    %4403 = vmatpush2.bf16.msra.mxu0 0
    %4404 = vmatprep.subr.bf16.mxu0 0
    %4405 = vmatpush2.bf16.msra.mxu0 0
    %4406 = vmatprep.subr.bf16.mxu0 0
    %4407 = vmatpush2.bf16.msra.mxu0 0
    %4408 = vmatprep.subr.bf16.mxu0 0
    %4409 = vmatpush2.bf16.msra.mxu0 0
    %4410 = vmatprep.subr.bf16.mxu0 0
    %4411 = vmatpush2.bf16.msra.mxu0 0
    %4412 = vmatprep.subr.bf16.mxu0 0
    %4413 = vmatpush2.bf16.msra.mxu0 0
    %4414 = vmatprep.subr.bf16.mxu0 0
    %4415 = vmatpush2.bf16.msra.mxu0 0
    %4416 = vmatprep.mubr.bf16.mxu0 0
    %4417 = vmatmul.mubr.bf16.gmra.mxu0 %v4382
    %v4418 = vpop.f32.mrf.mxu0
    %v4419 = vadd.f32 0.0, %v4418
    %v4420 = vpop.f32.mrf.mxu0
    %v4421 = vadd.f32 0.0, %v4420
    %v4422 = vpop.f32.mrf.mxu0
    %v4423 = vadd.f32 0.0, %v4422
    %v4424 = vpop.f32.mrf.mxu0
    %v4425 = vadd.f32 0.0, %v4424
    %4426 = vdwg.mxu0
    %4427 = vmatprep.subr.bf16.mxu0 0
    %4428 = vmatpush1.bf16.msra.mxu0 0
    %4429 = vmatprep.subr.bf16.mxu0 0
    %4430 = vmatpush1.bf16.msra.mxu0 0
    %4431 = vmatprep.subr.bf16.mxu0 0
    %4432 = vmatpush1.bf16.msra.mxu0 0
    %4433 = vmatprep.subr.bf16.mxu0 0
    %4434 = vmatpush1.bf16.msra.mxu0 0
    %4435 = vmatprep.subr.bf16.mxu0 0
    %4436 = vmatpush1.bf16.msra.mxu0 0
    %4437 = vmatprep.subr.bf16.mxu0 0
    %4438 = vmatpush1.bf16.msra.mxu0 0
    %4439 = vmatprep.subr.bf16.mxu0 %v4372
    %4440 = vmatpush1.bf16.msra.mxu0 %v4371
    %4441 = vmatprep.subr.bf16.mxu0 %v4368
    %4442 = vmatpush1.bf16.msra.mxu0 %v4367
    %4443 = vmatprep.subr.bf16.mxu0 0
    %4444 = vmatpush2.bf16.msra.mxu0 0
    %4445 = vmatprep.subr.bf16.mxu0 0
    %4446 = vmatpush2.bf16.msra.mxu0 0
    %4447 = vmatprep.subr.bf16.mxu0 0
    %4448 = vmatpush2.bf16.msra.mxu0 0
    %4449 = vmatprep.subr.bf16.mxu0 0
    %4450 = vmatpush2.bf16.msra.mxu0 0
    %4451 = vmatprep.subr.bf16.mxu0 0
    %4452 = vmatpush2.bf16.msra.mxu0 0
    %4453 = vmatprep.subr.bf16.mxu0 0
    %4454 = vmatpush2.bf16.msra.mxu0 0
    %4455 = vmatprep.subr.bf16.mxu0 0
    %4456 = vmatpush2.bf16.msra.mxu0 0
    %4457 = vmatprep.subr.bf16.mxu0 0
    %4458 = vmatpush2.bf16.msra.mxu0 0
    %4459 = vmatprep.mubr.bf16.mxu0 0
    %4460 = vmatmul.mubr.bf16.gmra.mxu0 %v4382
    %v4461 = vpop.f32.mrf.mxu0
    %v4462 = vadd.f32 0.0, %v4461
    %v4463 = vpop.f32.mrf.mxu0
    %v4464 = vadd.f32 0.0, %v4463
    %v4465 = vpop.f32.mrf.mxu0
    %v4466 = vadd.f32 0.0, %v4465
    %v4467 = vpop.f32.mrf.mxu0
    %v4468 = vadd.f32 0.0, %v4467
    %4469 = vdwg.mxu0
    %v4470 = vpack.c.bf16 %v4423, %v4419
    %v4471 = vpack.c.bf16 %v4425, %v4421
    %v4472 = vpack.c.bf16 %v4466, %v4462
    %v4473 = vpack.c.bf16 %v4468, %v4464
    %v4474 = vld [vmem:[%s5] sm:$0x1]
    %s4475 = scalar_lea.vmem %s5, 1
    %v4476 = vld [vmem:[%s4475] sm:$0x1]
    %4478 = vrot.lane.b32.xlu0 %v4470, 96
    %v4479 = vpop.permute.xlu0 %4478
    %v4482 = vsel %vm3070, %v4476, 0
    %4484 = vmatprep.subr.bf16.mxu0 0
    %4485 = vmatpush1.bf16.msra.mxu0 0
    %4486 = vmatprep.subr.bf16.mxu0 0
    %4487 = vmatpush1.bf16.msra.mxu0 0
    %4488 = vmatprep.subr.bf16.mxu0 0
    %4489 = vmatpush1.bf16.msra.mxu0 0
    %4490 = vmatprep.subr.bf16.mxu0 0
    %4491 = vmatpush1.bf16.msra.mxu0 0
    %4492 = vmatprep.subr.bf16.mxu0 0
    %4493 = vmatpush1.bf16.msra.mxu0 0
    %4494 = vmatprep.subr.bf16.mxu0 0
    %4495 = vmatpush1.bf16.msra.mxu0 0
    %4496 = vmatprep.subr.bf16.mxu0 0
    %4497 = vmatpush1.bf16.msra.mxu0 0
    %4498 = vmatprep.subr.bf16.mxu0 0
    %4499 = vmatpush1.bf16.msra.mxu0 %v4479
    %4500 = vmatprep.subr.bf16.mxu0 0
    %4501 = vmatpush2.bf16.msra.mxu0 0
    %4502 = vmatprep.subr.bf16.mxu0 0
    %4503 = vmatpush2.bf16.msra.mxu0 0
    %4504 = vmatprep.subr.bf16.mxu0 0
    %4505 = vmatpush2.bf16.msra.mxu0 0
    %4506 = vmatprep.subr.bf16.mxu0 0
    %4507 = vmatpush2.bf16.msra.mxu0 0
    %4508 = vmatprep.subr.bf16.mxu0 0
    %4509 = vmatpush2.bf16.msra.mxu0 0
    %4510 = vmatprep.subr.bf16.mxu0 0
    %4511 = vmatpush2.bf16.msra.mxu0 0
    %4512 = vmatprep.subr.bf16.mxu0 0
    %4513 = vmatpush2.bf16.msra.mxu0 0
    %4514 = vmatprep.subr.bf16.mxu0 0
    %4515 = vmatpush2.bf16.msra.mxu0 0
    %4516 = vmatprep.mubr.bf16.mxu0 0
    %4517 = vmatmul.mubr.bf16.gmra.mxu0 %v4482
    %v4518 = vpop.f32.mrf.mxu0
    %v4519 = vadd.f32 0.0, %v4518
    %v4520 = vpop.f32.mrf.mxu0
    %v4521 = vpop.f32.mrf.mxu0
    %v4522 = vpop.f32.mrf.mxu0
    %4523 = vdwg.mxu0
    %v4525 = vsel %vm3070, %v4474, 0
    %4527 = vmatprep.subr.bf16.mxu0 0
    %4528 = vmatpush1.bf16.msra.mxu0 0
    %4529 = vmatprep.subr.bf16.mxu0 0
    %4530 = vmatpush1.bf16.msra.mxu0 0
    %4531 = vmatprep.subr.bf16.mxu0 0
    %4532 = vmatpush1.bf16.msra.mxu0 0
    %4533 = vmatprep.subr.bf16.mxu0 0
    %4534 = vmatpush1.bf16.msra.mxu0 0
    %4535 = vmatprep.subr.bf16.mxu0 0
    %4536 = vmatpush1.bf16.msra.mxu0 0
    %4537 = vmatprep.subr.bf16.mxu0 0
    %4538 = vmatpush1.bf16.msra.mxu0 0
    %4539 = vmatprep.subr.bf16.mxu0 0
    %4540 = vmatpush1.bf16.msra.mxu0 0
    %4541 = vmatprep.subr.bf16.mxu0 0
    %4542 = vmatpush1.bf16.msra.mxu0 %v4470
    %4543 = vmatprep.subr.bf16.mxu0 0
    %4544 = vmatpush2.bf16.msra.mxu0 0
    %4545 = vmatprep.subr.bf16.mxu0 0
    %4546 = vmatpush2.bf16.msra.mxu0 0
    %4547 = vmatprep.subr.bf16.mxu0 0
    %4548 = vmatpush2.bf16.msra.mxu0 0
    %4549 = vmatprep.subr.bf16.mxu0 0
    %4550 = vmatpush2.bf16.msra.mxu0 0
    %4551 = vmatprep.subr.bf16.mxu0 0
    %4552 = vmatpush2.bf16.msra.mxu0 0
    %4553 = vmatprep.subr.bf16.mxu0 0
    %4554 = vmatpush2.bf16.msra.mxu0 0
    %4555 = vmatprep.subr.bf16.mxu0 0
    %4556 = vmatpush2.bf16.msra.mxu0 0
    %4557 = vmatprep.subr.bf16.mxu0 0
    %4558 = vmatpush2.bf16.msra.mxu0 0
    %4559 = vmatprep.mubr.bf16.mxu0 0
    %4560 = vmatmul.mubr.bf16.gmra.mxu0 %v4525
    %v4561 = vpop.f32.mrf.mxu0
    %v4562 = vadd.f32 %v4519, %v4561
    %v4563 = vpop.f32.mrf.mxu0
    %v4564 = vpop.f32.mrf.mxu0
    %v4565 = vpop.f32.mrf.mxu0
    %4566 = vdwg.mxu0
    %s4567 = scalar_lea.vmem %s5, 2
    %v4568 = vld [vmem:[%s4567] sm:$0x1]
    %4569 = vrot.lane.b32.xlu0 %v4470, 64
    %v4570 = vpop.permute.xlu0 %4569
    %v4573 = vsel %vm3070, %v4568, 0
    %4575 = vmatprep.subr.bf16.mxu0 0
    %4576 = vmatpush1.bf16.msra.mxu0 0
    %4577 = vmatprep.subr.bf16.mxu0 0
    %4578 = vmatpush1.bf16.msra.mxu0 0
    %4579 = vmatprep.subr.bf16.mxu0 0
    %4580 = vmatpush1.bf16.msra.mxu0 0
    %4581 = vmatprep.subr.bf16.mxu0 0
    %4582 = vmatpush1.bf16.msra.mxu0 0
    %4583 = vmatprep.subr.bf16.mxu0 0
    %4584 = vmatpush1.bf16.msra.mxu0 0
    %4585 = vmatprep.subr.bf16.mxu0 0
    %4586 = vmatpush1.bf16.msra.mxu0 0
    %4587 = vmatprep.subr.bf16.mxu0 0
    %4588 = vmatpush1.bf16.msra.mxu0 0
    %4589 = vmatprep.subr.bf16.mxu0 0
    %4590 = vmatpush1.bf16.msra.mxu0 %v4570
    %4591 = vmatprep.subr.bf16.mxu0 0
    %4592 = vmatpush2.bf16.msra.mxu0 0
    %4593 = vmatprep.subr.bf16.mxu0 0
    %4594 = vmatpush2.bf16.msra.mxu0 0
    %4595 = vmatprep.subr.bf16.mxu0 0
    %4596 = vmatpush2.bf16.msra.mxu0 0
    %4597 = vmatprep.subr.bf16.mxu0 0
    %4598 = vmatpush2.bf16.msra.mxu0 0
    %4599 = vmatprep.subr.bf16.mxu0 0
    %4600 = vmatpush2.bf16.msra.mxu0 0
    %4601 = vmatprep.subr.bf16.mxu0 0
    %4602 = vmatpush2.bf16.msra.mxu0 0
    %4603 = vmatprep.subr.bf16.mxu0 0
    %4604 = vmatpush2.bf16.msra.mxu0 0
    %4605 = vmatprep.subr.bf16.mxu0 0
    %4606 = vmatpush2.bf16.msra.mxu0 0
    %4607 = vmatprep.mubr.bf16.mxu0 0
    %4608 = vmatmul.mubr.bf16.gmra.mxu0 %v4573
    %v4609 = vpop.f32.mrf.mxu0
    %v4610 = vadd.f32 0.0, %v4609
    %v4611 = vpop.f32.mrf.mxu0
    %v4612 = vpop.f32.mrf.mxu0
    %v4613 = vpop.f32.mrf.mxu0
    %4614 = vdwg.mxu0
    %v4615 = vadd.f32 %v4562, %v4610
    %s4616 = scalar_lea.vmem %s5, 3
    %v4617 = vld [vmem:[%s4616] sm:$0x1]
    %4618 = vrot.lane.b32.xlu0 %v4470, 32
    %v4619 = vpop.permute.xlu0 %4618
    %v4622 = vsel %vm3070, %v4617, 0
    %4624 = vmatprep.subr.bf16.mxu0 0
    %4625 = vmatpush1.bf16.msra.mxu0 0
    %4626 = vmatprep.subr.bf16.mxu0 0
    %4627 = vmatpush1.bf16.msra.mxu0 0
    %4628 = vmatprep.subr.bf16.mxu0 0
    %4629 = vmatpush1.bf16.msra.mxu0 0
    %4630 = vmatprep.subr.bf16.mxu0 0
    %4631 = vmatpush1.bf16.msra.mxu0 0
    %4632 = vmatprep.subr.bf16.mxu0 0
    %4633 = vmatpush1.bf16.msra.mxu0 0
    %4634 = vmatprep.subr.bf16.mxu0 0
    %4635 = vmatpush1.bf16.msra.mxu0 0
    %4636 = vmatprep.subr.bf16.mxu0 0
    %4637 = vmatpush1.bf16.msra.mxu0 0
    %4638 = vmatprep.subr.bf16.mxu0 0
    %4639 = vmatpush1.bf16.msra.mxu0 %v4619
    %4640 = vmatprep.subr.bf16.mxu0 0
    %4641 = vmatpush2.bf16.msra.mxu0 0
    %4642 = vmatprep.subr.bf16.mxu0 0
    %4643 = vmatpush2.bf16.msra.mxu0 0
    %4644 = vmatprep.subr.bf16.mxu0 0
    %4645 = vmatpush2.bf16.msra.mxu0 0
    %4646 = vmatprep.subr.bf16.mxu0 0
    %4647 = vmatpush2.bf16.msra.mxu0 0
    %4648 = vmatprep.subr.bf16.mxu0 0
    %4649 = vmatpush2.bf16.msra.mxu0 0
    %4650 = vmatprep.subr.bf16.mxu0 0
    %4651 = vmatpush2.bf16.msra.mxu0 0
    %4652 = vmatprep.subr.bf16.mxu0 0
    %4653 = vmatpush2.bf16.msra.mxu0 0
    %4654 = vmatprep.subr.bf16.mxu0 0
    %4655 = vmatpush2.bf16.msra.mxu0 0
    %4656 = vmatprep.mubr.bf16.mxu0 0
    %4657 = vmatmul.mubr.bf16.gmra.mxu0 %v4622
    %v4658 = vpop.f32.mrf.mxu0
    %v4659 = vadd.f32 0.0, %v4658
    %v4660 = vpop.f32.mrf.mxu0
    %v4661 = vpop.f32.mrf.mxu0
    %v4662 = vpop.f32.mrf.mxu0
    %4663 = vdwg.mxu0
    %v4664 = vadd.f32 %v4615, %v4659
    %s4665 = scalar_lea.vmem %s5, 4
    %v4666 = vld [vmem:[%s4665] sm:$0x1]
    %v4668 = vsel %vm3070, %v4666, 0
    %4670 = vmatprep.subr.bf16.mxu0 0
    %4671 = vmatpush1.bf16.msra.mxu0 0
    %4672 = vmatprep.subr.bf16.mxu0 0
    %4673 = vmatpush1.bf16.msra.mxu0 0
    %4674 = vmatprep.subr.bf16.mxu0 0
    %4675 = vmatpush1.bf16.msra.mxu0 0
    %4676 = vmatprep.subr.bf16.mxu0 0
    %4677 = vmatpush1.bf16.msra.mxu0 0
    %4678 = vmatprep.subr.bf16.mxu0 0
    %4679 = vmatpush1.bf16.msra.mxu0 0
    %4680 = vmatprep.subr.bf16.mxu0 0
    %4681 = vmatpush1.bf16.msra.mxu0 0
    %4682 = vmatprep.subr.bf16.mxu0 0
    %4683 = vmatpush1.bf16.msra.mxu0 0
    %4684 = vmatprep.subr.bf16.mxu0 0
    %4685 = vmatpush1.bf16.msra.mxu0 %v4471
    %4686 = vmatprep.subr.bf16.mxu0 0
    %4687 = vmatpush2.bf16.msra.mxu0 0
    %4688 = vmatprep.subr.bf16.mxu0 0
    %4689 = vmatpush2.bf16.msra.mxu0 0
    %4690 = vmatprep.subr.bf16.mxu0 0
    %4691 = vmatpush2.bf16.msra.mxu0 0
    %4692 = vmatprep.subr.bf16.mxu0 0
    %4693 = vmatpush2.bf16.msra.mxu0 0
    %4694 = vmatprep.subr.bf16.mxu0 0
    %4695 = vmatpush2.bf16.msra.mxu0 0
    %4696 = vmatprep.subr.bf16.mxu0 0
    %4697 = vmatpush2.bf16.msra.mxu0 0
    %4698 = vmatprep.subr.bf16.mxu0 0
    %4699 = vmatpush2.bf16.msra.mxu0 0
    %4700 = vmatprep.subr.bf16.mxu0 0
    %4701 = vmatpush2.bf16.msra.mxu0 0
    %4702 = vmatprep.mubr.bf16.mxu0 0
    %4703 = vmatmul.mubr.bf16.gmra.mxu0 %v4668
    %v4704 = vpop.f32.mrf.mxu0
    %v4705 = vadd.f32 0.0, %v4704
    %v4706 = vpop.f32.mrf.mxu0
    %v4707 = vpop.f32.mrf.mxu0
    %v4708 = vpop.f32.mrf.mxu0
    %4709 = vdwg.mxu0
    %v4710 = vadd.f32 %v4664, %v4705
    %s4711 = scalar_lea.vmem %s5, 5
    %v4712 = vld [vmem:[%s4711] sm:$0x1]
    %4714 = vrot.lane.b32.xlu0 %v4471, 96
    %v4715 = vpop.permute.xlu0 %4714
    %v4718 = vsel %vm3070, %v4712, 0
    %4720 = vmatprep.subr.bf16.mxu0 0
    %4721 = vmatpush1.bf16.msra.mxu0 0
    %4722 = vmatprep.subr.bf16.mxu0 0
    %4723 = vmatpush1.bf16.msra.mxu0 0
    %4724 = vmatprep.subr.bf16.mxu0 0
    %4725 = vmatpush1.bf16.msra.mxu0 0
    %4726 = vmatprep.subr.bf16.mxu0 0
    %4727 = vmatpush1.bf16.msra.mxu0 0
    %4728 = vmatprep.subr.bf16.mxu0 0
    %4729 = vmatpush1.bf16.msra.mxu0 0
    %4730 = vmatprep.subr.bf16.mxu0 0
    %4731 = vmatpush1.bf16.msra.mxu0 0
    %4732 = vmatprep.subr.bf16.mxu0 0
    %4733 = vmatpush1.bf16.msra.mxu0 0
    %4734 = vmatprep.subr.bf16.mxu0 0
    %4735 = vmatpush1.bf16.msra.mxu0 %v4715
    %4736 = vmatprep.subr.bf16.mxu0 0
    %4737 = vmatpush2.bf16.msra.mxu0 0
    %4738 = vmatprep.subr.bf16.mxu0 0
    %4739 = vmatpush2.bf16.msra.mxu0 0
    %4740 = vmatprep.subr.bf16.mxu0 0
    %4741 = vmatpush2.bf16.msra.mxu0 0
    %4742 = vmatprep.subr.bf16.mxu0 0
    %4743 = vmatpush2.bf16.msra.mxu0 0
    %4744 = vmatprep.subr.bf16.mxu0 0
    %4745 = vmatpush2.bf16.msra.mxu0 0
    %4746 = vmatprep.subr.bf16.mxu0 0
    %4747 = vmatpush2.bf16.msra.mxu0 0
    %4748 = vmatprep.subr.bf16.mxu0 0
    %4749 = vmatpush2.bf16.msra.mxu0 0
    %4750 = vmatprep.subr.bf16.mxu0 0
    %4751 = vmatpush2.bf16.msra.mxu0 0
    %4752 = vmatprep.mubr.bf16.mxu0 0
    %4753 = vmatmul.mubr.bf16.gmra.mxu0 %v4718
    %v4754 = vpop.f32.mrf.mxu0
    %v4755 = vadd.f32 0.0, %v4754
    %v4756 = vpop.f32.mrf.mxu0
    %v4757 = vpop.f32.mrf.mxu0
    %v4758 = vpop.f32.mrf.mxu0
    %4759 = vdwg.mxu0
    %v4760 = vadd.f32 %v4710, %v4755
    %s4761 = scalar_lea.vmem %s5, 6
    %v4762 = vld [vmem:[%s4761] sm:$0x1]
    %4763 = vrot.lane.b32.xlu0 %v4471, 64
    %v4764 = vpop.permute.xlu0 %4763
    %v4767 = vsel %vm3070, %v4762, 0
    %4769 = vmatprep.subr.bf16.mxu0 0
    %4770 = vmatpush1.bf16.msra.mxu0 0
    %4771 = vmatprep.subr.bf16.mxu0 0
    %4772 = vmatpush1.bf16.msra.mxu0 0
    %4773 = vmatprep.subr.bf16.mxu0 0
    %4774 = vmatpush1.bf16.msra.mxu0 0
    %4775 = vmatprep.subr.bf16.mxu0 0
    %4776 = vmatpush1.bf16.msra.mxu0 0
    %4777 = vmatprep.subr.bf16.mxu0 0
    %4778 = vmatpush1.bf16.msra.mxu0 0
    %4779 = vmatprep.subr.bf16.mxu0 0
    %4780 = vmatpush1.bf16.msra.mxu0 0
    %4781 = vmatprep.subr.bf16.mxu0 0
    %4782 = vmatpush1.bf16.msra.mxu0 0
    %4783 = vmatprep.subr.bf16.mxu0 0
    %4784 = vmatpush1.bf16.msra.mxu0 %v4764
    %4785 = vmatprep.subr.bf16.mxu0 0
    %4786 = vmatpush2.bf16.msra.mxu0 0
    %4787 = vmatprep.subr.bf16.mxu0 0
    %4788 = vmatpush2.bf16.msra.mxu0 0
    %4789 = vmatprep.subr.bf16.mxu0 0
    %4790 = vmatpush2.bf16.msra.mxu0 0
    %4791 = vmatprep.subr.bf16.mxu0 0
    %4792 = vmatpush2.bf16.msra.mxu0 0
    %4793 = vmatprep.subr.bf16.mxu0 0
    %4794 = vmatpush2.bf16.msra.mxu0 0
    %4795 = vmatprep.subr.bf16.mxu0 0
    %4796 = vmatpush2.bf16.msra.mxu0 0
    %4797 = vmatprep.subr.bf16.mxu0 0
    %4798 = vmatpush2.bf16.msra.mxu0 0
    %4799 = vmatprep.subr.bf16.mxu0 0
    %4800 = vmatpush2.bf16.msra.mxu0 0
    %4801 = vmatprep.mubr.bf16.mxu0 0
    %4802 = vmatmul.mubr.bf16.gmra.mxu0 %v4767
    %v4803 = vpop.f32.mrf.mxu0
    %v4804 = vadd.f32 0.0, %v4803
    %v4805 = vpop.f32.mrf.mxu0
    %v4806 = vpop.f32.mrf.mxu0
    %v4807 = vpop.f32.mrf.mxu0
    %4808 = vdwg.mxu0
    %v4809 = vadd.f32 %v4760, %v4804
    %s4810 = scalar_lea.vmem %s5, 7
    %v4811 = vld [vmem:[%s4810] sm:$0x1]
    %4812 = vrot.lane.b32.xlu0 %v4471, 32
    %v4813 = vpop.permute.xlu0 %4812
    %v4816 = vsel %vm3070, %v4811, 0
    %4818 = vmatprep.subr.bf16.mxu0 0
    %4819 = vmatpush1.bf16.msra.mxu0 0
    %4820 = vmatprep.subr.bf16.mxu0 0
    %4821 = vmatpush1.bf16.msra.mxu0 0
    %4822 = vmatprep.subr.bf16.mxu0 0
    %4823 = vmatpush1.bf16.msra.mxu0 0
    %4824 = vmatprep.subr.bf16.mxu0 0
    %4825 = vmatpush1.bf16.msra.mxu0 0
    %4826 = vmatprep.subr.bf16.mxu0 0
    %4827 = vmatpush1.bf16.msra.mxu0 0
    %4828 = vmatprep.subr.bf16.mxu0 0
    %4829 = vmatpush1.bf16.msra.mxu0 0
    %4830 = vmatprep.subr.bf16.mxu0 0
    %4831 = vmatpush1.bf16.msra.mxu0 0
    %4832 = vmatprep.subr.bf16.mxu0 0
    %4833 = vmatpush1.bf16.msra.mxu0 %v4813
    %4834 = vmatprep.subr.bf16.mxu0 0
    %4835 = vmatpush2.bf16.msra.mxu0 0
    %4836 = vmatprep.subr.bf16.mxu0 0
    %4837 = vmatpush2.bf16.msra.mxu0 0
    %4838 = vmatprep.subr.bf16.mxu0 0
    %4839 = vmatpush2.bf16.msra.mxu0 0
    %4840 = vmatprep.subr.bf16.mxu0 0
    %4841 = vmatpush2.bf16.msra.mxu0 0
    %4842 = vmatprep.subr.bf16.mxu0 0
    %4843 = vmatpush2.bf16.msra.mxu0 0
    %4844 = vmatprep.subr.bf16.mxu0 0
    %4845 = vmatpush2.bf16.msra.mxu0 0
    %4846 = vmatprep.subr.bf16.mxu0 0
    %4847 = vmatpush2.bf16.msra.mxu0 0
    %4848 = vmatprep.subr.bf16.mxu0 0
    %4849 = vmatpush2.bf16.msra.mxu0 0
    %4850 = vmatprep.mubr.bf16.mxu0 0
    %4851 = vmatmul.mubr.bf16.gmra.mxu0 %v4816
    %v4852 = vpop.f32.mrf.mxu0
    %v4853 = vadd.f32 0.0, %v4852
    %v4854 = vpop.f32.mrf.mxu0
    %v4855 = vpop.f32.mrf.mxu0
    %v4856 = vpop.f32.mrf.mxu0
    %4857 = vdwg.mxu0
    %v4858 = vadd.f32 %v4809, %v4853
    %s4859 = scalar_lea.vmem %s5, 8
    %v4860 = vld [vmem:[%s4859] sm:$0x1]
    %v4862 = vsel %vm3070, %v4860, 0
    %4864 = vmatprep.subr.bf16.mxu0 0
    %4865 = vmatpush1.bf16.msra.mxu0 0
    %4866 = vmatprep.subr.bf16.mxu0 0
    %4867 = vmatpush1.bf16.msra.mxu0 0
    %4868 = vmatprep.subr.bf16.mxu0 0
    %4869 = vmatpush1.bf16.msra.mxu0 0
    %4870 = vmatprep.subr.bf16.mxu0 0
    %4871 = vmatpush1.bf16.msra.mxu0 0
    %4872 = vmatprep.subr.bf16.mxu0 0
    %4873 = vmatpush1.bf16.msra.mxu0 0
    %4874 = vmatprep.subr.bf16.mxu0 0
    %4875 = vmatpush1.bf16.msra.mxu0 0
    %4876 = vmatprep.subr.bf16.mxu0 0
    %4877 = vmatpush1.bf16.msra.mxu0 0
    %4878 = vmatprep.subr.bf16.mxu0 0
    %4879 = vmatpush1.bf16.msra.mxu0 %v4472
    %4880 = vmatprep.subr.bf16.mxu0 0
    %4881 = vmatpush2.bf16.msra.mxu0 0
    %4882 = vmatprep.subr.bf16.mxu0 0
    %4883 = vmatpush2.bf16.msra.mxu0 0
    %4884 = vmatprep.subr.bf16.mxu0 0
    %4885 = vmatpush2.bf16.msra.mxu0 0
    %4886 = vmatprep.subr.bf16.mxu0 0
    %4887 = vmatpush2.bf16.msra.mxu0 0
    %4888 = vmatprep.subr.bf16.mxu0 0
    %4889 = vmatpush2.bf16.msra.mxu0 0
    %4890 = vmatprep.subr.bf16.mxu0 0
    %4891 = vmatpush2.bf16.msra.mxu0 0
    %4892 = vmatprep.subr.bf16.mxu0 0
    %4893 = vmatpush2.bf16.msra.mxu0 0
    %4894 = vmatprep.subr.bf16.mxu0 0
    %4895 = vmatpush2.bf16.msra.mxu0 0
    %4896 = vmatprep.mubr.bf16.mxu0 0
    %4897 = vmatmul.mubr.bf16.gmra.mxu0 %v4862
    %v4898 = vpop.f32.mrf.mxu0
    %v4899 = vadd.f32 0.0, %v4898
    %v4900 = vpop.f32.mrf.mxu0
    %v4901 = vpop.f32.mrf.mxu0
    %v4902 = vpop.f32.mrf.mxu0
    %4903 = vdwg.mxu0
    %v4904 = vadd.f32 %v4858, %v4899
    %s4905 = scalar_lea.vmem %s5, 9
    %v4906 = vld [vmem:[%s4905] sm:$0x1]
    %4908 = vrot.lane.b32.xlu0 %v4472, 96
    %v4909 = vpop.permute.xlu0 %4908
    %v4912 = vsel %vm3070, %v4906, 0
    %4914 = vmatprep.subr.bf16.mxu0 0
    %4915 = vmatpush1.bf16.msra.mxu0 0
    %4916 = vmatprep.subr.bf16.mxu0 0
    %4917 = vmatpush1.bf16.msra.mxu0 0
    %4918 = vmatprep.subr.bf16.mxu0 0
    %4919 = vmatpush1.bf16.msra.mxu0 0
    %4920 = vmatprep.subr.bf16.mxu0 0
    %4921 = vmatpush1.bf16.msra.mxu0 0
    %4922 = vmatprep.subr.bf16.mxu0 0
    %4923 = vmatpush1.bf16.msra.mxu0 0
    %4924 = vmatprep.subr.bf16.mxu0 0
    %4925 = vmatpush1.bf16.msra.mxu0 0
    %4926 = vmatprep.subr.bf16.mxu0 0
    %4927 = vmatpush1.bf16.msra.mxu0 0
    %4928 = vmatprep.subr.bf16.mxu0 0
    %4929 = vmatpush1.bf16.msra.mxu0 %v4909
    %4930 = vmatprep.subr.bf16.mxu0 0
    %4931 = vmatpush2.bf16.msra.mxu0 0
    %4932 = vmatprep.subr.bf16.mxu0 0
    %4933 = vmatpush2.bf16.msra.mxu0 0
    %4934 = vmatprep.subr.bf16.mxu0 0
    %4935 = vmatpush2.bf16.msra.mxu0 0
    %4936 = vmatprep.subr.bf16.mxu0 0
    %4937 = vmatpush2.bf16.msra.mxu0 0
    %4938 = vmatprep.subr.bf16.mxu0 0
    %4939 = vmatpush2.bf16.msra.mxu0 0
    %4940 = vmatprep.subr.bf16.mxu0 0
    %4941 = vmatpush2.bf16.msra.mxu0 0
    %4942 = vmatprep.subr.bf16.mxu0 0
    %4943 = vmatpush2.bf16.msra.mxu0 0
    %4944 = vmatprep.subr.bf16.mxu0 0
    %4945 = vmatpush2.bf16.msra.mxu0 0
    %4946 = vmatprep.mubr.bf16.mxu0 0
    %4947 = vmatmul.mubr.bf16.gmra.mxu0 %v4912
    %v4948 = vpop.f32.mrf.mxu0
    %v4949 = vadd.f32 0.0, %v4948
    %v4950 = vpop.f32.mrf.mxu0
    %v4951 = vpop.f32.mrf.mxu0
    %v4952 = vpop.f32.mrf.mxu0
    %4953 = vdwg.mxu0
    %v4954 = vadd.f32 %v4904, %v4949
    %s4955 = scalar_lea.vmem %s5, 10
    %v4956 = vld [vmem:[%s4955] sm:$0x1]
    %4957 = vrot.lane.b32.xlu0 %v4472, 64
    %v4958 = vpop.permute.xlu0 %4957
    %v4961 = vsel %vm3070, %v4956, 0
    %4963 = vmatprep.subr.bf16.mxu0 0
    %4964 = vmatpush1.bf16.msra.mxu0 0
    %4965 = vmatprep.subr.bf16.mxu0 0
    %4966 = vmatpush1.bf16.msra.mxu0 0
    %4967 = vmatprep.subr.bf16.mxu0 0
    %4968 = vmatpush1.bf16.msra.mxu0 0
    %4969 = vmatprep.subr.bf16.mxu0 0
    %4970 = vmatpush1.bf16.msra.mxu0 0
    %4971 = vmatprep.subr.bf16.mxu0 0
    %4972 = vmatpush1.bf16.msra.mxu0 0
    %4973 = vmatprep.subr.bf16.mxu0 0
    %4974 = vmatpush1.bf16.msra.mxu0 0
    %4975 = vmatprep.subr.bf16.mxu0 0
    %4976 = vmatpush1.bf16.msra.mxu0 0
    %4977 = vmatprep.subr.bf16.mxu0 0
    %4978 = vmatpush1.bf16.msra.mxu0 %v4958
    %4979 = vmatprep.subr.bf16.mxu0 0
    %4980 = vmatpush2.bf16.msra.mxu0 0
    %4981 = vmatprep.subr.bf16.mxu0 0
    %4982 = vmatpush2.bf16.msra.mxu0 0
    %4983 = vmatprep.subr.bf16.mxu0 0
    %4984 = vmatpush2.bf16.msra.mxu0 0
    %4985 = vmatprep.subr.bf16.mxu0 0
    %4986 = vmatpush2.bf16.msra.mxu0 0
    %4987 = vmatprep.subr.bf16.mxu0 0
    %4988 = vmatpush2.bf16.msra.mxu0 0
    %4989 = vmatprep.subr.bf16.mxu0 0
    %4990 = vmatpush2.bf16.msra.mxu0 0
    %4991 = vmatprep.subr.bf16.mxu0 0
    %4992 = vmatpush2.bf16.msra.mxu0 0
    %4993 = vmatprep.subr.bf16.mxu0 0
    %4994 = vmatpush2.bf16.msra.mxu0 0
    %4995 = vmatprep.mubr.bf16.mxu0 0
    %4996 = vmatmul.mubr.bf16.gmra.mxu0 %v4961
    %v4997 = vpop.f32.mrf.mxu0
    %v4998 = vadd.f32 0.0, %v4997
    %v4999 = vpop.f32.mrf.mxu0
    %v5000 = vpop.f32.mrf.mxu0
    %v5001 = vpop.f32.mrf.mxu0
    %5002 = vdwg.mxu0
    %v5003 = vadd.f32 %v4954, %v4998
    %s5004 = scalar_lea.vmem %s5, 11
    %v5005 = vld [vmem:[%s5004] sm:$0x1]
    %5006 = vrot.lane.b32.xlu0 %v4472, 32
    %v5007 = vpop.permute.xlu0 %5006
    %v5010 = vsel %vm3070, %v5005, 0
    %5012 = vmatprep.subr.bf16.mxu0 0
    %5013 = vmatpush1.bf16.msra.mxu0 0
    %5014 = vmatprep.subr.bf16.mxu0 0
    %5015 = vmatpush1.bf16.msra.mxu0 0
    %5016 = vmatprep.subr.bf16.mxu0 0
    %5017 = vmatpush1.bf16.msra.mxu0 0
    %5018 = vmatprep.subr.bf16.mxu0 0
    %5019 = vmatpush1.bf16.msra.mxu0 0
    %5020 = vmatprep.subr.bf16.mxu0 0
    %5021 = vmatpush1.bf16.msra.mxu0 0
    %5022 = vmatprep.subr.bf16.mxu0 0
    %5023 = vmatpush1.bf16.msra.mxu0 0
    %5024 = vmatprep.subr.bf16.mxu0 0
    %5025 = vmatpush1.bf16.msra.mxu0 0
    %5026 = vmatprep.subr.bf16.mxu0 0
    %5027 = vmatpush1.bf16.msra.mxu0 %v5007
    %5028 = vmatprep.subr.bf16.mxu0 0
    %5029 = vmatpush2.bf16.msra.mxu0 0
    %5030 = vmatprep.subr.bf16.mxu0 0
    %5031 = vmatpush2.bf16.msra.mxu0 0
    %5032 = vmatprep.subr.bf16.mxu0 0
    %5033 = vmatpush2.bf16.msra.mxu0 0
    %5034 = vmatprep.subr.bf16.mxu0 0
    %5035 = vmatpush2.bf16.msra.mxu0 0
    %5036 = vmatprep.subr.bf16.mxu0 0
    %5037 = vmatpush2.bf16.msra.mxu0 0
    %5038 = vmatprep.subr.bf16.mxu0 0
    %5039 = vmatpush2.bf16.msra.mxu0 0
    %5040 = vmatprep.subr.bf16.mxu0 0
    %5041 = vmatpush2.bf16.msra.mxu0 0
    %5042 = vmatprep.subr.bf16.mxu0 0
    %5043 = vmatpush2.bf16.msra.mxu0 0
    %5044 = vmatprep.mubr.bf16.mxu0 0
    %5045 = vmatmul.mubr.bf16.gmra.mxu0 %v5010
    %v5046 = vpop.f32.mrf.mxu0
    %v5047 = vadd.f32 0.0, %v5046
    %v5048 = vpop.f32.mrf.mxu0
    %v5049 = vpop.f32.mrf.mxu0
    %v5050 = vpop.f32.mrf.mxu0
    %5051 = vdwg.mxu0
    %v5052 = vadd.f32 %v5003, %v5047
    %s5053 = scalar_lea.vmem %s5, 12
    %v5054 = vld [vmem:[%s5053] sm:$0x1]
    %v5056 = vsel %vm3070, %v5054, 0
    %5058 = vmatprep.subr.bf16.mxu0 0
    %5059 = vmatpush1.bf16.msra.mxu0 0
    %5060 = vmatprep.subr.bf16.mxu0 0
    %5061 = vmatpush1.bf16.msra.mxu0 0
    %5062 = vmatprep.subr.bf16.mxu0 0
    %5063 = vmatpush1.bf16.msra.mxu0 0
    %5064 = vmatprep.subr.bf16.mxu0 0
    %5065 = vmatpush1.bf16.msra.mxu0 0
    %5066 = vmatprep.subr.bf16.mxu0 0
    %5067 = vmatpush1.bf16.msra.mxu0 0
    %5068 = vmatprep.subr.bf16.mxu0 0
    %5069 = vmatpush1.bf16.msra.mxu0 0
    %5070 = vmatprep.subr.bf16.mxu0 0
    %5071 = vmatpush1.bf16.msra.mxu0 0
    %5072 = vmatprep.subr.bf16.mxu0 0
    %5073 = vmatpush1.bf16.msra.mxu0 %v4473
    %5074 = vmatprep.subr.bf16.mxu0 0
    %5075 = vmatpush2.bf16.msra.mxu0 0
    %5076 = vmatprep.subr.bf16.mxu0 0
    %5077 = vmatpush2.bf16.msra.mxu0 0
    %5078 = vmatprep.subr.bf16.mxu0 0
    %5079 = vmatpush2.bf16.msra.mxu0 0
    %5080 = vmatprep.subr.bf16.mxu0 0
    %5081 = vmatpush2.bf16.msra.mxu0 0
    %5082 = vmatprep.subr.bf16.mxu0 0
    %5083 = vmatpush2.bf16.msra.mxu0 0
    %5084 = vmatprep.subr.bf16.mxu0 0
    %5085 = vmatpush2.bf16.msra.mxu0 0
    %5086 = vmatprep.subr.bf16.mxu0 0
    %5087 = vmatpush2.bf16.msra.mxu0 0
    %5088 = vmatprep.subr.bf16.mxu0 0
    %5089 = vmatpush2.bf16.msra.mxu0 0
    %5090 = vmatprep.mubr.bf16.mxu0 0
    %5091 = vmatmul.mubr.bf16.gmra.mxu0 %v5056
    %v5092 = vpop.f32.mrf.mxu0
    %v5093 = vadd.f32 0.0, %v5092
    %v5094 = vpop.f32.mrf.mxu0
    %v5095 = vpop.f32.mrf.mxu0
    %v5096 = vpop.f32.mrf.mxu0
    %5097 = vdwg.mxu0
    %v5098 = vadd.f32 %v5052, %v5093
    %s5099 = scalar_lea.vmem %s5, 13
    %v5100 = vld [vmem:[%s5099] sm:$0x1]
    %5102 = vrot.lane.b32.xlu0 %v4473, 96
    %v5103 = vpop.permute.xlu0 %5102
    %v5106 = vsel %vm3070, %v5100, 0
    %5108 = vmatprep.subr.bf16.mxu0 0
    %5109 = vmatpush1.bf16.msra.mxu0 0
    %5110 = vmatprep.subr.bf16.mxu0 0
    %5111 = vmatpush1.bf16.msra.mxu0 0
    %5112 = vmatprep.subr.bf16.mxu0 0
    %5113 = vmatpush1.bf16.msra.mxu0 0
    %5114 = vmatprep.subr.bf16.mxu0 0
    %5115 = vmatpush1.bf16.msra.mxu0 0
    %5116 = vmatprep.subr.bf16.mxu0 0
    %5117 = vmatpush1.bf16.msra.mxu0 0
    %5118 = vmatprep.subr.bf16.mxu0 0
    %5119 = vmatpush1.bf16.msra.mxu0 0
    %5120 = vmatprep.subr.bf16.mxu0 0
    %5121 = vmatpush1.bf16.msra.mxu0 0
    %5122 = vmatprep.subr.bf16.mxu0 0
    %5123 = vmatpush1.bf16.msra.mxu0 %v5103
    %5124 = vmatprep.subr.bf16.mxu0 0
    %5125 = vmatpush2.bf16.msra.mxu0 0
    %5126 = vmatprep.subr.bf16.mxu0 0
    %5127 = vmatpush2.bf16.msra.mxu0 0
    %5128 = vmatprep.subr.bf16.mxu0 0
    %5129 = vmatpush2.bf16.msra.mxu0 0
    %5130 = vmatprep.subr.bf16.mxu0 0
    %5131 = vmatpush2.bf16.msra.mxu0 0
    %5132 = vmatprep.subr.bf16.mxu0 0
    %5133 = vmatpush2.bf16.msra.mxu0 0
    %5134 = vmatprep.subr.bf16.mxu0 0
    %5135 = vmatpush2.bf16.msra.mxu0 0
    %5136 = vmatprep.subr.bf16.mxu0 0
    %5137 = vmatpush2.bf16.msra.mxu0 0
    %5138 = vmatprep.subr.bf16.mxu0 0
    %5139 = vmatpush2.bf16.msra.mxu0 0
    %5140 = vmatprep.mubr.bf16.mxu0 0
    %5141 = vmatmul.mubr.bf16.gmra.mxu0 %v5106
    %v5142 = vpop.f32.mrf.mxu0
    %v5143 = vadd.f32 0.0, %v5142
    %v5144 = vpop.f32.mrf.mxu0
    %v5145 = vpop.f32.mrf.mxu0
    %v5146 = vpop.f32.mrf.mxu0
    %5147 = vdwg.mxu0
    %v5148 = vadd.f32 %v5098, %v5143
    %s5149 = scalar_lea.vmem %s5, 14
    %v5150 = vld [vmem:[%s5149] sm:$0x1]
    %5151 = vrot.lane.b32.xlu0 %v4473, 64
    %v5152 = vpop.permute.xlu0 %5151
    %v5155 = vsel %vm3070, %v5150, 0
    %5157 = vmatprep.subr.bf16.mxu0 0
    %5158 = vmatpush1.bf16.msra.mxu0 0
    %5159 = vmatprep.subr.bf16.mxu0 0
    %5160 = vmatpush1.bf16.msra.mxu0 0
    %5161 = vmatprep.subr.bf16.mxu0 0
    %5162 = vmatpush1.bf16.msra.mxu0 0
    %5163 = vmatprep.subr.bf16.mxu0 0
    %5164 = vmatpush1.bf16.msra.mxu0 0
    %5165 = vmatprep.subr.bf16.mxu0 0
    %5166 = vmatpush1.bf16.msra.mxu0 0
    %5167 = vmatprep.subr.bf16.mxu0 0
    %5168 = vmatpush1.bf16.msra.mxu0 0
    %5169 = vmatprep.subr.bf16.mxu0 0
    %5170 = vmatpush1.bf16.msra.mxu0 0
    %5171 = vmatprep.subr.bf16.mxu0 0
    %5172 = vmatpush1.bf16.msra.mxu0 %v5152
    %5173 = vmatprep.subr.bf16.mxu0 0
    %5174 = vmatpush2.bf16.msra.mxu0 0
    %5175 = vmatprep.subr.bf16.mxu0 0
    %5176 = vmatpush2.bf16.msra.mxu0 0
    %5177 = vmatprep.subr.bf16.mxu0 0
    %5178 = vmatpush2.bf16.msra.mxu0 0
    %5179 = vmatprep.subr.bf16.mxu0 0
    %5180 = vmatpush2.bf16.msra.mxu0 0
    %5181 = vmatprep.subr.bf16.mxu0 0
    %5182 = vmatpush2.bf16.msra.mxu0 0
    %5183 = vmatprep.subr.bf16.mxu0 0
    %5184 = vmatpush2.bf16.msra.mxu0 0
    %5185 = vmatprep.subr.bf16.mxu0 0
    %5186 = vmatpush2.bf16.msra.mxu0 0
    %5187 = vmatprep.subr.bf16.mxu0 0
    %5188 = vmatpush2.bf16.msra.mxu0 0
    %5189 = vmatprep.mubr.bf16.mxu0 0
    %5190 = vmatmul.mubr.bf16.gmra.mxu0 %v5155
    %v5191 = vpop.f32.mrf.mxu0
    %v5192 = vadd.f32 0.0, %v5191
    %v5193 = vpop.f32.mrf.mxu0
    %v5194 = vpop.f32.mrf.mxu0
    %v5195 = vpop.f32.mrf.mxu0
    %5196 = vdwg.mxu0
    %v5197 = vadd.f32 %v5148, %v5192
    %s5198 = scalar_lea.vmem %s5, 15
    %v5199 = vld [vmem:[%s5198] sm:$0x1]
    %5200 = vrot.lane.b32.xlu0 %v4473, 32
    %v5201 = vpop.permute.xlu0 %5200
    %v5204 = vsel %vm3070, %v5199, 0
    %5206 = vmatprep.subr.bf16.mxu0 0
    %5207 = vmatpush1.bf16.msra.mxu0 0
    %5208 = vmatprep.subr.bf16.mxu0 0
    %5209 = vmatpush1.bf16.msra.mxu0 0
    %5210 = vmatprep.subr.bf16.mxu0 0
    %5211 = vmatpush1.bf16.msra.mxu0 0
    %5212 = vmatprep.subr.bf16.mxu0 0
    %5213 = vmatpush1.bf16.msra.mxu0 0
    %5214 = vmatprep.subr.bf16.mxu0 0
    %5215 = vmatpush1.bf16.msra.mxu0 0
    %5216 = vmatprep.subr.bf16.mxu0 0
    %5217 = vmatpush1.bf16.msra.mxu0 0
    %5218 = vmatprep.subr.bf16.mxu0 0
    %5219 = vmatpush1.bf16.msra.mxu0 0
    %5220 = vmatprep.subr.bf16.mxu0 0
    %5221 = vmatpush1.bf16.msra.mxu0 %v5201
    %5222 = vmatprep.subr.bf16.mxu0 0
    %5223 = vmatpush2.bf16.msra.mxu0 0
    %5224 = vmatprep.subr.bf16.mxu0 0
    %5225 = vmatpush2.bf16.msra.mxu0 0
    %5226 = vmatprep.subr.bf16.mxu0 0
    %5227 = vmatpush2.bf16.msra.mxu0 0
    %5228 = vmatprep.subr.bf16.mxu0 0
    %5229 = vmatpush2.bf16.msra.mxu0 0
    %5230 = vmatprep.subr.bf16.mxu0 0
    %5231 = vmatpush2.bf16.msra.mxu0 0
    %5232 = vmatprep.subr.bf16.mxu0 0
    %5233 = vmatpush2.bf16.msra.mxu0 0
    %5234 = vmatprep.subr.bf16.mxu0 0
    %5235 = vmatpush2.bf16.msra.mxu0 0
    %5236 = vmatprep.subr.bf16.mxu0 0
    %5237 = vmatpush2.bf16.msra.mxu0 0
    %5238 = vmatprep.mubr.bf16.mxu0 0
    %5239 = vmatmul.mubr.bf16.gmra.mxu0 %v5204
    %v5240 = vpop.f32.mrf.mxu0
    %v5241 = vadd.f32 0.0, %v5240
    %v5242 = vpop.f32.mrf.mxu0
    %v5243 = vpop.f32.mrf.mxu0
    %v5244 = vpop.f32.mrf.mxu0
    %5245 = vdwg.mxu0
    %v5246 = vadd.f32 %v5197, %v5241
    %v5247 = vld [vmem:[%s7] sm:$0x1]
    %v5248 = vmul.f32 %v5246, %v5247
    %v5249 = vlaneseq
    %v5250 = vand.u32 %v5249, 127
    %vm5251 = vcmask 122880
    %v5252 = vsel %vm5251, %v5248, 0.0
    %5253 = vadd.xlane.f32.xlu0 %v5252
    %v5254 = vpop.xlane.xlu0 %5253
    %v5255 = vsub.f32 0.0, %v5254
    %v5256 = vmul.f32 %v5255, 1.442695
    %v5257 = vpow.pop %v5256
    %v5258 = vadd.f32 %v5257, 1.0
    %v5259 = vrcp.pop %v5258
    %v5260 = vmax.f32 %v5259, 0.0
    %v5261 = vmin.f32 %v5260, 1.0
    %vm5262 = vcmp.eq.s32.totalorder %v5250, 0
    %v5263 = vsel %vm5262, %v5261, 0.0
    %5265 = vrot.lane.b32.xlu0 %v5248, 112
    %v5266 = vpop.permute.xlu0 %5265
    %v5268 = vsel %vm5251, %v5266, 0.0
    %5269 = vadd.xlane.f32.xlu0 %v5268
    %v5270 = vpop.xlane.xlu0 %5269
    %v5271 = vsub.f32 0.0, %v5270
    %v5272 = vmul.f32 %v5271, 1.442695
    %v5273 = vpow.pop %v5272
    %v5274 = vadd.f32 %v5273, 1.0
    %v5275 = vrcp.pop %v5274
    %v5276 = vmax.f32 %v5275, 0.0
    %v5277 = vmin.f32 %v5276, 1.0
    %vm5278 = vcmp.eq.s32.totalorder %v5250, 1
    %v5279 = vsel %vm5278, %v5277, %v5263
    %v5280 = vsel %vm4265, %v5246, 0.0
    %v5282 = vrot.slane %v5279, 7
    %vm5284 = vcmask 1040384
    %v5285 = vsel %vm5284, %v5280, %v5282
    %vm5286 = vcmask 1041408
    %v5287 = vsel %vm5286, %v5285, 0.0
    %5288 = vst [vmem:[%s8] sm:$0xff] %v5287
    // Predicated region
    $region38: #{forward.1} parent=1 // pred_check
      _
    $region39: #{forward.1} parent=1 // pred_check_branch
      %5290 = sbr.rel (0) target = $region41
    $region40: #{forward.1} parent=1 // pred_region
      _
    $region41: #{forward.1} parent=1 // pred_fallthru
      _
    // Predicated region
    $region42: #{forward.1} parent=1 // pred_check
      _
    $region43: #{forward.1} parent=1 // pred_check_branch
      %5292 = sbr.rel (0) target = $region45
    $region44: #{forward.1} parent=1 // pred_region
      _
    $region45: #{forward.1} parent=1 // pred_fallthru
      _
    %5293 = vsyncpa [#allocation3], 1

</llo_original>
